<compile_context>
chip_gen: v6e
topology: v6e:2x2x1
jax: 0.10.0
libtpu: 0.0.40
codegen_flags: <defaults>
</compile_context>

<pallas_src>
import functools

import jax
import jax.numpy as jnp
from jax.experimental import pallas as pl
from jax.experimental.pallas import tpu as pltpu

# Safe on every generation (v7x has 64 MiB VMEM/TensorCore); the kernel
# footprints below stay well under ~30 MiB.
_VMEM_LIMIT = 48 * 1024 * 1024
_DIRECT_CONV_MAX_WASTE = 3.0          # padded-voxel overcompute gate
_DIRECT_CONV_MAX_WEIGHT_BYTES = 30 * 1024 * 1024


def _round_up(x: int, m: int) -> int:
    return (x + m - 1) // m * m


def _conv_out(i, k, s, p):
    return (i + 2 * p - k) // s + 1


def _out_dims(dims, ksize, stride, padding):
    N, D, H, W = dims
    return (N,
            _conv_out(D, ksize[0], stride[0], padding[0]),
            _conv_out(H, ksize[1], stride[1], padding[1]),
            _conv_out(W, ksize[2], stride[2], padding[2]))


def _pad_waste(dims):
    _, D, H, W = dims
    return ((D + 2) * (H + 2) * (W + 2)) / float(D * H * W)


# ----------------------- matmul + BN (+res) + ReLU kernels ------------------

def _matmul_bn_single_kernel(a_ref, b_ref, scale_ref, shift_ref, *rest,
                             relu: bool, has_res: bool):
    """nk == 1 fast path: whole K in one tile, no accumulator scratch."""
    if has_res:
        res_ref, o_ref = rest
    else:
        (o_ref,) = rest
    y = jnp.dot(a_ref[...], b_ref[...], preferred_element_type=jnp.float32)
    y = y * scale_ref[...] + shift_ref[...]
    if has_res:
        y = y + res_ref[...].astype(jnp.float32)
    if relu:
        y = jnp.maximum(y, 0.0)
    o_ref[...] = y.astype(o_ref.dtype)


def _matmul_bn_kernel(a_ref, b_ref, scale_ref, shift_ref, *rest,
                      relu: bool, nk: int, has_res: bool):
    if has_res:
        res_ref, o_ref, acc_ref = rest
    else:
        o_ref, acc_ref = rest

    @pl.when(pl.program_id(2) == 0)
    def _():
        acc_ref[...] = jnp.zeros_like(acc_ref)

    acc_ref[...] += jnp.dot(a_ref[...], b_ref[...],
                            preferred_element_type=jnp.float32)

    @pl.when(pl.program_id(2) == nk - 1)
    def _():
        y = acc_ref[...] * scale_ref[...] + shift_ref[...]
        if has_res:
            y = y + res_ref[...].astype(jnp.float32)
        if relu:
            y = jnp.maximum(y, 0.0)
        o_ref[...] = y.astype(o_ref.dtype)


def _pick_tk(K):
    """Multiple of 128 in [128, 2048] minimising K padding (largest on ties)."""
    best_tk, best_pad = None, None
    for cand in range(2048, 127, -128):
        pad = (-K) % cand
        if best_pad is None or pad < best_pad:
            best_tk, best_pad = cand, pad
    return best_tk


@functools.partial(jax.jit, static_argnames=("relu",))
def matmul_bn(a, b, scale, shift, res=None, *, relu):
    """relu_opt((a @ b) * scale + shift [+ res]).  a:(M,K) b:(K,N) -> bf16 (M,N)."""
    M, K = a.shape
    _, N = b.shape

    # tm: prefer divisors of M (no pad), up to 1024 for large M.
    if M >= 1024:
        tm = None
        for cand in (1024, 512, 256):
            if M % cand == 0:
                tm = cand
                break
        if tm is None:
            tm = 1024 if M >= 4096 else 512
    elif M >= 256:
        tm = 256
    else:
        tm = _round_up(M, 8)
    Mp = _round_up(M, tm)

    if N % 256 == 0:
        Np, tn = N, 256
    elif N % 128 == 0:
        Np, tn = N, 128
    elif N < 128:
        Np, tn = N, N
    else:
        Np, tn = _round_up(N, 128), 128

    if K <= 2048:
        tk, Kp = K, K
    else:
        tk = _pick_tk(K)
        Kp = _round_up(K, tk)
    nk = Kp // tk

    a_p = a.astype(jnp.bfloat16)
    if (Mp, Kp) != (M, K):
        a_p = jnp.pad(a_p, ((0, Mp - M), (0, Kp - K)))
    b_p = b.astype(jnp.bfloat16)
    if (Kp, Np) != (K, N):
        b_p = jnp.pad(b_p, ((0, Kp - K), (0, Np - N)))
    scale_p = scale.reshape(1, N).astype(jnp.float32)
    shift_p = shift.reshape(1, N).astype(jnp.float32)
    if Np != N:
        scale_p = jnp.pad(scale_p, ((0, 0), (0, Np - N)))
        shift_p = jnp.pad(shift_p, ((0, 0), (0, Np - N)))

    has_res = res is not None
    inputs = [a_p, b_p, scale_p, shift_p]
    if has_res:
        r_p = res.astype(jnp.bfloat16)
        if (Mp, Np) != (M, N):
            r_p = jnp.pad(r_p, ((0, Mp - M), (0, Np - N)))
        inputs.append(r_p)

    if nk == 1:
        kernel = functools.partial(_matmul_bn_single_kernel,
                                   relu=relu, has_res=has_res)
        grid = (Mp // tm, Np // tn)
        in_specs = [
            pl.BlockSpec((tm, tk), lambda i, j: (i, 0)),
            pl.BlockSpec((tk, tn), lambda i, j: (0, j)),
            pl.BlockSpec((1, tn), lambda i, j: (0, j)),
            pl.BlockSpec((1, tn), lambda i, j: (0, j)),
        ]
        if has_res:
            in_specs.append(pl.BlockSpec((tm, tn), lambda i, j: (i, j)))
        out_specs = pl.BlockSpec((tm, tn), lambda i, j: (i, j))
        scratch = []
        dim_sem = ("parallel", "parallel")
    else:
        kernel = functools.partial(_matmul_bn_kernel,
                                   relu=relu, nk=nk, has_res=has_res)
        grid = (Mp // tm, Np // tn, nk)
        in_specs = [
            pl.BlockSpec((tm, tk), lambda i, j, k: (i, k)),
            pl.BlockSpec((tk, tn), lambda i, j, k: (k, j)),
            pl.BlockSpec((1, tn), lambda i, j, k: (0, j)),
            pl.BlockSpec((1, tn), lambda i, j, k: (0, j)),
        ]
        if has_res:
            in_specs.append(pl.BlockSpec((tm, tn), lambda i, j, k: (i, j)))
        out_specs = pl.BlockSpec((tm, tn), lambda i, j, k: (i, j))
        scratch = [pltpu.VMEM((tm, tn), jnp.float32)]
        dim_sem = ("parallel", "parallel", "arbitrary")

    out = pl.pallas_call(
        kernel,
        out_shape=jax.ShapeDtypeStruct((Mp, Np), jnp.bfloat16),
        grid_spec=pltpu.PrefetchScalarGridSpec(
            num_scalar_prefetch=0,
            grid=grid,
            in_specs=in_specs,
            out_specs=out_specs,
            scratch_shapes=scratch,
        ),
        compiler_params=pltpu.CompilerParams(
            dimension_semantics=dim_sem,
            vmem_limit_bytes=_VMEM_LIMIT),
    )(*inputs)
    if (Mp, Np) != (M, N):
        out = out[:M, :N]
    return out


# ------------- fused direct 3x3x3 stride-1 conv + BN + ReLU kernel ----------

def _conv3x3_kernel(a_hbm, b_ref, scale_ref, shift_ref, o_ref,
                    a_buf, sem, acc_ref, *, tm, hpwp, wp, guard, relu, ni):
    """Direct 27-tap conv on one M-tile.

    Weight slab (27, Cin, Cout) is VMEM-resident (constant BlockSpec index).
    Halo row-window of the padded activation is double-buffered across grid
    steps: window i+1 is prefetched while window i is being consumed.
    """
    i = pl.program_id(0)
    rows = tm + 2 * guard

    def start_fetch(widx, slot):
        pltpu.make_async_copy(a_hbm.at[pl.ds(widx * tm, rows)],
                              a_buf.at[slot], sem.at[slot]).start()

    @pl.when(i == 0)
    def _():
        start_fetch(0, 0)

    slot = jax.lax.rem(i, 2)
    # Wait for the window that covers this M-tile (started at step i-1, or
    # just above for i == 0).
    pltpu.make_async_copy(a_hbm.at[pl.ds(0, rows)],
                          a_buf.at[slot], sem.at[slot]).wait()

    # Prefetch the next window while the 27 tap matmuls run.
    @pl.when(i + 1 < ni)
    def _():
        start_fetch(i + 1, jax.lax.rem(i + 1, 2))

    cur = a_buf.at[slot]
    # 27 taps, unrolled; all offsets into the VMEM halo buffer are static.
    for t in range(27):
        kd, kh, kw = t // 9, (t % 9) // 3, t % 3
        off = guard + (kd - 1) * hpwp + (kh - 1) * wp + (kw - 1)
        part = jnp.dot(cur[pl.ds(off, tm), :], b_ref[t],
                       preferred_element_type=jnp.float32)
        if t == 0:
            acc_ref[...] = part          # first tap: direct assign, no zero-fill
        else:
            acc_ref[...] += part

    y = acc_ref[...] * scale_ref[...] + shift_ref[...]
    if relu:
        y = jnp.maximum(y, 0.0)
    o_ref[...] = y.astype(o_ref.dtype)


@functools.partial(jax.jit, static_argnames=("dims", "relu"))
def conv3x3s1_bn_act(x2d, w_stack, scale, shift, *, dims, relu):
    """3x3x3 stride-1 pad-1 conv + BN + optional ReLU without im2col in HBM.

    x2d: (N*D*H*W, Cin) bf16, w_stack: (27, Cin, Cout) bf16.
    The kernel computes outputs for every *padded* voxel (row-shift trick);
    the interior is extracted afterwards with one strided slice.
    """
    N, D, H, W = dims
    Cin = x2d.shape[1]
    Cout = w_stack.shape[2]
    Dp, Hp, Wp = D + 2, H + 2, W + 2
    guard = Hp * Wp + Wp + 1                      # = -min tap row offset
    M_flat = N * Dp * Hp * Wp

    if Cin <= 128:
        tm_base = 1024
    elif Cin <= 256:
        tm_base = 512
    else:
        tm_base = 256
    tm = min(tm_base, _round_up(M_flat, 8))
    Mp = _round_up(M_flat, tm)
    ni = Mp // tm

    # Padded, flattened, guarded activation in HBM (single pass).
    x5 = x2d.reshape(N, D, H, W, Cin)
    x5 = jnp.pad(x5, ((0, 0), (1, 1), (1, 1), (1, 1), (0, 0)))
    a_flat = x5.reshape(M_flat, Cin)
    a_flat = jnp.pad(a_flat, ((guard, guard + (Mp - M_flat)), (0, 0)))

    scale_p = scale.reshape(1, Cout).astype(jnp.float32)
    shift_p = shift.reshape(1, Cout).astype(jnp.float32)

    out = pl.pallas_call(
        functools.partial(_conv3x3_kernel, tm=tm, hpwp=Hp * Wp, wp=Wp,
                          guard=guard, relu=relu, ni=ni),
        out_shape=jax.ShapeDtypeStruct((Mp, Cout), jnp.bfloat16),
        grid_spec=pltpu.PrefetchScalarGridSpec(
            num_scalar_prefetch=0,
            grid=(ni,),
            in_specs=[
                pl.BlockSpec(memory_space=pl.ANY),
                pl.BlockSpec((27, Cin, Cout), lambda i: (0, 0, 0)),
                pl.BlockSpec((1, Cout), lambda i: (0, 0)),
                pl.BlockSpec((1, Cout), lambda i: (0, 0)),
            ],
            out_specs=pl.BlockSpec((tm, Cout), lambda i: (i, 0)),
            scratch_shapes=[
                pltpu.VMEM((2, tm + 2 * guard, Cin), jnp.bfloat16),
                pltpu.SemaphoreType.DMA((2,)),
                pltpu.VMEM((tm, Cout), jnp.float32),
            ],
        ),
        compiler_params=pltpu.CompilerParams(
            # Sequential grid required: manual double-buffer spans grid steps.
            dimension_semantics=("arbitrary",),
            vmem_limit_bytes=_VMEM_LIMIT),
    )(a_flat, w_stack, scale_p, shift_p)

    out5 = out[:M_flat].reshape(N, Dp, Hp, Wp, Cout)
    out5 = out5[:, 1:Dp - 1, 1:Hp - 1, 1:Wp - 1, :]
    return out5.reshape(N * D * H * W, Cout)


# ------------- generic im2col conv (stem 7^3, strided 3^3, tiny-grid 3^3) ---

@functools.partial(jax.jit,
                   static_argnames=("dims", "ksize", "stride", "padding", "relu"))
def conv_im2col_bn_act(x2d, b_mat, scale, shift, *, dims, ksize, stride,
                       padding, relu):
    # TODO(synk): im2col patches are still materialised in HBM; a streamed
    # per-tap DMA inside the matmul kernel would remove this extra HBM pass.
    N, D, H, W = dims
    Cin = x2d.shape[1]
    kD, kH, kW = ksize
    sd, sh, sw = stride
    pd, ph, pw = padding
    Do = _conv_out(D, kD, sd, pd)
    Ho = _conv_out(H, kH, sh, ph)
    Wo = _conv_out(W, kW, sw, pw)

    x5 = x2d.reshape(N, D, H, W, Cin)
    x5 = jnp.pad(x5, ((0, 0), (pd, pd), (ph, ph), (pw, pw), (0, 0)))
    patches = []
    for kd in range(kD):
        for kh in range(kH):
            for kw in range(kW):
                sl = x5[:, kd:kd + (Do - 1) * sd + 1:sd,
                        kh:kh + (Ho - 1) * sh + 1:sh,
                        kw:kw + (Wo - 1) * sw + 1:sw, :]
                patches.append(sl.reshape(N * Do * Ho * Wo, Cin))
    a = jnp.concatenate(patches, axis=1)
    return matmul_bn(a, b_mat, scale, shift, relu=relu)


@functools.partial(jax.jit, static_argnames=("dims", "s"))
def subsample_rows(x2d, *, dims, s):
    N, D, H, W = dims
    C = x2d.shape[1]
    x5 = x2d.reshape(N, D, H, W, C)[:, ::s, ::s, ::s, :]
    return x5.reshape(-1, C)


# ----------------------------- max pool (3,2,1) -----------------------------
# TODO(synk): taps are materialised as 3 strided-slice HBM arrays per axis; a
# fused halo-window kernel would cut the pool's HBM traffic further.

def _max3_kernel(a_ref, b_ref, c_ref, o_ref):
    o_ref[...] = jnp.maximum(jnp.maximum(a_ref[...], b_ref[...]), c_ref[...])


@functools.partial(jax.jit, static_argnames=("axis",))
def _pool_axis(x5, *, axis):
    """Separable 1-D max pool (k=3, s=2, p=1) along `axis` of (N,D,H,W,C)."""
    neg = float(jnp.finfo(x5.dtype).min)
    size = x5.shape[axis]
    out_size = (size - 1) // 2 + 1
    pad_cfg = [(0, 0)] * 5
    pad_cfg[axis] = (1, 1)
    xp = jnp.pad(x5, pad_cfg, constant_values=neg)

    def tap(k):
        idx = [slice(None)] * 5
        idx[axis] = slice(k, k + 2 * (out_size - 1) + 1, 2)
        return xp[tuple(idx)]

    t0, t1, t2 = tap(0), tap(1), tap(2)
    sh = t0.shape
    M = sh[0] * sh[1] * sh[2] * sh[3]
    C = sh[4]
    a, b, c = (t.reshape(M, C) for t in (t0, t1, t2))

    tr = 512 if M >= 512 else _round_up(M, 8)
    Mp = _round_up(M, tr)
    if Mp != M:
        pad = ((0, Mp - M), (0, 0))
        a, b, c = jnp.pad(a, pad), jnp.pad(b, pad), jnp.pad(c, pad)

    out = pl.pallas_call(
        _max3_kernel,
        out_shape=jax.ShapeDtypeStruct((Mp, C), x5.dtype),
        grid=(Mp // tr,),
        in_specs=[pl.BlockSpec((tr, C), lambda i: (i, 0))] * 3,
        out_specs=pl.BlockSpec((tr, C), lambda i: (i, 0)),
        compiler_params=pltpu.CompilerParams(dimension_semantics=("parallel",)),
    )(a, b, c)
    if Mp != M:
        out = out[:M]
    return out.reshape(sh)


def maxpool3d(x2d, dims):
    N, D, H, W = dims
    C = x2d.shape[1]
    x5 = x2d.reshape(N, D, H, W, C)
    x5 = _pool_axis(x5, axis=3)
    x5 = _pool_axis(x5, axis=2)
    x5 = _pool_axis(x5, axis=1)
    n, d, h, w, _ = x5.shape
    return x5.reshape(n * d * h * w, C), (n, d, h, w)


# --------------------------- global average pool ----------------------------

def _gap_kernel(x_ref, o_ref, *, ns, inv_s):
    @pl.when(pl.program_id(0) == 0)
    def _():
        o_ref[...] = jnp.zeros_like(o_ref)

    o_ref[...] += jnp.sum(x_ref[...].astype(jnp.float32), axis=1)

    @pl.when(pl.program_id(0) == ns - 1)
    def _():
        o_ref[...] = o_ref[...] * inv_s


@jax.jit
def global_avg_pool(x3):                     # (N, S, C) bf16 -> (N, C) f32
    N, S, C = x3.shape
    ts = min(512, _round_up(S, 8))
    Sp = _round_up(S, ts)
    if Sp != S:
        x3 = jnp.pad(x3, ((0, 0), (0, Sp - S), (0, 0)))
    ns = Sp // ts
    return pl.pallas_call(
        functools.partial(_gap_kernel, ns=ns, inv_s=1.0 / S),
        out_shape=jax.ShapeDtypeStruct((N, C), jnp.float32),
        grid=(ns,),
        in_specs=[pl.BlockSpec((N, ts, C), lambda i: (0, i, 0))],
        out_specs=pl.BlockSpec((N, C), lambda i: (0, 0)),
        compiler_params=pltpu.CompilerParams(dimension_semantics=("arbitrary",)),
    )(x3)


# ------------------------------ parameters ---------------------------------

class _KeyGen:
    def __init__(self, key):
        self._key = key
        self._i = 0

    def __call__(self):
        self._i += 1
        return jax.random.fold_in(self._key, self._i)


def _init_conv(kg, cout, cin, ksize):
    fan_in = cin * ksize[0] * ksize[1] * ksize[2]
    return (jax.random.normal(kg(), (cout, cin) + tuple(ksize), jnp.float32)
            / jnp.sqrt(float(fan_in)))


def _init_bn(kg, c, eps=1e-5):
    gamma = 1.0 + 0.05 * jax.random.normal(kg(), (c,), jnp.float32)
    beta = 0.05 * jax.random.normal(kg(), (c,), jnp.float32)
    running_mean = 0.05 * jax.random.normal(kg(), (c,), jnp.float32)
    running_var = jax.random.uniform(kg(), (c,), jnp.float32, 0.5, 1.5)
    scale = gamma / jnp.sqrt(running_var + eps)
    shift = beta - running_mean * scale
    return scale, shift


def build_params(key, num_classes=1, n_input_channels=1):
    """MONAI resnet101: Bottleneck, layers [3,4,23,3], inplanes [64,128,256,512]."""
    kg = _KeyGen(key)
    p = {"conv1_w": _init_conv(kg, 64, n_input_channels, (7, 7, 7)),
         "bn1": _init_bn(kg, 64)}
    expansion = 4
    cfg = [(64, 3, 1), (128, 4, 2), (256, 23, 2), (512, 3, 2)]
    in_planes = 64
    layers = []
    for planes, n_blocks, first_stride in cfg:
        blocks = []
        for bi in range(n_blocks):
            st = first_stride if bi == 0 else 1
            blk = {"stride": st,
                   "conv1_w": _init_conv(kg, planes, in_planes, (1, 1, 1)),
                   "bn1": _init_bn(kg, planes),
                   "conv2_w": _init_conv(kg, planes, planes, (3, 3, 3)),
                   "bn2": _init_bn(kg, planes),
                   "conv3_w": _init_conv(kg, planes * expansion, planes, (1, 1, 1)),
                   "bn3": _init_bn(kg, planes * expansion)}
            if st != 1 or in_planes != planes * expansion:
                blk["down_w"] = _init_conv(kg, planes * expansion, in_planes, (1, 1, 1))
                blk["down_bn"] = _init_bn(kg, planes * expansion)
            in_planes = planes * expansion
            blocks.append(blk)
        layers.append(blocks)
    p["layers"] = layers
    p["fc_w"] = (jax.random.normal(kg(), (num_classes, 512 * expansion), jnp.float32)
                 / jnp.sqrt(float(512 * expansion)))
    p["fc_b"] = 0.01 * jax.random.normal(kg(), (num_classes,), jnp.float32)
    return p


def prepare_params(p):
    """Pre-reshape conv weights to matmul layouts and cast them to bf16 once."""
    prep = {}
    w = p["conv1_w"]                                     # (64, Cin, 7,7,7)
    kvol = w.shape[2] * w.shape[3] * w.shape[4]
    prep["stem_b"] = (jnp.transpose(w, (2, 3, 4, 1, 0))
                      .reshape(kvol * w.shape[1], w.shape[0]).astype(jnp.bfloat16))
    prep["stem_bn"] = p["bn1"]
    layers = []
    for blocks in p["layers"]:
        bl = []
        for blk in blocks:
            st = blk["stride"]
            nb = {"stride": st,
                  "w1": blk["conv1_w"][:, :, 0, 0, 0].T.astype(jnp.bfloat16),
                  "bn1": blk["bn1"],
                  "bn2": blk["bn2"],
                  "w3": blk["conv3_w"][:, :, 0, 0, 0].T.astype(jnp.bfloat16),
                  "bn3": blk["bn3"]}
            w2 = jnp.transpose(blk["conv2_w"], (2, 3, 4, 1, 0))   # (3,3,3,Cin,Cout)
            cin, cout = w2.shape[3], w2.shape[4]
            if st == 1:
                nb["w2"] = w2.reshape(27, cin, cout).astype(jnp.bfloat16)
            else:
                nb["w2"] = w2.reshape(27 * cin, cout).astype(jnp.bfloat16)
            if "down_w" in blk:
                nb["wd"] = blk["down_w"][:, :, 0, 0, 0].T.astype(jnp.bfloat16)
                nb["dbn"] = blk["down_bn"]
            bl.append(nb)
        layers.append(bl)
    prep["layers"] = layers
    prep["fc_w"] = p["fc_w"]
    prep["fc_b"] = p["fc_b"]
    return prep


# ------------------------------ forward pass --------------------------------

def resnet101_forward(prep, x_ncdhw):
    # TODO(synk): BatchNorm is applied in eval mode (folded running stats);
    # PyTorch's default train-mode batch-statistics BN is not reproduced.
    N, C, D, H, W = x_ncdhw.shape
    x2d = (jnp.transpose(x_ncdhw, (0, 2, 3, 4, 1))
           .reshape(N * D * H * W, C).astype(jnp.bfloat16))
    dims = (N, D, H, W)

    # stem: conv 7x7x7 stride (1,2,2) pad 3 + BN + ReLU, then maxpool 3^3 s2 p1
    x2d = conv_im2col_bn_act(x2d, prep["stem_b"], *prep["stem_bn"],
                             dims=dims, ksize=(7, 7, 7), stride=(1, 2, 2),
                             padding=(3, 3, 3), relu=True)
    dims = _out_dims(dims, (7, 7, 7), (1, 2, 2), (3, 3, 3))
    x2d, dims = maxpool3d(x2d, dims)

    for blocks in prep["layers"]:
        for blk in blocks:
            st = blk["stride"]
            # conv1: 1x1x1 stride 1  -> plain matmul (nk==1 fast path)
            out = matmul_bn(x2d, blk["w1"], *blk["bn1"], relu=True)
            # conv2: 3x3x3
            if st == 1:
                d2 = dims
                w2 = blk["w2"]                               # (27, Cin, Cout)
                w_bytes = 2 * 27 * w2.shape[1] * w2.shape[2] * 2
                if (_pad_waste(dims) <= _DIRECT_CONV_MAX_WASTE
                        and w_bytes <= _DIRECT_CONV_MAX_WEIGHT_BYTES):
                    out = conv3x3s1_bn_act(out, w2, *blk["bn2"],
                                           dims=dims, relu=True)
                else:
                    # Overcompute of the row-shift trick too high (tiny spatial
                    # dims) -> fall back to im2col matmul.
                    w2m = w2.reshape(27 * w2.shape[1], w2.shape[2])
                    out = conv_im2col_bn_act(out, w2m, *blk["bn2"],
                                             dims=dims, ksize=(3, 3, 3),
                                             stride=(1, 1, 1), padding=(1, 1, 1),
                                             relu=True)
            else:
                d2 = _out_dims(dims, (3, 3, 3), (st, st, st), (1, 1, 1))
                out = conv_im2col_bn_act(out, blk["w2"], *blk["bn2"],
                                         dims=dims, ksize=(3, 3, 3),
                                         stride=(st, st, st), padding=(1, 1, 1),
                                         relu=True)
            # residual branch
            if "wd" in blk:
                rs = subsample_rows(x2d, dims=dims, s=st) if st != 1 else x2d
                res = matmul_bn(rs, blk["wd"], *blk["dbn"], relu=False)
            else:
                res = x2d
            # conv3: 1x1x1 + BN with fused residual add + final ReLU
            x2d = matmul_bn(out, blk["w3"], *blk["bn3"], res, relu=True)
            dims = d2

    Nn, Dd, Hh, Ww = dims
    Cc = x2d.shape[1]
    pooled = global_avg_pool(x2d.reshape(Nn, Dd * Hh * Ww, Cc))       # (N, 2048) f32
    logits = pooled @ prep["fc_w"].T.astype(jnp.float32) + prep["fc_b"]
    return logits                                                     # (N, num_classes)


if __name__ == "__main__":
    key = jax.random.PRNGKey(0)
    params = build_params(jax.random.fold_in(key, 1))
    prep = prepare_params(params)
    x = jax.random.normal(jax.random.fold_in(key, 2),
                          (1, 1, 16, 16, 16), jnp.float32)   # NCDHW like PyTorch
    logits = resnet101_forward(prep, x)
    jax.block_until_ready(logits)
    assert logits.shape == (1, 1)
    print("KERNEL_OK")
</pallas_src>

<mosaic_0001>
module attributes {stable_mosaic.version = 11 : i64} {
  func.func @_matmul_bn_single_kernel(%arg0: i32, %arg1: i32, %arg2: memref<1024x343xbf16, #tpu.memory_space<vmem>>, %arg3: memref<343x64xbf16, #tpu.memory_space<vmem>>, %arg4: memref<1x64xf32, #tpu.memory_space<vmem>>, %arg5: memref<1x64xf32, #tpu.memory_space<vmem>>, %arg6: memref<1024x64xbf16, #tpu.memory_space<vmem>>) attributes {dimension_semantics = [#tpu.dimension_semantics<parallel>, #tpu.dimension_semantics<parallel>], iteration_bounds = array<i64: 1, 1>, scalar_prefetch = 0 : i64, scratch_operands = 0 : i64, tpu.core_type = #tpu.core_type<tc>, window_params = [{transform_indices = @transform_0, window_bounds = array<i64: 1024, 343>}, {transform_indices = @transform_1, window_bounds = array<i64: 343, 64>}, {transform_indices = @transform_2, window_bounds = array<i64: 1, 64>}, {transform_indices = @transform_3, window_bounds = array<i64: 1, 64>}, {transform_indices = @transform_4, window_bounds = array<i64: 1024, 64>}]} {
    %c0 = arith.constant 0 : index
    %c0_0 = arith.constant 0 : index
    %0 = vector.load %arg2[%c0, %c0_0] : memref<1024x343xbf16, #tpu.memory_space<vmem>>, vector<1024x343xbf16>
    %c0_1 = arith.constant 0 : index
    %c0_2 = arith.constant 0 : index
    %1 = vector.load %arg3[%c0_1, %c0_2] : memref<343x64xbf16, #tpu.memory_space<vmem>>, vector<343x64xbf16>
    %cst = arith.constant dense<0.000000e+00> : vector<1024x64xf32>
    %2 = tpu.matmul %0, %1, %cst {dimension_numbers = #tpu.dot_dimension_numbers<[1], [0], [0], [1], [0, 0, 1, 1], [], []>} : vector<1024x343xbf16>, vector<343x64xbf16>, vector<1024x64xf32> -> vector<1024x64xf32>
    %c0_3 = arith.constant 0 : index
    %c0_4 = arith.constant 0 : index
    %3 = vector.load %arg4[%c0_3, %c0_4] : memref<1x64xf32, #tpu.memory_space<vmem>>, vector<1x64xf32>
    %4 = vector.broadcast %3 : vector<1x64xf32> to vector<1024x64xf32>
    %5 = arith.mulf %2, %4 : vector<1024x64xf32>
    %c0_5 = arith.constant 0 : index
    %c0_6 = arith.constant 0 : index
    %6 = vector.load %arg5[%c0_5, %c0_6] : memref<1x64xf32, #tpu.memory_space<vmem>>, vector<1x64xf32>
    %7 = vector.broadcast %6 : vector<1x64xf32> to vector<1024x64xf32>
    %8 = arith.addf %5, %7 : vector<1024x64xf32>
    %cst_7 = arith.constant 0.000000e+00 : f32
    %9 = vector.broadcast %cst_7 : f32 to vector<1024x64xf32>
    %10 = arith.maximumf %8, %9 : vector<1024x64xf32>
    %11 = arith.truncf %10 : vector<1024x64xf32> to vector<1024x64xbf16>
    %c0_8 = arith.constant 0 : index
    %c0_9 = arith.constant 0 : index
    %12 = vector.load %arg6[%c0_8, %c0_9] : memref<1024x64xbf16, #tpu.memory_space<vmem>>, vector<1024x64xbf16>
    tpu.vector_store %arg6[%c0_8, %c0_9], %11 {strides = array<i32>} : memref<1024x64xbf16, #tpu.memory_space<vmem>>, vector<1024x64xbf16>,
    return
  }
  func.func @transform_0(%arg0: i32, %arg1: i32) -> (i32, i32) {
    %c0_i32 = arith.constant 0 : i32
    %c0_i32_0 = arith.constant 0 : i32
    return %arg0, %c0_i32 : i32, i32
  }
  func.func @transform_1(%arg0: i32, %arg1: i32) -> (i32, i32) {
    %c0_i32 = arith.constant 0 : i32
    %c0_i32_0 = arith.constant 0 : i32
    return %c0_i32, %arg1 : i32, i32
  }
  func.func @transform_2(%arg0: i32, %arg1: i32) -> (i32, i32) {
    %c0_i32 = arith.constant 0 : i32
    %c0_i32_0 = arith.constant 0 : i32
    return %c0_i32, %arg1 : i32, i32
  }
  func.func @transform_3(%arg0: i32, %arg1: i32) -> (i32, i32) {
    %c0_i32 = arith.constant 0 : i32
    %c0_i32_0 = arith.constant 0 : i32
    return %c0_i32, %arg1 : i32, i32
  }
  func.func @transform_4(%arg0: i32, %arg1: i32) -> (i32, i32) {
    %c0_i32 = arith.constant 0 : i32
    return %arg0, %arg1 : i32, i32
  }
}

</mosaic_0001>

<llo_original>
// kernel: matmul_bn.1
$region0: #{matmul_bn.1}
  #allocation0 [shape = 'u32[]', space=smem, size = 0x4, offset = 0x4, fixed_abs, tag = 'smem constant byte address 0x4 - core index']
  #allocation1 [shape = 'u32[144,128]{1,0:T(1,128)}', space=vmem, size = 0x12000, scoped, tag = 'internal scratch']
  %s0 = inlined_call_operand.vmem [shape: bf16[1024,343], index: 0, kind: input, shape index: {}]
  %s1 = inlined_call_operand.vmem [shape: bf16[343,64], index: 1, kind: input, shape index: {}]
  %s2 = inlined_call_operand.vmem [shape: f32[1,64], index: 2, kind: input, shape index: {}]
  %s3 = inlined_call_operand.vmem [shape: f32[1,64], index: 3, kind: input, shape index: {}]
  %s4 = inlined_call_operand.vmem [shape: bf16[1024,64], index: 4, kind: output, shape index: {}]
  %s5 = sld [smem:[#allocation0]]
  $region26: #{matmul_bn.1} parent=0
    _
  %s7 = ssub.s32 1, %s5
  %s8 = scalar_select 0, %s7, %s5
  // Predicated region
  $region2: #{matmul_bn.1} parent=0 // pred_check
    _
  $region3: #{matmul_bn.1} parent=0 // pred_check_branch
    %10 = sbr.rel (0) target = $region5
  $region4: #{matmul_bn.1} parent=0 // pred_region
    _
  $region5: #{matmul_bn.1} parent=0 // pred_fallthru
    _
  // Predicated region
  $region6: #{matmul_bn.1} parent=0 // pred_check
    _
  $region7: #{matmul_bn.1} parent=0 // pred_check_branch
    %12 = sbr.rel (0) target = $region9
  $region8: #{matmul_bn.1} parent=0 // pred_region
    _
  $region9: #{matmul_bn.1} parent=0 // pred_fallthru
    _
  // Predicated region
  $region10: #{matmul_bn.1} parent=0 // pred_check
    _
  $region11: #{matmul_bn.1} parent=0 // pred_check_branch
    %14 = sbr.rel (0) target = $region13
  $region12: #{matmul_bn.1} parent=0 // pred_region
    _
  $region13: #{matmul_bn.1} parent=0 // pred_fallthru
    _
  // Predicated region
  $region14: #{matmul_bn.1} parent=0 // pred_check
    _
  $region15: #{matmul_bn.1} parent=0 // pred_check_branch
    %16 = sbr.rel (0) target = $region17
  $region16: #{matmul_bn.1} parent=0 // pred_region
    _
  $region17: #{matmul_bn.1} parent=0 // pred_fallthru
    _
  %v18 = vld [vmem:[%s0] sm:$0xff]
  %v19 = vld [vmem:[%s0 + $0x8] sm:$0xf]
  %v20 = vld [vmem:[%s0 + $0xc] sm:$0xff]
  %v21 = vld [vmem:[%s0 + $0x14] sm:$0xf]
  %v22 = vld [vmem:[%s0 + $0x18] sm:$0xff]
  %v23 = vld [vmem:[%s0 + $0x20] sm:$0xf]
  %v24 = vld [vmem:[%s0 + $0x24] sm:$0xff]
  %v25 = vld [vmem:[%s0 + $0x2c] sm:$0xf]
  %v26 = vld [vmem:[%s0 + $0x30] sm:$0xff]
  %v27 = vld [vmem:[%s0 + $0x38] sm:$0xf]
  %v28 = vld [vmem:[%s0 + $0x3c] sm:$0xff]
  %v29 = vld [vmem:[%s0 + $0x44] sm:$0xf]
  %v30 = vld [vmem:[%s0 + $0x48] sm:$0xff]
  %v31 = vld [vmem:[%s0 + $0x50] sm:$0xf]
  %v32 = vld [vmem:[%s0 + $0x54] sm:$0xff]
  %v33 = vld [vmem:[%s0 + $0x5c] sm:$0xf]
  %v34 = vld [vmem:[%s0 + $0x60] sm:$0xff]
  %v35 = vld [vmem:[%s0 + $0x68] sm:$0xf]
  %v36 = vld [vmem:[%s0 + $0x6c] sm:$0xff]
  %v37 = vld [vmem:[%s0 + $0x74] sm:$0xf]
  %v38 = vld [vmem:[%s0 + $0x78] sm:$0xff]
  %v39 = vld [vmem:[%s0 + $0x80] sm:$0xf]
  %v40 = vld [vmem:[%s0 + $0x84] sm:$0xff]
  %v41 = vld [vmem:[%s0 + $0x8c] sm:$0xf]
  %v42 = vld [vmem:[%s0 + $0x90] sm:$0xff]
  %v43 = vld [vmem:[%s0 + $0x98] sm:$0xf]
  %v44 = vld [vmem:[%s0 + $0x9c] sm:$0xff]
  %v45 = vld [vmem:[%s0 + $0xa4] sm:$0xf]
  %v46 = vld [vmem:[%s0 + $0xa8] sm:$0xff]
  %v47 = vld [vmem:[%s0 + $0xb0] sm:$0xf]
  %v48 = vld [vmem:[%s0 + $0xb4] sm:$0xff]
  %v49 = vld [vmem:[%s0 + $0xbc] sm:$0xf]
  %v50 = vld [vmem:[%s0 + $0xc0] sm:$0xff]
  %v51 = vld [vmem:[%s0 + $0xc8] sm:$0xf]
  %v52 = vld [vmem:[%s0 + $0xcc] sm:$0xff]
  %v53 = vld [vmem:[%s0 + $0xd4] sm:$0xf]
  %v54 = vld [vmem:[%s0 + $0xd8] sm:$0xff]
  %v55 = vld [vmem:[%s0 + $0xe0] sm:$0xf]
  %v56 = vld [vmem:[%s0 + $0xe4] sm:$0xff]
  %v57 = vld [vmem:[%s0 + $0xec] sm:$0xf]
  %v58 = vld [vmem:[%s0 + $0xf0] sm:$0xff]
  %v59 = vld [vmem:[%s0 + $0xf8] sm:$0xf]
  %v60 = vld [vmem:[%s0 + $0xfc] sm:$0xff]
  %v61 = vld [vmem:[%s0 + $0x104] sm:$0xf]
  %v62 = vld [vmem:[%s0 + $0x108] sm:$0xff]
  %v63 = vld [vmem:[%s0 + $0x110] sm:$0xf]
  %v64 = vld [vmem:[%s0 + $0x114] sm:$0xff]
  %v65 = vld [vmem:[%s0 + $0x11c] sm:$0xf]
  %v66 = vld [vmem:[%s0 + $0x120] sm:$0xff]
  %v67 = vld [vmem:[%s0 + $0x128] sm:$0xf]
  %v68 = vld [vmem:[%s0 + $0x12c] sm:$0xff]
  %v69 = vld [vmem:[%s0 + $0x134] sm:$0xf]
  %v70 = vld [vmem:[%s0 + $0x138] sm:$0xff]
  %v71 = vld [vmem:[%s0 + $0x140] sm:$0xf]
  %v72 = vld [vmem:[%s0 + $0x144] sm:$0xff]
  %v73 = vld [vmem:[%s0 + $0x14c] sm:$0xf]
  %v74 = vld [vmem:[%s0 + $0x150] sm:$0xff]
  %v75 = vld [vmem:[%s0 + $0x158] sm:$0xf]
  %v76 = vld [vmem:[%s0 + $0x15c] sm:$0xff]
  %v77 = vld [vmem:[%s0 + $0x164] sm:$0xf]
  %v78 = vld [vmem:[%s0 + $0x168] sm:$0xff]
  %v79 = vld [vmem:[%s0 + $0x170] sm:$0xf]
  %v80 = vld [vmem:[%s0 + $0x174] sm:$0xff]
  %v81 = vld [vmem:[%s0 + $0x17c] sm:$0xf]
  %v82 = vld [vmem:[%s0 + $0x180] sm:$0xff]
  %v83 = vld [vmem:[%s0 + $0x188] sm:$0xf]
  %v84 = vld [vmem:[%s0 + $0x18c] sm:$0xff]
  %v85 = vld [vmem:[%s0 + $0x194] sm:$0xf]
  %v86 = vld [vmem:[%s0 + $0x198] sm:$0xff]
  %v87 = vld [vmem:[%s0 + $0x1a0] sm:$0xf]
  %v88 = vld [vmem:[%s0 + $0x1a4] sm:$0xff]
  %v89 = vld [vmem:[%s0 + $0x1ac] sm:$0xf]
  %v90 = vld [vmem:[%s0 + $0x1b0] sm:$0xff]
  %v91 = vld [vmem:[%s0 + $0x1b8] sm:$0xf]
  %v92 = vld [vmem:[%s0 + $0x1bc] sm:$0xff]
  %v93 = vld [vmem:[%s0 + $0x1c4] sm:$0xf]
  %v94 = vld [vmem:[%s0 + $0x1c8] sm:$0xff]
  %v95 = vld [vmem:[%s0 + $0x1d0] sm:$0xf]
  %v96 = vld [vmem:[%s0 + $0x1d4] sm:$0xff]
  %v97 = vld [vmem:[%s0 + $0x1dc] sm:$0xf]
  %v98 = vld [vmem:[%s0 + $0x1e0] sm:$0xff]
  %v99 = vld [vmem:[%s0 + $0x1e8] sm:$0xf]
  %v100 = vld [vmem:[%s0 + $0x1ec] sm:$0xff]
  %v101 = vld [vmem:[%s0 + $0x1f4] sm:$0xf]
  %v102 = vld [vmem:[%s0 + $0x1f8] sm:$0xff]
  %v103 = vld [vmem:[%s0 + $0x200] sm:$0xf]
  %v104 = vld [vmem:[%s0 + $0x204] sm:$0xff]
  %v105 = vld [vmem:[%s0 + $0x20c] sm:$0xf]
  %v106 = vld [vmem:[%s0 + $0x210] sm:$0xff]
  %v107 = vld [vmem:[%s0 + $0x218] sm:$0xf]
  %v108 = vld [vmem:[%s0 + $0x21c] sm:$0xff]
  %v109 = vld [vmem:[%s0 + $0x224] sm:$0xf]
  %v110 = vld [vmem:[%s0 + $0x228] sm:$0xff]
  %v111 = vld [vmem:[%s0 + $0x230] sm:$0xf]
  %v112 = vld [vmem:[%s0 + $0x234] sm:$0xff]
  %v113 = vld [vmem:[%s0 + $0x23c] sm:$0xf]
  %v114 = vld [vmem:[%s0 + $0x240] sm:$0xff]
  %v115 = vld [vmem:[%s0 + $0x248] sm:$0xf]
  %v116 = vld [vmem:[%s0 + $0x24c] sm:$0xff]
  %v117 = vld [vmem:[%s0 + $0x254] sm:$0xf]
  %v118 = vld [vmem:[%s0 + $0x258] sm:$0xff]
  %v119 = vld [vmem:[%s0 + $0x260] sm:$0xf]
  %v120 = vld [vmem:[%s0 + $0x264] sm:$0xff]
  %v121 = vld [vmem:[%s0 + $0x26c] sm:$0xf]
  %v122 = vld [vmem:[%s0 + $0x270] sm:$0xff]
  %v123 = vld [vmem:[%s0 + $0x278] sm:$0xf]
  %v124 = vld [vmem:[%s0 + $0x27c] sm:$0xff]
  %v125 = vld [vmem:[%s0 + $0x284] sm:$0xf]
  %v126 = vld [vmem:[%s0 + $0x288] sm:$0xff]
  %v127 = vld [vmem:[%s0 + $0x290] sm:$0xf]
  %v128 = vld [vmem:[%s0 + $0x294] sm:$0xff]
  %v129 = vld [vmem:[%s0 + $0x29c] sm:$0xf]
  %v130 = vld [vmem:[%s0 + $0x2a0] sm:$0xff]
  %v131 = vld [vmem:[%s0 + $0x2a8] sm:$0xf]
  %v132 = vld [vmem:[%s0 + $0x2ac] sm:$0xff]
  %v133 = vld [vmem:[%s0 + $0x2b4] sm:$0xf]
  %v134 = vld [vmem:[%s0 + $0x2b8] sm:$0xff]
  %v135 = vld [vmem:[%s0 + $0x2c0] sm:$0xf]
  %v136 = vld [vmem:[%s0 + $0x2c4] sm:$0xff]
  %v137 = vld [vmem:[%s0 + $0x2cc] sm:$0xf]
  %v138 = vld [vmem:[%s0 + $0x2d0] sm:$0xff]
  %v139 = vld [vmem:[%s0 + $0x2d8] sm:$0xf]
  %v140 = vld [vmem:[%s0 + $0x2dc] sm:$0xff]
  %v141 = vld [vmem:[%s0 + $0x2e4] sm:$0xf]
  %v142 = vld [vmem:[%s0 + $0x2e8] sm:$0xff]
  %v143 = vld [vmem:[%s0 + $0x2f0] sm:$0xf]
  %v144 = vld [vmem:[%s0 + $0x2f4] sm:$0xff]
  %v145 = vld [vmem:[%s0 + $0x2fc] sm:$0xf]
  %v146 = vld [vmem:[%s0 + $0x300] sm:$0xff]
  %v147 = vld [vmem:[%s0 + $0x308] sm:$0xf]
  %v148 = vld [vmem:[%s0 + $0x30c] sm:$0xff]
  %v149 = vld [vmem:[%s0 + $0x314] sm:$0xf]
  %v150 = vld [vmem:[%s0 + $0x318] sm:$0xff]
  %v151 = vld [vmem:[%s0 + $0x320] sm:$0xf]
  %v152 = vld [vmem:[%s0 + $0x324] sm:$0xff]
  %v153 = vld [vmem:[%s0 + $0x32c] sm:$0xf]
  %v154 = vld [vmem:[%s0 + $0x330] sm:$0xff]
  %v155 = vld [vmem:[%s0 + $0x338] sm:$0xf]
  %v156 = vld [vmem:[%s0 + $0x33c] sm:$0xff]
  %v157 = vld [vmem:[%s0 + $0x344] sm:$0xf]
  %v158 = vld [vmem:[%s0 + $0x348] sm:$0xff]
  %v159 = vld [vmem:[%s0 + $0x350] sm:$0xf]
  %v160 = vld [vmem:[%s0 + $0x354] sm:$0xff]
  %v161 = vld [vmem:[%s0 + $0x35c] sm:$0xf]
  %v162 = vld [vmem:[%s0 + $0x360] sm:$0xff]
  %v163 = vld [vmem:[%s0 + $0x368] sm:$0xf]
  %v164 = vld [vmem:[%s0 + $0x36c] sm:$0xff]
  %v165 = vld [vmem:[%s0 + $0x374] sm:$0xf]
  %v166 = vld [vmem:[%s0 + $0x378] sm:$0xff]
  %v167 = vld [vmem:[%s0 + $0x380] sm:$0xf]
  %v168 = vld [vmem:[%s0 + $0x384] sm:$0xff]
  %v169 = vld [vmem:[%s0 + $0x38c] sm:$0xf]
  %v170 = vld [vmem:[%s0 + $0x390] sm:$0xff]
  %v171 = vld [vmem:[%s0 + $0x398] sm:$0xf]
  %v172 = vld [vmem:[%s0 + $0x39c] sm:$0xff]
  %v173 = vld [vmem:[%s0 + $0x3a4] sm:$0xf]
  %v174 = vld [vmem:[%s0 + $0x3a8] sm:$0xff]
  %v175 = vld [vmem:[%s0 + $0x3b0] sm:$0xf]
  %v176 = vld [vmem:[%s0 + $0x3b4] sm:$0xff]
  %v177 = vld [vmem:[%s0 + $0x3bc] sm:$0xf]
  %v178 = vld [vmem:[%s0 + $0x3c0] sm:$0xff]
  %v179 = vld [vmem:[%s0 + $0x3c8] sm:$0xf]
  %v180 = vld [vmem:[%s0 + $0x3cc] sm:$0xff]
  %v181 = vld [vmem:[%s0 + $0x3d4] sm:$0xf]
  %v182 = vld [vmem:[%s0 + $0x3d8] sm:$0xff]
  %v183 = vld [vmem:[%s0 + $0x3e0] sm:$0xf]
  %v184 = vld [vmem:[%s0 + $0x3e4] sm:$0xff]
  %v185 = vld [vmem:[%s0 + $0x3ec] sm:$0xf]
  %v186 = vld [vmem:[%s0 + $0x3f0] sm:$0xff]
  %v187 = vld [vmem:[%s0 + $0x3f8] sm:$0xf]
  %v188 = vld [vmem:[%s0 + $0x3fc] sm:$0xff]
  %v189 = vld [vmem:[%s0 + $0x404] sm:$0xf]
  %v190 = vld [vmem:[%s0 + $0x408] sm:$0xff]
  %v191 = vld [vmem:[%s0 + $0x410] sm:$0xf]
  %v192 = vld [vmem:[%s0 + $0x414] sm:$0xff]
  %v193 = vld [vmem:[%s0 + $0x41c] sm:$0xf]
  %v194 = vld [vmem:[%s0 + $0x420] sm:$0xff]
  %v195 = vld [vmem:[%s0 + $0x428] sm:$0xf]
  %v196 = vld [vmem:[%s0 + $0x42c] sm:$0xff]
  %v197 = vld [vmem:[%s0 + $0x434] sm:$0xf]
  %v198 = vld [vmem:[%s0 + $0x438] sm:$0xff]
  %v199 = vld [vmem:[%s0 + $0x440] sm:$0xf]
  %v200 = vld [vmem:[%s0 + $0x444] sm:$0xff]
  %v201 = vld [vmem:[%s0 + $0x44c] sm:$0xf]
  %v202 = vld [vmem:[%s0 + $0x450] sm:$0xff]
  %v203 = vld [vmem:[%s0 + $0x458] sm:$0xf]
  %v204 = vld [vmem:[%s0 + $0x45c] sm:$0xff]
  %v205 = vld [vmem:[%s0 + $0x464] sm:$0xf]
  %v206 = vld [vmem:[%s0 + $0x468] sm:$0xff]
  %v207 = vld [vmem:[%s0 + $0x470] sm:$0xf]
  %v208 = vld [vmem:[%s0 + $0x474] sm:$0xff]
  %v209 = vld [vmem:[%s0 + $0x47c] sm:$0xf]
  %v210 = vld [vmem:[%s0 + $0x480] sm:$0xff]
  %v211 = vld [vmem:[%s0 + $0x488] sm:$0xf]
  %v212 = vld [vmem:[%s0 + $0x48c] sm:$0xff]
  %v213 = vld [vmem:[%s0 + $0x494] sm:$0xf]
  %v214 = vld [vmem:[%s0 + $0x498] sm:$0xff]
  %v215 = vld [vmem:[%s0 + $0x4a0] sm:$0xf]
  %v216 = vld [vmem:[%s0 + $0x4a4] sm:$0xff]
  %v217 = vld [vmem:[%s0 + $0x4ac] sm:$0xf]
  %v218 = vld [vmem:[%s0 + $0x4b0] sm:$0xff]
  %v219 = vld [vmem:[%s0 + $0x4b8] sm:$0xf]
  %v220 = vld [vmem:[%s0 + $0x4bc] sm:$0xff]
  %v221 = vld [vmem:[%s0 + $0x4c4] sm:$0xf]
  %v222 = vld [vmem:[%s0 + $0x4c8] sm:$0xff]
  %v223 = vld [vmem:[%s0 + $0x4d0] sm:$0xf]
  %v224 = vld [vmem:[%s0 + $0x4d4] sm:$0xff]
  %v225 = vld [vmem:[%s0 + $0x4dc] sm:$0xf]
  %v226 = vld [vmem:[%s0 + $0x4e0] sm:$0xff]
  %v227 = vld [vmem:[%s0 + $0x4e8] sm:$0xf]
  %v228 = vld [vmem:[%s0 + $0x4ec] sm:$0xff]
  %v229 = vld [vmem:[%s0 + $0x4f4] sm:$0xf]
  %v230 = vld [vmem:[%s0 + $0x4f8] sm:$0xff]
  %v231 = vld [vmem:[%s0 + $0x500] sm:$0xf]
  %v232 = vld [vmem:[%s0 + $0x504] sm:$0xff]
  %v233 = vld [vmem:[%s0 + $0x50c] sm:$0xf]
  %v234 = vld [vmem:[%s0 + $0x510] sm:$0xff]
  %v235 = vld [vmem:[%s0 + $0x518] sm:$0xf]
  %v236 = vld [vmem:[%s0 + $0x51c] sm:$0xff]
  %v237 = vld [vmem:[%s0 + $0x524] sm:$0xf]
  %v238 = vld [vmem:[%s0 + $0x528] sm:$0xff]
  %v239 = vld [vmem:[%s0 + $0x530] sm:$0xf]
  %v240 = vld [vmem:[%s0 + $0x534] sm:$0xff]
  %v241 = vld [vmem:[%s0 + $0x53c] sm:$0xf]
  %v242 = vld [vmem:[%s0 + $0x540] sm:$0xff]
  %v243 = vld [vmem:[%s0 + $0x548] sm:$0xf]
  %v244 = vld [vmem:[%s0 + $0x54c] sm:$0xff]
  %v245 = vld [vmem:[%s0 + $0x554] sm:$0xf]
  %v246 = vld [vmem:[%s0 + $0x558] sm:$0xff]
  %v247 = vld [vmem:[%s0 + $0x560] sm:$0xf]
  %v248 = vld [vmem:[%s0 + $0x564] sm:$0xff]
  %v249 = vld [vmem:[%s0 + $0x56c] sm:$0xf]
  %v250 = vld [vmem:[%s0 + $0x570] sm:$0xff]
  %v251 = vld [vmem:[%s0 + $0x578] sm:$0xf]
  %v252 = vld [vmem:[%s0 + $0x57c] sm:$0xff]
  %v253 = vld [vmem:[%s0 + $0x584] sm:$0xf]
  %v254 = vld [vmem:[%s0 + $0x588] sm:$0xff]
  %v255 = vld [vmem:[%s0 + $0x590] sm:$0xf]
  %v256 = vld [vmem:[%s0 + $0x594] sm:$0xff]
  %v257 = vld [vmem:[%s0 + $0x59c] sm:$0xf]
  %v258 = vld [vmem:[%s0 + $0x5a0] sm:$0xff]
  %v259 = vld [vmem:[%s0 + $0x5a8] sm:$0xf]
  %v260 = vld [vmem:[%s0 + $0x5ac] sm:$0xff]
  %v261 = vld [vmem:[%s0 + $0x5b4] sm:$0xf]
  %v262 = vld [vmem:[%s0 + $0x5b8] sm:$0xff]
  %v263 = vld [vmem:[%s0 + $0x5c0] sm:$0xf]
  %v264 = vld [vmem:[%s0 + $0x5c4] sm:$0xff]
  %v265 = vld [vmem:[%s0 + $0x5cc] sm:$0xf]
  %v266 = vld [vmem:[%s0 + $0x5d0] sm:$0xff]
  %v267 = vld [vmem:[%s0 + $0x5d8] sm:$0xf]
  %v268 = vld [vmem:[%s0 + $0x5dc] sm:$0xff]
  %v269 = vld [vmem:[%s0 + $0x5e4] sm:$0xf]
  %v270 = vld [vmem:[%s0 + $0x5e8] sm:$0xff]
  %v271 = vld [vmem:[%s0 + $0x5f0] sm:$0xf]
  %v272 = vld [vmem:[%s0 + $0x5f4] sm:$0xff]
  %v273 = vld [vmem:[%s0 + $0x5fc] sm:$0xf]
  %v274 = vld [vmem:[%s1] sm:$0xf]
  %v275 = vld [vmem:[%s1 + $0x4] sm:$0xf]
  %v276 = vld [vmem:[%s1 + $0x8] sm:$0xf]
  %v277 = vld [vmem:[%s1 + $0xc] sm:$0xf]
  %v278 = vld [vmem:[%s1 + $0x10] sm:$0xf]
  %v279 = vld [vmem:[%s1 + $0x14] sm:$0xf]
  %v280 = vld [vmem:[%s1 + $0x18] sm:$0xf]
  %v281 = vld [vmem:[%s1 + $0x1c] sm:$0xf]
  %v282 = vld [vmem:[%s1 + $0x20] sm:$0xf]
  %v283 = vld [vmem:[%s1 + $0x24] sm:$0xf]
  %v284 = vld [vmem:[%s1 + $0x28] sm:$0xf]
  %v285 = vld [vmem:[%s1 + $0x2c] sm:$0xf]
  %v286 = vld [vmem:[%s1 + $0x30] sm:$0xf]
  %v287 = vld [vmem:[%s1 + $0x34] sm:$0xf]
  %v288 = vld [vmem:[%s1 + $0x38] sm:$0xf]
  %v289 = vld [vmem:[%s1 + $0x3c] sm:$0xf]
  %v290 = vld [vmem:[%s1 + $0x40] sm:$0xf]
  %v291 = vld [vmem:[%s1 + $0x44] sm:$0xf]
  %v292 = vld [vmem:[%s1 + $0x48] sm:$0xf]
  %v293 = vld [vmem:[%s1 + $0x4c] sm:$0xf]
  %v294 = vld [vmem:[%s1 + $0x50] sm:$0xf]
  %v295 = vld [vmem:[%s1 + $0x54] sm:$0xf]
  %v296 = vld [vmem:[%s1 + $0x58] sm:$0xf]
  %v297 = vld [vmem:[%s1 + $0x5c] sm:$0xf]
  %v298 = vld [vmem:[%s1 + $0x60] sm:$0xf]
  %v299 = vld [vmem:[%s1 + $0x64] sm:$0xf]
  %v300 = vld [vmem:[%s1 + $0x68] sm:$0xf]
  %v301 = vld [vmem:[%s1 + $0x6c] sm:$0xf]
  %v302 = vld [vmem:[%s1 + $0x70] sm:$0xf]
  %v303 = vld [vmem:[%s1 + $0x74] sm:$0xf]
  %v304 = vld [vmem:[%s1 + $0x78] sm:$0xf]
  %v305 = vld [vmem:[%s1 + $0x7c] sm:$0xf]
  %v306 = vld [vmem:[%s1 + $0x80] sm:$0xf]
  %v307 = vld [vmem:[%s1 + $0x84] sm:$0xf]
  %v308 = vld [vmem:[%s1 + $0x88] sm:$0xf]
  %v309 = vld [vmem:[%s1 + $0x8c] sm:$0xf]
  %v310 = vld [vmem:[%s1 + $0x90] sm:$0xf]
  %v311 = vld [vmem:[%s1 + $0x94] sm:$0xf]
  %v312 = vld [vmem:[%s1 + $0x98] sm:$0xf]
  %v313 = vld [vmem:[%s1 + $0x9c] sm:$0xf]
  %v314 = vld [vmem:[%s1 + $0xa0] sm:$0xf]
  %v315 = vld [vmem:[%s1 + $0xa4] sm:$0xf]
  %v316 = vld [vmem:[%s1 + $0xa8] sm:$0xf]
  %v573 = vunpack.c.l.b16 %v18
  %v574 = vunpack.c.h.b16 %v18
  %v575 = vunpack.c.l.b16 %v19
  %v576 = vunpack.c.l.b16 %v20
  %v577 = vunpack.c.h.b16 %v20
  %v578 = vunpack.c.l.b16 %v21
  %v579 = vunpack.c.l.b16 %v22
  %v580 = vunpack.c.h.b16 %v22
  %v581 = vunpack.c.l.b16 %v23
  %v582 = vunpack.c.l.b16 %v24
  %v583 = vunpack.c.h.b16 %v24
  %v584 = vunpack.c.l.b16 %v25
  %v585 = vunpack.c.l.b16 %v26
  %v586 = vunpack.c.h.b16 %v26
  %v587 = vunpack.c.l.b16 %v27
  %v588 = vunpack.c.l.b16 %v28
  %v589 = vunpack.c.h.b16 %v28
  %v590 = vunpack.c.l.b16 %v29
  %v591 = vunpack.c.l.b16 %v30
  %v592 = vunpack.c.h.b16 %v30
  %v593 = vunpack.c.l.b16 %v31
  %v594 = vunpack.c.l.b16 %v32
  %v595 = vunpack.c.h.b16 %v32
  %v596 = vunpack.c.l.b16 %v33
  %v597 = vunpack.c.l.b16 %v34
  %v598 = vunpack.c.h.b16 %v34
  %v599 = vunpack.c.l.b16 %v35
  %v600 = vunpack.c.l.b16 %v36
  %v601 = vunpack.c.h.b16 %v36
  %v602 = vunpack.c.l.b16 %v37
  %v603 = vunpack.c.l.b16 %v38
  %v604 = vunpack.c.h.b16 %v38
  %v605 = vunpack.c.l.b16 %v39
  %v606 = vunpack.c.l.b16 %v40
  %v607 = vunpack.c.h.b16 %v40
  %v608 = vunpack.c.l.b16 %v41
  %v609 = vunpack.c.l.b16 %v42
  %v610 = vunpack.c.h.b16 %v42
  %v611 = vunpack.c.l.b16 %v43
  %v612 = vunpack.c.l.b16 %v44
  %v613 = vunpack.c.h.b16 %v44
  %v614 = vunpack.c.l.b16 %v45
  %v615 = vunpack.c.l.b16 %v46
  %v616 = vunpack.c.h.b16 %v46
  %v617 = vunpack.c.l.b16 %v47
  %v618 = vunpack.c.l.b16 %v48
  %v619 = vunpack.c.h.b16 %v48
  %v620 = vunpack.c.l.b16 %v49
  %v621 = vunpack.c.l.b16 %v50
  %v622 = vunpack.c.h.b16 %v50
  %v623 = vunpack.c.l.b16 %v51
  %v624 = vunpack.c.l.b16 %v52
  %v625 = vunpack.c.h.b16 %v52
  %v626 = vunpack.c.l.b16 %v53
  %v627 = vunpack.c.l.b16 %v54
  %v628 = vunpack.c.h.b16 %v54
  %v629 = vunpack.c.l.b16 %v55
  %v630 = vunpack.c.l.b16 %v56
  %v631 = vunpack.c.h.b16 %v56
  %v632 = vunpack.c.l.b16 %v57
  %v633 = vunpack.c.l.b16 %v58
  %v634 = vunpack.c.h.b16 %v58
  %v635 = vunpack.c.l.b16 %v59
  %v636 = vunpack.c.l.b16 %v60
  %v637 = vunpack.c.h.b16 %v60
  %v638 = vunpack.c.l.b16 %v61
  %v639 = vunpack.c.l.b16 %v62
  %v640 = vunpack.c.h.b16 %v62
  %v641 = vunpack.c.l.b16 %v63
  %v642 = vunpack.c.l.b16 %v64
  %v643 = vunpack.c.h.b16 %v64
  %v644 = vunpack.c.l.b16 %v65
  %v645 = vunpack.c.l.b16 %v66
  %v646 = vunpack.c.h.b16 %v66
  %v647 = vunpack.c.l.b16 %v67
  %v648 = vunpack.c.l.b16 %v68
  %v649 = vunpack.c.h.b16 %v68
  %v650 = vunpack.c.l.b16 %v69
  %v651 = vunpack.c.l.b16 %v70
  %v652 = vunpack.c.h.b16 %v70
  %v653 = vunpack.c.l.b16 %v71
  %v654 = vunpack.c.l.b16 %v72
  %v655 = vunpack.c.h.b16 %v72
  %v656 = vunpack.c.l.b16 %v73
  %v657 = vunpack.c.l.b16 %v74
  %v658 = vunpack.c.h.b16 %v74
  %v659 = vunpack.c.l.b16 %v75
  %v660 = vunpack.c.l.b16 %v76
  %v661 = vunpack.c.h.b16 %v76
  %v662 = vunpack.c.l.b16 %v77
  %v663 = vunpack.c.l.b16 %v78
  %v664 = vunpack.c.h.b16 %v78
  %v665 = vunpack.c.l.b16 %v79
  %v666 = vunpack.c.l.b16 %v80
  %v667 = vunpack.c.h.b16 %v80
  %v668 = vunpack.c.l.b16 %v81
  %v669 = vunpack.c.l.b16 %v82
  %v670 = vunpack.c.h.b16 %v82
  %v671 = vunpack.c.l.b16 %v83
  %v672 = vunpack.c.l.b16 %v84
  %v673 = vunpack.c.h.b16 %v84
  %v674 = vunpack.c.l.b16 %v85
  %v675 = vunpack.c.l.b16 %v86
  %v676 = vunpack.c.h.b16 %v86
  %v677 = vunpack.c.l.b16 %v87
  %v678 = vunpack.c.l.b16 %v88
  %v679 = vunpack.c.h.b16 %v88
  %v680 = vunpack.c.l.b16 %v89
  %v681 = vunpack.c.l.b16 %v90
  %v682 = vunpack.c.h.b16 %v90
  %v683 = vunpack.c.l.b16 %v91
  %v684 = vunpack.c.l.b16 %v92
  %v685 = vunpack.c.h.b16 %v92
  %v686 = vunpack.c.l.b16 %v93
  %v687 = vunpack.c.l.b16 %v94
  %v688 = vunpack.c.h.b16 %v94
  %v689 = vunpack.c.l.b16 %v95
  %v690 = vunpack.c.l.b16 %v96
  %v691 = vunpack.c.h.b16 %v96
  %v692 = vunpack.c.l.b16 %v97
  %v693 = vunpack.c.l.b16 %v98
  %v694 = vunpack.c.h.b16 %v98
  %v695 = vunpack.c.l.b16 %v99
  %v696 = vunpack.c.l.b16 %v100
  %v697 = vunpack.c.h.b16 %v100
  %v698 = vunpack.c.l.b16 %v101
  %v699 = vunpack.c.l.b16 %v102
  %v700 = vunpack.c.h.b16 %v102
  %v701 = vunpack.c.l.b16 %v103
  %v702 = vunpack.c.l.b16 %v104
  %v703 = vunpack.c.h.b16 %v104
  %v704 = vunpack.c.l.b16 %v105
  %v705 = vunpack.c.l.b16 %v106
  %v706 = vunpack.c.h.b16 %v106
  %v707 = vunpack.c.l.b16 %v107
  %v708 = vunpack.c.l.b16 %v108
  %v709 = vunpack.c.h.b16 %v108
  %v710 = vunpack.c.l.b16 %v109
  %v711 = vunpack.c.l.b16 %v110
  %v712 = vunpack.c.h.b16 %v110
  %v713 = vunpack.c.l.b16 %v111
  %v714 = vunpack.c.l.b16 %v112
  %v715 = vunpack.c.h.b16 %v112
  %v716 = vunpack.c.l.b16 %v113
  %v717 = vunpack.c.l.b16 %v114
  %v718 = vunpack.c.h.b16 %v114
  %v719 = vunpack.c.l.b16 %v115
  %v720 = vunpack.c.l.b16 %v116
  %v721 = vunpack.c.h.b16 %v116
  %v722 = vunpack.c.l.b16 %v117
  %v723 = vunpack.c.l.b16 %v118
  %v724 = vunpack.c.h.b16 %v118
  %v725 = vunpack.c.l.b16 %v119
  %v726 = vunpack.c.l.b16 %v120
  %v727 = vunpack.c.h.b16 %v120
  %v728 = vunpack.c.l.b16 %v121
  %v729 = vunpack.c.l.b16 %v122
  %v730 = vunpack.c.h.b16 %v122
  %v731 = vunpack.c.l.b16 %v123
  %v732 = vunpack.c.l.b16 %v124
  %v733 = vunpack.c.h.b16 %v124
  %v734 = vunpack.c.l.b16 %v125
  %v735 = vunpack.c.l.b16 %v126
  %v736 = vunpack.c.h.b16 %v126
  %v737 = vunpack.c.l.b16 %v127
  %v738 = vunpack.c.l.b16 %v128
  %v739 = vunpack.c.h.b16 %v128
  %v740 = vunpack.c.l.b16 %v129
  %v741 = vunpack.c.l.b16 %v130
  %v742 = vunpack.c.h.b16 %v130
  %v743 = vunpack.c.l.b16 %v131
  %v744 = vunpack.c.l.b16 %v132
  %v745 = vunpack.c.h.b16 %v132
  %v746 = vunpack.c.l.b16 %v133
  %v747 = vunpack.c.l.b16 %v134
  %v748 = vunpack.c.h.b16 %v134
  %v749 = vunpack.c.l.b16 %v135
  %v750 = vunpack.c.l.b16 %v136
  %v751 = vunpack.c.h.b16 %v136
  %v752 = vunpack.c.l.b16 %v137
  %v753 = vunpack.c.l.b16 %v138
  %v754 = vunpack.c.h.b16 %v138
  %v755 = vunpack.c.l.b16 %v139
  %v756 = vunpack.c.l.b16 %v140
  %v757 = vunpack.c.h.b16 %v140
  %v758 = vunpack.c.l.b16 %v141
  %v759 = vunpack.c.l.b16 %v142
  %v760 = vunpack.c.h.b16 %v142
  %v761 = vunpack.c.l.b16 %v143
  %v762 = vunpack.c.l.b16 %v144
  %v763 = vunpack.c.h.b16 %v144
  %v764 = vunpack.c.l.b16 %v145
  %v765 = vunpack.c.l.b16 %v146
  %v766 = vunpack.c.h.b16 %v146
  %v767 = vunpack.c.l.b16 %v147
  %v768 = vunpack.c.l.b16 %v148
  %v769 = vunpack.c.h.b16 %v148
  %v770 = vunpack.c.l.b16 %v149
  %v771 = vunpack.c.l.b16 %v150
  %v772 = vunpack.c.h.b16 %v150
  %v773 = vunpack.c.l.b16 %v151
  %v774 = vunpack.c.l.b16 %v152
  %v775 = vunpack.c.h.b16 %v152
  %v776 = vunpack.c.l.b16 %v153
  %v777 = vunpack.c.l.b16 %v154
  %v778 = vunpack.c.h.b16 %v154
  %v779 = vunpack.c.l.b16 %v155
  %v780 = vunpack.c.l.b16 %v156
  %v781 = vunpack.c.h.b16 %v156
  %v782 = vunpack.c.l.b16 %v157
  %v783 = vunpack.c.l.b16 %v158
  %v784 = vunpack.c.h.b16 %v158
  %v785 = vunpack.c.l.b16 %v159
  %v786 = vunpack.c.l.b16 %v160
  %v787 = vunpack.c.h.b16 %v160
  %v788 = vunpack.c.l.b16 %v161
  %v789 = vunpack.c.l.b16 %v162
  %v790 = vunpack.c.h.b16 %v162
  %v791 = vunpack.c.l.b16 %v163
  %v792 = vunpack.c.l.b16 %v164
  %v793 = vunpack.c.h.b16 %v164
  %v794 = vunpack.c.l.b16 %v165
  %v795 = vunpack.c.l.b16 %v166
  %v796 = vunpack.c.h.b16 %v166
  %v797 = vunpack.c.l.b16 %v167
  %v798 = vunpack.c.l.b16 %v168
  %v799 = vunpack.c.h.b16 %v168
  %v800 = vunpack.c.l.b16 %v169
  %v801 = vunpack.c.l.b16 %v170
  %v802 = vunpack.c.h.b16 %v170
  %v803 = vunpack.c.l.b16 %v171
  %v804 = vunpack.c.l.b16 %v172
  %v805 = vunpack.c.h.b16 %v172
  %v806 = vunpack.c.l.b16 %v173
  %v807 = vunpack.c.l.b16 %v174
  %v808 = vunpack.c.h.b16 %v174
  %v809 = vunpack.c.l.b16 %v175
  %v810 = vunpack.c.l.b16 %v176
  %v811 = vunpack.c.h.b16 %v176
  %v812 = vunpack.c.l.b16 %v177
  %v813 = vunpack.c.l.b16 %v178
  %v814 = vunpack.c.h.b16 %v178
  %v815 = vunpack.c.l.b16 %v179
  %v816 = vunpack.c.l.b16 %v180
  %v817 = vunpack.c.h.b16 %v180
  %v818 = vunpack.c.l.b16 %v181
  %v819 = vunpack.c.l.b16 %v182
  %v820 = vunpack.c.h.b16 %v182
  %v821 = vunpack.c.l.b16 %v183
  %v822 = vunpack.c.l.b16 %v184
  %v823 = vunpack.c.h.b16 %v184
  %v824 = vunpack.c.l.b16 %v185
  %v825 = vunpack.c.l.b16 %v186
  %v826 = vunpack.c.h.b16 %v186
  %v827 = vunpack.c.l.b16 %v187
  %v828 = vunpack.c.l.b16 %v188
  %v829 = vunpack.c.h.b16 %v188
  %v830 = vunpack.c.l.b16 %v189
  %v831 = vunpack.c.l.b16 %v190
  %v832 = vunpack.c.h.b16 %v190
  %v833 = vunpack.c.l.b16 %v191
  %v834 = vunpack.c.l.b16 %v192
  %v835 = vunpack.c.h.b16 %v192
  %v836 = vunpack.c.l.b16 %v193
  %v837 = vunpack.c.l.b16 %v194
  %v838 = vunpack.c.h.b16 %v194
  %v839 = vunpack.c.l.b16 %v195
  %v840 = vunpack.c.l.b16 %v196
  %v841 = vunpack.c.h.b16 %v196
  %v842 = vunpack.c.l.b16 %v197
  %v843 = vunpack.c.l.b16 %v198
  %v844 = vunpack.c.h.b16 %v198
  %v845 = vunpack.c.l.b16 %v199
  %v846 = vunpack.c.l.b16 %v200
  %v847 = vunpack.c.h.b16 %v200
  %v848 = vunpack.c.l.b16 %v201
  %v849 = vunpack.c.l.b16 %v202
  %v850 = vunpack.c.h.b16 %v202
  %v851 = vunpack.c.l.b16 %v203
  %v852 = vunpack.c.l.b16 %v204
  %v853 = vunpack.c.h.b16 %v204
  %v854 = vunpack.c.l.b16 %v205
  %v855 = vunpack.c.l.b16 %v206
  %v856 = vunpack.c.h.b16 %v206
  %v857 = vunpack.c.l.b16 %v207
  %v858 = vunpack.c.l.b16 %v208
  %v859 = vunpack.c.h.b16 %v208
  %v860 = vunpack.c.l.b16 %v209
  %v861 = vunpack.c.l.b16 %v210
  %v862 = vunpack.c.h.b16 %v210
  %v863 = vunpack.c.l.b16 %v211
  %v864 = vunpack.c.l.b16 %v212
  %v865 = vunpack.c.h.b16 %v212
  %v866 = vunpack.c.l.b16 %v213
  %v867 = vunpack.c.l.b16 %v214
  %v868 = vunpack.c.h.b16 %v214
  %v869 = vunpack.c.l.b16 %v215
  %v870 = vunpack.c.l.b16 %v216
  %v871 = vunpack.c.h.b16 %v216
  %v872 = vunpack.c.l.b16 %v217
  %v873 = vunpack.c.l.b16 %v218
  %v874 = vunpack.c.h.b16 %v218
  %v875 = vunpack.c.l.b16 %v219
  %v876 = vunpack.c.l.b16 %v220
  %v877 = vunpack.c.h.b16 %v220
  %v878 = vunpack.c.l.b16 %v221
  %v879 = vunpack.c.l.b16 %v222
  %v880 = vunpack.c.h.b16 %v222
  %v881 = vunpack.c.l.b16 %v223
  %v882 = vunpack.c.l.b16 %v224
  %v883 = vunpack.c.h.b16 %v224
  %v884 = vunpack.c.l.b16 %v225
  %v885 = vunpack.c.l.b16 %v226
  %v886 = vunpack.c.h.b16 %v226
  %v887 = vunpack.c.l.b16 %v227
  %v888 = vunpack.c.l.b16 %v228
  %v889 = vunpack.c.h.b16 %v228
  %v890 = vunpack.c.l.b16 %v229
  %v891 = vunpack.c.l.b16 %v230
  %v892 = vunpack.c.h.b16 %v230
  %v893 = vunpack.c.l.b16 %v231
  %v894 = vunpack.c.l.b16 %v232
  %v895 = vunpack.c.h.b16 %v232
  %v896 = vunpack.c.l.b16 %v233
  %v897 = vunpack.c.l.b16 %v234
  %v898 = vunpack.c.h.b16 %v234
  %v899 = vunpack.c.l.b16 %v235
  %v900 = vunpack.c.l.b16 %v236
  %v901 = vunpack.c.h.b16 %v236
  %v902 = vunpack.c.l.b16 %v237
  %v903 = vunpack.c.l.b16 %v238
  %v904 = vunpack.c.h.b16 %v238
  %v905 = vunpack.c.l.b16 %v239
  %v906 = vunpack.c.l.b16 %v240
  %v907 = vunpack.c.h.b16 %v240
  %v908 = vunpack.c.l.b16 %v241
  %v909 = vunpack.c.l.b16 %v242
  %v910 = vunpack.c.h.b16 %v242
  %v911 = vunpack.c.l.b16 %v243
  %v912 = vunpack.c.l.b16 %v244
  %v913 = vunpack.c.h.b16 %v244
  %v914 = vunpack.c.l.b16 %v245
  %v915 = vunpack.c.l.b16 %v246
  %v916 = vunpack.c.h.b16 %v246
  %v917 = vunpack.c.l.b16 %v247
  %v918 = vunpack.c.l.b16 %v248
  %v919 = vunpack.c.h.b16 %v248
  %v920 = vunpack.c.l.b16 %v249
  %v921 = vunpack.c.l.b16 %v250
  %v922 = vunpack.c.h.b16 %v250
  %v923 = vunpack.c.l.b16 %v251
  %v924 = vunpack.c.l.b16 %v252
  %v925 = vunpack.c.h.b16 %v252
  %v926 = vunpack.c.l.b16 %v253
  %v927 = vunpack.c.l.b16 %v254
  %v928 = vunpack.c.h.b16 %v254
  %v929 = vunpack.c.l.b16 %v255
  %v930 = vunpack.c.l.b16 %v256
  %v931 = vunpack.c.h.b16 %v256
  %v932 = vunpack.c.l.b16 %v257
  %v933 = vunpack.c.l.b16 %v258
  %v934 = vunpack.c.h.b16 %v258
  %v935 = vunpack.c.l.b16 %v259
  %v936 = vunpack.c.l.b16 %v260
  %v937 = vunpack.c.h.b16 %v260
  %v938 = vunpack.c.l.b16 %v261
  %v939 = vunpack.c.l.b16 %v262
  %v940 = vunpack.c.h.b16 %v262
  %v941 = vunpack.c.l.b16 %v263
  %v942 = vunpack.c.l.b16 %v264
  %v943 = vunpack.c.h.b16 %v264
  %v944 = vunpack.c.l.b16 %v265
  %v945 = vunpack.c.l.b16 %v266
  %v946 = vunpack.c.h.b16 %v266
  %v947 = vunpack.c.l.b16 %v267
  %v948 = vunpack.c.l.b16 %v268
  %v949 = vunpack.c.h.b16 %v268
  %v950 = vunpack.c.l.b16 %v269
  %v951 = vunpack.c.l.b16 %v270
  %v952 = vunpack.c.h.b16 %v270
  %v953 = vunpack.c.l.b16 %v271
  %v954 = vunpack.c.l.b16 %v272
  %v955 = vunpack.c.h.b16 %v272
  %v956 = vunpack.c.l.b16 %v273
  %v957 = vpack.c.b16 %v576, %v573
  %v958 = vpack.c.b16 %v577, %v574
  %v959 = vpack.c.b16 %v578, %v575
  %v960 = vpack.c.b16 %v582, %v579
  %v961 = vpack.c.b16 %v583, %v580
  %v962 = vpack.c.b16 %v584, %v581
  %v963 = vpack.c.b16 %v588, %v585
  %v964 = vpack.c.b16 %v589, %v586
  %v965 = vpack.c.b16 %v590, %v587
  %v966 = vpack.c.b16 %v594, %v591
  %v967 = vpack.c.b16 %v595, %v592
  %v968 = vpack.c.b16 %v596, %v593
  %v969 = vpack.c.b16 %v600, %v597
  %v970 = vpack.c.b16 %v601, %v598
  %v971 = vpack.c.b16 %v602, %v599
  %v972 = vpack.c.b16 %v606, %v603
  %v973 = vpack.c.b16 %v607, %v604
  %v974 = vpack.c.b16 %v608, %v605
  %v975 = vpack.c.b16 %v612, %v609
  %v976 = vpack.c.b16 %v613, %v610
  %v977 = vpack.c.b16 %v614, %v611
  %v978 = vpack.c.b16 %v618, %v615
  %v979 = vpack.c.b16 %v619, %v616
  %v980 = vpack.c.b16 %v620, %v617
  %v981 = vpack.c.b16 %v624, %v621
  %v982 = vpack.c.b16 %v625, %v622
  %v983 = vpack.c.b16 %v626, %v623
  %v984 = vpack.c.b16 %v630, %v627
  %v985 = vpack.c.b16 %v631, %v628
  %v986 = vpack.c.b16 %v632, %v629
  %v987 = vpack.c.b16 %v636, %v633
  %v988 = vpack.c.b16 %v637, %v634
  %v989 = vpack.c.b16 %v638, %v635
  %v990 = vpack.c.b16 %v642, %v639
  %v991 = vpack.c.b16 %v643, %v640
  %v992 = vpack.c.b16 %v644, %v641
  %v993 = vpack.c.b16 %v648, %v645
  %v994 = vpack.c.b16 %v649, %v646
  %v995 = vpack.c.b16 %v650, %v647
  %v996 = vpack.c.b16 %v654, %v651
  %v997 = vpack.c.b16 %v655, %v652
  %v998 = vpack.c.b16 %v656, %v653
  %v999 = vpack.c.b16 %v660, %v657
  %v1000 = vpack.c.b16 %v661, %v658
  %v1001 = vpack.c.b16 %v662, %v659
  %v1002 = vpack.c.b16 %v666, %v663
  %v1003 = vpack.c.b16 %v667, %v664
  %v1004 = vpack.c.b16 %v668, %v665
  %v1005 = vpack.c.b16 %v672, %v669
  %v1006 = vpack.c.b16 %v673, %v670
  %v1007 = vpack.c.b16 %v674, %v671
  %v1008 = vpack.c.b16 %v678, %v675
  %v1009 = vpack.c.b16 %v679, %v676
  %v1010 = vpack.c.b16 %v680, %v677
  %v1011 = vpack.c.b16 %v684, %v681
  %v1012 = vpack.c.b16 %v685, %v682
  %v1013 = vpack.c.b16 %v686, %v683
  %v1014 = vpack.c.b16 %v690, %v687
  %v1015 = vpack.c.b16 %v691, %v688
  %v1016 = vpack.c.b16 %v692, %v689
  %v1017 = vpack.c.b16 %v696, %v693
  %v1018 = vpack.c.b16 %v697, %v694
  %v1019 = vpack.c.b16 %v698, %v695
  %v1020 = vpack.c.b16 %v702, %v699
  %v1021 = vpack.c.b16 %v703, %v700
  %v1022 = vpack.c.b16 %v704, %v701
  %v1023 = vpack.c.b16 %v708, %v705
  %v1024 = vpack.c.b16 %v709, %v706
  %v1025 = vpack.c.b16 %v710, %v707
  %v1026 = vpack.c.b16 %v714, %v711
  %v1027 = vpack.c.b16 %v715, %v712
  %v1028 = vpack.c.b16 %v716, %v713
  %v1029 = vpack.c.b16 %v720, %v717
  %v1030 = vpack.c.b16 %v721, %v718
  %v1031 = vpack.c.b16 %v722, %v719
  %v1032 = vpack.c.b16 %v726, %v723
  %v1033 = vpack.c.b16 %v727, %v724
  %v1034 = vpack.c.b16 %v728, %v725
  %v1035 = vpack.c.b16 %v732, %v729
  %v1036 = vpack.c.b16 %v733, %v730
  %v1037 = vpack.c.b16 %v734, %v731
  %v1038 = vpack.c.b16 %v738, %v735
  %v1039 = vpack.c.b16 %v739, %v736
  %v1040 = vpack.c.b16 %v740, %v737
  %v1041 = vpack.c.b16 %v744, %v741
  %v1042 = vpack.c.b16 %v745, %v742
  %v1043 = vpack.c.b16 %v746, %v743
  %v1044 = vpack.c.b16 %v750, %v747
  %v1045 = vpack.c.b16 %v751, %v748
  %v1046 = vpack.c.b16 %v752, %v749
  %v1047 = vpack.c.b16 %v756, %v753
  %v1048 = vpack.c.b16 %v757, %v754
  %v1049 = vpack.c.b16 %v758, %v755
  %v1050 = vpack.c.b16 %v762, %v759
  %v1051 = vpack.c.b16 %v763, %v760
  %v1052 = vpack.c.b16 %v764, %v761
  %v1053 = vpack.c.b16 %v768, %v765
  %v1054 = vpack.c.b16 %v769, %v766
  %v1055 = vpack.c.b16 %v770, %v767
  %v1056 = vpack.c.b16 %v774, %v771
  %v1057 = vpack.c.b16 %v775, %v772
  %v1058 = vpack.c.b16 %v776, %v773
  %v1059 = vpack.c.b16 %v780, %v777
  %v1060 = vpack.c.b16 %v781, %v778
  %v1061 = vpack.c.b16 %v782, %v779
  %v1062 = vpack.c.b16 %v786, %v783
  %v1063 = vpack.c.b16 %v787, %v784
  %v1064 = vpack.c.b16 %v788, %v785
  %v1065 = vpack.c.b16 %v792, %v789
  %v1066 = vpack.c.b16 %v793, %v790
  %v1067 = vpack.c.b16 %v794, %v791
  %v1068 = vpack.c.b16 %v798, %v795
  %v1069 = vpack.c.b16 %v799, %v796
  %v1070 = vpack.c.b16 %v800, %v797
  %v1071 = vpack.c.b16 %v804, %v801
  %v1072 = vpack.c.b16 %v805, %v802
  %v1073 = vpack.c.b16 %v806, %v803
  %v1074 = vpack.c.b16 %v810, %v807
  %v1075 = vpack.c.b16 %v811, %v808
  %v1076 = vpack.c.b16 %v812, %v809
  %v1077 = vpack.c.b16 %v816, %v813
  %v1078 = vpack.c.b16 %v817, %v814
  %v1079 = vpack.c.b16 %v818, %v815
  %v1080 = vpack.c.b16 %v822, %v819
  %v1081 = vpack.c.b16 %v823, %v820
  %v1082 = vpack.c.b16 %v824, %v821
  %v1083 = vpack.c.b16 %v828, %v825
  %v1084 = vpack.c.b16 %v829, %v826
  %v1085 = vpack.c.b16 %v830, %v827
  %v1086 = vpack.c.b16 %v834, %v831
  %v1087 = vpack.c.b16 %v835, %v832
  %v1088 = vpack.c.b16 %v836, %v833
  %v1089 = vpack.c.b16 %v840, %v837
  %v1090 = vpack.c.b16 %v841, %v838
  %v1091 = vpack.c.b16 %v842, %v839
  %v1092 = vpack.c.b16 %v846, %v843
  %v1093 = vpack.c.b16 %v847, %v844
  %v1094 = vpack.c.b16 %v848, %v845
  %v1095 = vpack.c.b16 %v852, %v849
  %v1096 = vpack.c.b16 %v853, %v850
  %v1097 = vpack.c.b16 %v854, %v851
  %v1098 = vpack.c.b16 %v858, %v855
  %v1099 = vpack.c.b16 %v859, %v856
  %v1100 = vpack.c.b16 %v860, %v857
  %v1101 = vpack.c.b16 %v864, %v861
  %v1102 = vpack.c.b16 %v865, %v862
  %v1103 = vpack.c.b16 %v866, %v863
  %v1104 = vpack.c.b16 %v870, %v867
  %v1105 = vpack.c.b16 %v871, %v868
  %v1106 = vpack.c.b16 %v872, %v869
  %v1107 = vpack.c.b16 %v876, %v873
  %v1108 = vpack.c.b16 %v877, %v874
  %v1109 = vpack.c.b16 %v878, %v875
  %v1110 = vpack.c.b16 %v882, %v879
  %v1111 = vpack.c.b16 %v883, %v880
  %v1112 = vpack.c.b16 %v884, %v881
  %v1113 = vpack.c.b16 %v888, %v885
  %v1114 = vpack.c.b16 %v889, %v886
  %v1115 = vpack.c.b16 %v890, %v887
  %v1116 = vpack.c.b16 %v894, %v891
  %v1117 = vpack.c.b16 %v895, %v892
  %v1118 = vpack.c.b16 %v896, %v893
  %v1119 = vpack.c.b16 %v900, %v897
  %v1120 = vpack.c.b16 %v901, %v898
  %v1121 = vpack.c.b16 %v902, %v899
  %v1122 = vpack.c.b16 %v906, %v903
  %v1123 = vpack.c.b16 %v907, %v904
  %v1124 = vpack.c.b16 %v908, %v905
  %v1125 = vpack.c.b16 %v912, %v909
  %v1126 = vpack.c.b16 %v913, %v910
  %v1127 = vpack.c.b16 %v914, %v911
  %v1128 = vpack.c.b16 %v918, %v915
  %v1129 = vpack.c.b16 %v919, %v916
  %v1130 = vpack.c.b16 %v920, %v917
  %v1131 = vpack.c.b16 %v924, %v921
  %v1132 = vpack.c.b16 %v925, %v922
  %v1133 = vpack.c.b16 %v926, %v923
  %v1134 = vpack.c.b16 %v930, %v927
  %v1135 = vpack.c.b16 %v931, %v928
  %v1136 = vpack.c.b16 %v932, %v929
  %v1137 = vpack.c.b16 %v936, %v933
  %v1138 = vpack.c.b16 %v937, %v934
  %v1139 = vpack.c.b16 %v938, %v935
  %v1140 = vpack.c.b16 %v942, %v939
  %v1141 = vpack.c.b16 %v943, %v940
  %v1142 = vpack.c.b16 %v944, %v941
  %v1143 = vpack.c.b16 %v948, %v945
  %v1144 = vpack.c.b16 %v949, %v946
  %v1145 = vpack.c.b16 %v950, %v947
  %v1146 = vpack.c.b16 %v954, %v951
  %v1147 = vpack.c.b16 %v955, %v952
  %v1148 = vpack.c.b16 %v956, %v953
  %v1320 = vunpack.c.l.b16 %v274
  %v1321 = vunpack.c.l.b16 %v275
  %v1322 = vunpack.c.l.b16 %v276
  %v1323 = vunpack.c.l.b16 %v277
  %v1324 = vunpack.c.l.b16 %v278
  %v1325 = vunpack.c.l.b16 %v279
  %v1326 = vunpack.c.l.b16 %v280
  %v1327 = vunpack.c.l.b16 %v281
  %v1328 = vunpack.c.l.b16 %v282
  %v1329 = vunpack.c.l.b16 %v283
  %v1330 = vunpack.c.l.b16 %v284
  %v1331 = vunpack.c.l.b16 %v285
  %v1332 = vunpack.c.l.b16 %v286
  %v1333 = vunpack.c.l.b16 %v287
  %v1334 = vunpack.c.l.b16 %v288
  %v1335 = vunpack.c.l.b16 %v289
  %v1336 = vunpack.c.l.b16 %v290
  %v1337 = vunpack.c.l.b16 %v291
  %v1338 = vunpack.c.l.b16 %v292
  %v1339 = vunpack.c.l.b16 %v293
  %v1340 = vunpack.c.l.b16 %v294
  %v1341 = vunpack.c.l.b16 %v295
  %v1342 = vunpack.c.l.b16 %v296
  %v1343 = vunpack.c.l.b16 %v297
  %v1344 = vunpack.c.l.b16 %v298
  %v1345 = vunpack.c.l.b16 %v299
  %v1346 = vunpack.c.l.b16 %v300
  %v1347 = vunpack.c.l.b16 %v301
  %v1348 = vunpack.c.l.b16 %v302
  %v1349 = vunpack.c.l.b16 %v303
  %v1350 = vunpack.c.l.b16 %v304
  %v1351 = vunpack.c.l.b16 %v305
  %v1352 = vunpack.c.l.b16 %v306
  %v1353 = vunpack.c.l.b16 %v307
  %v1354 = vunpack.c.l.b16 %v308
  %v1355 = vunpack.c.l.b16 %v309
  %v1356 = vunpack.c.l.b16 %v310
  %v1357 = vunpack.c.l.b16 %v311
  %v1358 = vunpack.c.l.b16 %v312
  %v1359 = vunpack.c.l.b16 %v313
  %v1360 = vunpack.c.l.b16 %v314
  %v1361 = vunpack.c.l.b16 %v315
  %v1362 = vunpack.c.l.b16 %v316
  %v1363 = vpack.c.b16 %v1321, %v1320
  %v1364 = vpack.c.b16 %v1323, %v1322
  %v1365 = vpack.c.b16 %v1325, %v1324
  %v1366 = vpack.c.b16 %v1327, %v1326
  %v1367 = vpack.c.b16 %v1329, %v1328
  %v1368 = vpack.c.b16 %v1331, %v1330
  %v1369 = vpack.c.b16 %v1333, %v1332
  %v1370 = vpack.c.b16 %v1335, %v1334
  %v1371 = vpack.c.b16 %v1337, %v1336
  %v1372 = vpack.c.b16 %v1339, %v1338
  %v1373 = vpack.c.b16 %v1341, %v1340
  %v1374 = vpack.c.b16 %v1343, %v1342
  %v1375 = vpack.c.b16 %v1345, %v1344
  %v1376 = vpack.c.b16 %v1347, %v1346
  %v1377 = vpack.c.b16 %v1349, %v1348
  %v1378 = vpack.c.b16 %v1351, %v1350
  %v1379 = vpack.c.b16 %v1353, %v1352
  %v1380 = vpack.c.b16 %v1355, %v1354
  %v1381 = vpack.c.b16 %v1357, %v1356
  %v1382 = vpack.c.b16 %v1359, %v1358
  %v1383 = vpack.c.b16 %v1361, %v1360
  %v1384 = vpack.c.b16 %v1362, %v1362
  %vm1406 = vcmask 711680
  %v1408 = vsel %vm1406, %v959, 0
  %v1411 = vsel %vm1406, %v962, 0
  %v1414 = vsel %vm1406, %v965, 0
  %v1417 = vsel %vm1406, %v968, 0
  %v1420 = vsel %vm1406, %v971, 0
  %v1423 = vsel %vm1406, %v974, 0
  %v1426 = vsel %vm1406, %v977, 0
  %v1429 = vsel %vm1406, %v980, 0
  %v1432 = vsel %vm1406, %v983, 0
  %v1435 = vsel %vm1406, %v986, 0
  %v1438 = vsel %vm1406, %v989, 0
  %v1441 = vsel %vm1406, %v992, 0
  %v1444 = vsel %vm1406, %v995, 0
  %v1447 = vsel %vm1406, %v998, 0
  %v1450 = vsel %vm1406, %v1001, 0
  %v1453 = vsel %vm1406, %v1004, 0
  %v1456 = vsel %vm1406, %v1007, 0
  %v1459 = vsel %vm1406, %v1010, 0
  %v1462 = vsel %vm1406, %v1013, 0
  %v1465 = vsel %vm1406, %v1016, 0
  %v1468 = vsel %vm1406, %v1019, 0
  %v1471 = vsel %vm1406, %v1022, 0
  %v1474 = vsel %vm1406, %v1025, 0
  %v1477 = vsel %vm1406, %v1028, 0
  %v1480 = vsel %vm1406, %v1031, 0
  %v1483 = vsel %vm1406, %v1034, 0
  %v1486 = vsel %vm1406, %v1037, 0
  %v1489 = vsel %vm1406, %v1040, 0
  %v1492 = vsel %vm1406, %v1043, 0
  %v1495 = vsel %vm1406, %v1046, 0
  %v1498 = vsel %vm1406, %v1049, 0
  %v1501 = vsel %vm1406, %v1052, 0
  %v1504 = vsel %vm1406, %v1055, 0
  %v1507 = vsel %vm1406, %v1058, 0
  %v1510 = vsel %vm1406, %v1061, 0
  %v1513 = vsel %vm1406, %v1064, 0
  %v1516 = vsel %vm1406, %v1067, 0
  %v1519 = vsel %vm1406, %v1070, 0
  %v1522 = vsel %vm1406, %v1073, 0
  %v1525 = vsel %vm1406, %v1076, 0
  %v1528 = vsel %vm1406, %v1079, 0
  %v1531 = vsel %vm1406, %v1082, 0
  %v1534 = vsel %vm1406, %v1085, 0
  %v1537 = vsel %vm1406, %v1088, 0
  %v1540 = vsel %vm1406, %v1091, 0
  %v1543 = vsel %vm1406, %v1094, 0
  %v1546 = vsel %vm1406, %v1097, 0
  %v1549 = vsel %vm1406, %v1100, 0
  %v1552 = vsel %vm1406, %v1103, 0
  %v1555 = vsel %vm1406, %v1106, 0
  %v1558 = vsel %vm1406, %v1109, 0
  %v1561 = vsel %vm1406, %v1112, 0
  %v1564 = vsel %vm1406, %v1115, 0
  %v1567 = vsel %vm1406, %v1118, 0
  %v1570 = vsel %vm1406, %v1121, 0
  %v1573 = vsel %vm1406, %v1124, 0
  %v1576 = vsel %vm1406, %v1127, 0
  %v1579 = vsel %vm1406, %v1130, 0
  %v1582 = vsel %vm1406, %v1133, 0
  %v1585 = vsel %vm1406, %v1136, 0
  %v1588 = vsel %vm1406, %v1139, 0
  %v1591 = vsel %vm1406, %v1142, 0
  %v1594 = vsel %vm1406, %v1145, 0
  %v1597 = vsel %vm1406, %v1148, 0
  %vm1599 = vcmask 1042432
  %vm1600 = vcmask 1043456
  %v1601 = vsel %vm1599, 4294967295, 65535
  %v1602 = vsel %vm1600, %v1601, 0
  %v1604 = vand.u32 %v1384, %v1602
  %1606 = vmatprep.subr.bf16.mxu0 0
  %1607 = vmatpush1.bf16.msra.mxu0 %v1370
  %1608 = vmatprep.subr.bf16.mxu0 0
  %1609 = vmatpush1.bf16.msra.mxu0 %v1369
  %1610 = vmatprep.subr.bf16.mxu0 0
  %1611 = vmatpush1.bf16.msra.mxu0 %v1368
  %1612 = vmatprep.subr.bf16.mxu0 0
  %1613 = vmatpush1.bf16.msra.mxu0 %v1367
  %1614 = vmatprep.subr.bf16.mxu0 0
  %1615 = vmatpush1.bf16.msra.mxu0 %v1366
  %1616 = vmatprep.subr.bf16.mxu0 0
  %1617 = vmatpush1.bf16.msra.mxu0 %v1365
  %1618 = vmatprep.subr.bf16.mxu0 0
  %1619 = vmatpush1.bf16.msra.mxu0 %v1364
  %1620 = vmatprep.subr.bf16.mxu0 0
  %1621 = vmatpush1.bf16.msra.mxu0 %v1363
  %1622 = vmatprep.subr.bf16.mxu0 0
  %1623 = vmatpush2.bf16.msra.mxu0 %v1378
  %1624 = vmatprep.subr.bf16.mxu0 0
  %1625 = vmatpush2.bf16.msra.mxu0 %v1377
  %1626 = vmatprep.subr.bf16.mxu0 0
  %1627 = vmatpush2.bf16.msra.mxu0 %v1376
  %1628 = vmatprep.subr.bf16.mxu0 0
  %1629 = vmatpush2.bf16.msra.mxu0 %v1375
  %1630 = vmatprep.subr.bf16.mxu0 0
  %1631 = vmatpush2.bf16.msra.mxu0 %v1374
  %1632 = vmatprep.subr.bf16.mxu0 0
  %1633 = vmatpush2.bf16.msra.mxu0 %v1373
  %1634 = vmatprep.subr.bf16.mxu0 0
  %1635 = vmatpush2.bf16.msra.mxu0 %v1372
  %1636 = vmatprep.subr.bf16.mxu0 0
  %1637 = vmatpush2.bf16.msra.mxu0 %v1371
  %1638 = vmatprep.mubr.bf16.mxu0 %v958
  %1639 = vmatmul.mubr.bf16.gmra.mxu0 %v957
  %v1640 = vpop.f32.mrf.mxu0
  %v1641 = vadd.f32 0.0, %v1640
  %v1642 = vpop.f32.mrf.mxu0
  %v1643 = vpop.f32.mrf.mxu0
  %v1644 = vadd.f32 0.0, %v1643
  %v1645 = vpop.f32.mrf.mxu0
  %1646 = vmatprep.mubr.bf16.mxu0 %v961
  %1647 = vmatmul.mubr.bf16.gmra.mxu0 %v960
  %v1648 = vpop.f32.mrf.mxu0
  %v1649 = vadd.f32 0.0, %v1648
  %v1650 = vpop.f32.mrf.mxu0
  %v1651 = vpop.f32.mrf.mxu0
  %v1652 = vadd.f32 0.0, %v1651
  %v1653 = vpop.f32.mrf.mxu0
  %1654 = vmatprep.mubr.bf16.mxu0 %v964
  %1655 = vmatmul.mubr.bf16.gmra.mxu0 %v963
  %v1656 = vpop.f32.mrf.mxu0
  %v1657 = vadd.f32 0.0, %v1656
  %v1658 = vpop.f32.mrf.mxu0
  %v1659 = vpop.f32.mrf.mxu0
  %v1660 = vadd.f32 0.0, %v1659
  %v1661 = vpop.f32.mrf.mxu0
  %1662 = vmatprep.mubr.bf16.mxu0 %v967
  %1663 = vmatmul.mubr.bf16.gmra.mxu0 %v966
  %v1664 = vpop.f32.mrf.mxu0
  %v1665 = vadd.f32 0.0, %v1664
  %v1666 = vpop.f32.mrf.mxu0
  %v1667 = vpop.f32.mrf.mxu0
  %v1668 = vadd.f32 0.0, %v1667
  %v1669 = vpop.f32.mrf.mxu0
  %1670 = vmatprep.mubr.bf16.mxu0 %v970
  %1671 = vmatmul.mubr.bf16.gmra.mxu0 %v969
  %v1672 = vpop.f32.mrf.mxu0
  %v1673 = vadd.f32 0.0, %v1672
  %v1674 = vpop.f32.mrf.mxu0
  %v1675 = vpop.f32.mrf.mxu0
  %v1676 = vadd.f32 0.0, %v1675
  %v1677 = vpop.f32.mrf.mxu0
  %1678 = vmatprep.mubr.bf16.mxu0 %v973
  %1679 = vmatmul.mubr.bf16.gmra.mxu0 %v972
  %v1680 = vpop.f32.mrf.mxu0
  %v1681 = vadd.f32 0.0, %v1680
  %v1682 = vpop.f32.mrf.mxu0
  %v1683 = vpop.f32.mrf.mxu0
  %v1684 = vadd.f32 0.0, %v1683
  %v1685 = vpop.f32.mrf.mxu0
  %1686 = vmatprep.mubr.bf16.mxu0 %v976
  %1687 = vmatmul.mubr.bf16.gmra.mxu0 %v975
  %v1688 = vpop.f32.mrf.mxu0
  %v1689 = vadd.f32 0.0, %v1688
  %v1690 = vpop.f32.mrf.mxu0
  %v1691 = vpop.f32.mrf.mxu0
  %v1692 = vadd.f32 0.0, %v1691
  %v1693 = vpop.f32.mrf.mxu0
  %1694 = vmatprep.mubr.bf16.mxu0 %v979
  %1695 = vmatmul.mubr.bf16.gmra.mxu0 %v978
  %v1696 = vpop.f32.mrf.mxu0
  %v1697 = vadd.f32 0.0, %v1696
  %v1698 = vpop.f32.mrf.mxu0
  %v1699 = vpop.f32.mrf.mxu0
  %v1700 = vadd.f32 0.0, %v1699
  %v1701 = vpop.f32.mrf.mxu0
  %1702 = vmatprep.mubr.bf16.mxu0 %v982
  %1703 = vmatmul.mubr.bf16.gmra.mxu0 %v981
  %v1704 = vpop.f32.mrf.mxu0
  %v1705 = vadd.f32 0.0, %v1704
  %v1706 = vpop.f32.mrf.mxu0
  %v1707 = vpop.f32.mrf.mxu0
  %v1708 = vadd.f32 0.0, %v1707
  %v1709 = vpop.f32.mrf.mxu0
  %1710 = vmatprep.mubr.bf16.mxu0 %v985
  %1711 = vmatmul.mubr.bf16.gmra.mxu0 %v984
  %v1712 = vpop.f32.mrf.mxu0
  %v1713 = vadd.f32 0.0, %v1712
  %v1714 = vpop.f32.mrf.mxu0
  %v1715 = vpop.f32.mrf.mxu0
  %v1716 = vadd.f32 0.0, %v1715
  %v1717 = vpop.f32.mrf.mxu0
  %1718 = vmatprep.mubr.bf16.mxu0 %v988
  %1719 = vmatmul.mubr.bf16.gmra.mxu0 %v987
  %v1720 = vpop.f32.mrf.mxu0
  %v1721 = vadd.f32 0.0, %v1720
  %v1722 = vpop.f32.mrf.mxu0
  %v1723 = vpop.f32.mrf.mxu0
  %v1724 = vadd.f32 0.0, %v1723
  %v1725 = vpop.f32.mrf.mxu0
  %1726 = vmatprep.mubr.bf16.mxu0 %v991
  %1727 = vmatmul.mubr.bf16.gmra.mxu0 %v990
  %v1728 = vpop.f32.mrf.mxu0
  %v1729 = vadd.f32 0.0, %v1728
  %v1730 = vpop.f32.mrf.mxu0
  %v1731 = vpop.f32.mrf.mxu0
  %v1732 = vadd.f32 0.0, %v1731
  %v1733 = vpop.f32.mrf.mxu0
  %1734 = vmatprep.mubr.bf16.mxu0 %v994
  %1735 = vmatmul.mubr.bf16.gmra.mxu0 %v993
  %v1736 = vpop.f32.mrf.mxu0
  %v1737 = vadd.f32 0.0, %v1736
  %v1738 = vpop.f32.mrf.mxu0
  %v1739 = vpop.f32.mrf.mxu0
  %v1740 = vadd.f32 0.0, %v1739
  %v1741 = vpop.f32.mrf.mxu0
  %1742 = vmatprep.mubr.bf16.mxu0 %v997
  %1743 = vmatmul.mubr.bf16.gmra.mxu0 %v996
  %v1744 = vpop.f32.mrf.mxu0
  %v1745 = vadd.f32 0.0, %v1744
  %v1746 = vpop.f32.mrf.mxu0
  %v1747 = vpop.f32.mrf.mxu0
  %v1748 = vadd.f32 0.0, %v1747
  %v1749 = vpop.f32.mrf.mxu0
  %1750 = vmatprep.mubr.bf16.mxu0 %v1000
  %1751 = vmatmul.mubr.bf16.gmra.mxu0 %v999
  %v1752 = vpop.f32.mrf.mxu0
  %v1753 = vadd.f32 0.0, %v1752
  %v1754 = vpop.f32.mrf.mxu0
  %v1755 = vpop.f32.mrf.mxu0
  %v1756 = vadd.f32 0.0, %v1755
  %v1757 = vpop.f32.mrf.mxu0
  %1758 = vmatprep.mubr.bf16.mxu0 %v1003
  %1759 = vmatmul.mubr.bf16.gmra.mxu0 %v1002
  %v1760 = vpop.f32.mrf.mxu0
  %v1761 = vadd.f32 0.0, %v1760
  %v1762 = vpop.f32.mrf.mxu0
  %v1763 = vpop.f32.mrf.mxu0
  %v1764 = vadd.f32 0.0, %v1763
  %v1765 = vpop.f32.mrf.mxu0
  %1766 = vmatprep.mubr.bf16.mxu0 %v1006
  %1767 = vmatmul.mubr.bf16.gmra.mxu0 %v1005
  %v1768 = vpop.f32.mrf.mxu0
  %v1769 = vadd.f32 0.0, %v1768
  %v1770 = vpop.f32.mrf.mxu0
  %v1771 = vpop.f32.mrf.mxu0
  %v1772 = vadd.f32 0.0, %v1771
  %v1773 = vpop.f32.mrf.mxu0
  %1774 = vmatprep.mubr.bf16.mxu0 %v1009
  %1775 = vmatmul.mubr.bf16.gmra.mxu0 %v1008
  %v1776 = vpop.f32.mrf.mxu0
  %v1777 = vadd.f32 0.0, %v1776
  %v1778 = vpop.f32.mrf.mxu0
  %v1779 = vpop.f32.mrf.mxu0
  %v1780 = vadd.f32 0.0, %v1779
  %v1781 = vpop.f32.mrf.mxu0
  %1782 = vmatprep.mubr.bf16.mxu0 %v1012
  %1783 = vmatmul.mubr.bf16.gmra.mxu0 %v1011
  %v1784 = vpop.f32.mrf.mxu0
  %v1785 = vadd.f32 0.0, %v1784
  %v1786 = vpop.f32.mrf.mxu0
  %v1787 = vpop.f32.mrf.mxu0
  %v1788 = vadd.f32 0.0, %v1787
  %v1789 = vpop.f32.mrf.mxu0
  %1790 = vmatprep.mubr.bf16.mxu0 %v1015
  %1791 = vmatmul.mubr.bf16.gmra.mxu0 %v1014
  %v1792 = vpop.f32.mrf.mxu0
  %v1793 = vadd.f32 0.0, %v1792
  %v1794 = vpop.f32.mrf.mxu0
  %v1795 = vpop.f32.mrf.mxu0
  %v1796 = vadd.f32 0.0, %v1795
  %v1797 = vpop.f32.mrf.mxu0
  %1798 = vmatprep.mubr.bf16.mxu0 %v1018
  %1799 = vmatmul.mubr.bf16.gmra.mxu0 %v1017
  %v1800 = vpop.f32.mrf.mxu0
  %v1801 = vadd.f32 0.0, %v1800
  %v1802 = vpop.f32.mrf.mxu0
  %v1803 = vpop.f32.mrf.mxu0
  %v1804 = vadd.f32 0.0, %v1803
  %v1805 = vpop.f32.mrf.mxu0
  %1806 = vmatprep.mubr.bf16.mxu0 %v1021
  %1807 = vmatmul.mubr.bf16.gmra.mxu0 %v1020
  %v1808 = vpop.f32.mrf.mxu0
  %v1809 = vadd.f32 0.0, %v1808
  %v1810 = vpop.f32.mrf.mxu0
  %v1811 = vpop.f32.mrf.mxu0
  %v1812 = vadd.f32 0.0, %v1811
  %v1813 = vpop.f32.mrf.mxu0
  %1814 = vmatprep.mubr.bf16.mxu0 %v1024
  %1815 = vmatmul.mubr.bf16.gmra.mxu0 %v1023
  %v1816 = vpop.f32.mrf.mxu0
  %v1817 = vadd.f32 0.0, %v1816
  %v1818 = vpop.f32.mrf.mxu0
  %v1819 = vpop.f32.mrf.mxu0
  %v1820 = vadd.f32 0.0, %v1819
  %v1821 = vpop.f32.mrf.mxu0
  %1822 = vmatprep.mubr.bf16.mxu0 %v1027
  %1823 = vmatmul.mubr.bf16.gmra.mxu0 %v1026
  %v1824 = vpop.f32.mrf.mxu0
  %v1825 = vadd.f32 0.0, %v1824
  %v1826 = vpop.f32.mrf.mxu0
  %v1827 = vpop.f32.mrf.mxu0
  %v1828 = vadd.f32 0.0, %v1827
  %v1829 = vpop.f32.mrf.mxu0
  %1830 = vmatprep.mubr.bf16.mxu0 %v1030
  %1831 = vmatmul.mubr.bf16.gmra.mxu0 %v1029
  %v1832 = vpop.f32.mrf.mxu0
  %v1833 = vadd.f32 0.0, %v1832
  %v1834 = vpop.f32.mrf.mxu0
  %v1835 = vpop.f32.mrf.mxu0
  %v1836 = vadd.f32 0.0, %v1835
  %v1837 = vpop.f32.mrf.mxu0
  %1838 = vmatprep.mubr.bf16.mxu0 %v1033
  %1839 = vmatmul.mubr.bf16.gmra.mxu0 %v1032
  %v1840 = vpop.f32.mrf.mxu0
  %v1841 = vadd.f32 0.0, %v1840
  %v1842 = vpop.f32.mrf.mxu0
  %v1843 = vpop.f32.mrf.mxu0
  %v1844 = vadd.f32 0.0, %v1843
  %v1845 = vpop.f32.mrf.mxu0
  %1846 = vmatprep.mubr.bf16.mxu0 %v1036
  %1847 = vmatmul.mubr.bf16.gmra.mxu0 %v1035
  %v1848 = vpop.f32.mrf.mxu0
  %v1849 = vadd.f32 0.0, %v1848
  %v1850 = vpop.f32.mrf.mxu0
  %v1851 = vpop.f32.mrf.mxu0
  %v1852 = vadd.f32 0.0, %v1851
  %v1853 = vpop.f32.mrf.mxu0
  %1854 = vmatprep.mubr.bf16.mxu0 %v1039
  %1855 = vmatmul.mubr.bf16.gmra.mxu0 %v1038
  %v1856 = vpop.f32.mrf.mxu0
  %v1857 = vadd.f32 0.0, %v1856
  %v1858 = vpop.f32.mrf.mxu0
  %v1859 = vpop.f32.mrf.mxu0
  %v1860 = vadd.f32 0.0, %v1859
  %v1861 = vpop.f32.mrf.mxu0
  %1862 = vmatprep.mubr.bf16.mxu0 %v1042
  %1863 = vmatmul.mubr.bf16.gmra.mxu0 %v1041
  %v1864 = vpop.f32.mrf.mxu0
  %v1865 = vadd.f32 0.0, %v1864
  %v1866 = vpop.f32.mrf.mxu0
  %v1867 = vpop.f32.mrf.mxu0
  %v1868 = vadd.f32 0.0, %v1867
  %v1869 = vpop.f32.mrf.mxu0
  %1870 = vmatprep.mubr.bf16.mxu0 %v1045
  %1871 = vmatmul.mubr.bf16.gmra.mxu0 %v1044
  %v1872 = vpop.f32.mrf.mxu0
  %v1873 = vadd.f32 0.0, %v1872
  %v1874 = vpop.f32.mrf.mxu0
  %v1875 = vpop.f32.mrf.mxu0
  %v1876 = vadd.f32 0.0, %v1875
  %v1877 = vpop.f32.mrf.mxu0
  %1878 = vmatprep.mubr.bf16.mxu0 %v1048
  %1879 = vmatmul.mubr.bf16.gmra.mxu0 %v1047
  %v1880 = vpop.f32.mrf.mxu0
  %v1881 = vadd.f32 0.0, %v1880
  %v1882 = vpop.f32.mrf.mxu0
  %v1883 = vpop.f32.mrf.mxu0
  %v1884 = vadd.f32 0.0, %v1883
  %v1885 = vpop.f32.mrf.mxu0
  %1886 = vmatprep.mubr.bf16.mxu0 %v1051
  %1887 = vmatmul.mubr.bf16.gmra.mxu0 %v1050
  %v1888 = vpop.f32.mrf.mxu0
  %v1889 = vadd.f32 0.0, %v1888
  %v1890 = vpop.f32.mrf.mxu0
  %v1891 = vpop.f32.mrf.mxu0
  %v1892 = vadd.f32 0.0, %v1891
  %v1893 = vpop.f32.mrf.mxu0
  %1894 = vmatprep.mubr.bf16.mxu0 %v1054
  %1895 = vmatmul.mubr.bf16.gmra.mxu0 %v1053
  %v1896 = vpop.f32.mrf.mxu0
  %v1897 = vadd.f32 0.0, %v1896
  %v1898 = vpop.f32.mrf.mxu0
  %v1899 = vpop.f32.mrf.mxu0
  %v1900 = vadd.f32 0.0, %v1899
  %v1901 = vpop.f32.mrf.mxu0
  %1902 = vmatprep.mubr.bf16.mxu0 %v1057
  %1903 = vmatmul.mubr.bf16.gmra.mxu0 %v1056
  %v1904 = vpop.f32.mrf.mxu0
  %v1905 = vadd.f32 0.0, %v1904
  %v1906 = vpop.f32.mrf.mxu0
  %v1907 = vpop.f32.mrf.mxu0
  %v1908 = vadd.f32 0.0, %v1907
  %v1909 = vpop.f32.mrf.mxu0
  %1910 = vmatprep.mubr.bf16.mxu0 %v1060
  %1911 = vmatmul.mubr.bf16.gmra.mxu0 %v1059
  %v1912 = vpop.f32.mrf.mxu0
  %v1913 = vadd.f32 0.0, %v1912
  %v1914 = vpop.f32.mrf.mxu0
  %v1915 = vpop.f32.mrf.mxu0
  %v1916 = vadd.f32 0.0, %v1915
  %v1917 = vpop.f32.mrf.mxu0
  %1918 = vmatprep.mubr.bf16.mxu0 %v1063
  %1919 = vmatmul.mubr.bf16.gmra.mxu0 %v1062
  %v1920 = vpop.f32.mrf.mxu0
  %v1921 = vadd.f32 0.0, %v1920
  %v1922 = vpop.f32.mrf.mxu0
  %v1923 = vpop.f32.mrf.mxu0
  %v1924 = vadd.f32 0.0, %v1923
  %v1925 = vpop.f32.mrf.mxu0
  %1926 = vmatprep.mubr.bf16.mxu0 %v1066
  %1927 = vmatmul.mubr.bf16.gmra.mxu0 %v1065
  %v1928 = vpop.f32.mrf.mxu0
  %v1929 = vadd.f32 0.0, %v1928
  %v1930 = vpop.f32.mrf.mxu0
  %v1931 = vpop.f32.mrf.mxu0
  %v1932 = vadd.f32 0.0, %v1931
  %v1933 = vpop.f32.mrf.mxu0
  %1934 = vmatprep.mubr.bf16.mxu0 %v1069
  %1935 = vmatmul.mubr.bf16.gmra.mxu0 %v1068
  %v1936 = vpop.f32.mrf.mxu0
  %v1937 = vadd.f32 0.0, %v1936
  %v1938 = vpop.f32.mrf.mxu0
  %v1939 = vpop.f32.mrf.mxu0
  %v1940 = vadd.f32 0.0, %v1939
  %v1941 = vpop.f32.mrf.mxu0
  %1942 = vmatprep.mubr.bf16.mxu0 %v1072
  %1943 = vmatmul.mubr.bf16.gmra.mxu0 %v1071
  %v1944 = vpop.f32.mrf.mxu0
  %v1945 = vadd.f32 0.0, %v1944
  %v1946 = vpop.f32.mrf.mxu0
  %v1947 = vpop.f32.mrf.mxu0
  %v1948 = vadd.f32 0.0, %v1947
  %v1949 = vpop.f32.mrf.mxu0
  %1950 = vmatprep.mubr.bf16.mxu0 %v1075
  %1951 = vmatmul.mubr.bf16.gmra.mxu0 %v1074
  %v1952 = vpop.f32.mrf.mxu0
  %v1953 = vadd.f32 0.0, %v1952
  %v1954 = vpop.f32.mrf.mxu0
  %v1955 = vpop.f32.mrf.mxu0
  %v1956 = vadd.f32 0.0, %v1955
  %v1957 = vpop.f32.mrf.mxu0
  %1958 = vmatprep.mubr.bf16.mxu0 %v1078
  %1959 = vmatmul.mubr.bf16.gmra.mxu0 %v1077
  %v1960 = vpop.f32.mrf.mxu0
  %v1961 = vadd.f32 0.0, %v1960
  %v1962 = vpop.f32.mrf.mxu0
  %v1963 = vpop.f32.mrf.mxu0
  %v1964 = vadd.f32 0.0, %v1963
  %v1965 = vpop.f32.mrf.mxu0
  %1966 = vmatprep.mubr.bf16.mxu0 %v1081
  %1967 = vmatmul.mubr.bf16.gmra.mxu0 %v1080
  %v1968 = vpop.f32.mrf.mxu0
  %v1969 = vadd.f32 0.0, %v1968
  %v1970 = vpop.f32.mrf.mxu0
  %v1971 = vpop.f32.mrf.mxu0
  %v1972 = vadd.f32 0.0, %v1971
  %v1973 = vpop.f32.mrf.mxu0
  %1974 = vmatprep.mubr.bf16.mxu0 %v1084
  %1975 = vmatmul.mubr.bf16.gmra.mxu0 %v1083
  %v1976 = vpop.f32.mrf.mxu0
  %v1977 = vadd.f32 0.0, %v1976
  %v1978 = vpop.f32.mrf.mxu0
  %v1979 = vpop.f32.mrf.mxu0
  %v1980 = vadd.f32 0.0, %v1979
  %v1981 = vpop.f32.mrf.mxu0
  %1982 = vmatprep.mubr.bf16.mxu0 %v1087
  %1983 = vmatmul.mubr.bf16.gmra.mxu0 %v1086
  %v1984 = vpop.f32.mrf.mxu0
  %v1985 = vadd.f32 0.0, %v1984
  %v1986 = vpop.f32.mrf.mxu0
  %v1987 = vpop.f32.mrf.mxu0
  %v1988 = vadd.f32 0.0, %v1987
  %v1989 = vpop.f32.mrf.mxu0
  %1990 = vmatprep.mubr.bf16.mxu0 %v1090
  %1991 = vmatmul.mubr.bf16.gmra.mxu0 %v1089
  %v1992 = vpop.f32.mrf.mxu0
  %v1993 = vadd.f32 0.0, %v1992
  %v1994 = vpop.f32.mrf.mxu0
  %v1995 = vpop.f32.mrf.mxu0
  %v1996 = vadd.f32 0.0, %v1995
  %v1997 = vpop.f32.mrf.mxu0
  %1998 = vmatprep.mubr.bf16.mxu0 %v1093
  %1999 = vmatmul.mubr.bf16.gmra.mxu0 %v1092
  %v2000 = vpop.f32.mrf.mxu0
  %v2001 = vadd.f32 0.0, %v2000
  %v2002 = vpop.f32.mrf.mxu0
  %v2003 = vpop.f32.mrf.mxu0
  %v2004 = vadd.f32 0.0, %v2003
  %v2005 = vpop.f32.mrf.mxu0
  %2006 = vmatprep.mubr.bf16.mxu0 %v1096
  %2007 = vmatmul.mubr.bf16.gmra.mxu0 %v1095
  %v2008 = vpop.f32.mrf.mxu0
  %v2009 = vadd.f32 0.0, %v2008
  %v2010 = vpop.f32.mrf.mxu0
  %v2011 = vpop.f32.mrf.mxu0
  %v2012 = vadd.f32 0.0, %v2011
  %v2013 = vpop.f32.mrf.mxu0
  %2014 = vmatprep.mubr.bf16.mxu0 %v1099
  %2015 = vmatmul.mubr.bf16.gmra.mxu0 %v1098
  %v2016 = vpop.f32.mrf.mxu0
  %v2017 = vadd.f32 0.0, %v2016
  %v2018 = vpop.f32.mrf.mxu0
  %v2019 = vpop.f32.mrf.mxu0
  %v2020 = vadd.f32 0.0, %v2019
  %v2021 = vpop.f32.mrf.mxu0
  %2022 = vmatprep.mubr.bf16.mxu0 %v1102
  %2023 = vmatmul.mubr.bf16.gmra.mxu0 %v1101
  %v2024 = vpop.f32.mrf.mxu0
  %v2025 = vadd.f32 0.0, %v2024
  %v2026 = vpop.f32.mrf.mxu0
  %v2027 = vpop.f32.mrf.mxu0
  %v2028 = vadd.f32 0.0, %v2027
  %v2029 = vpop.f32.mrf.mxu0
  %2030 = vmatprep.mubr.bf16.mxu0 %v1105
  %2031 = vmatmul.mubr.bf16.gmra.mxu0 %v1104
  %v2032 = vpop.f32.mrf.mxu0
  %v2033 = vadd.f32 0.0, %v2032
  %v2034 = vpop.f32.mrf.mxu0
  %v2035 = vpop.f32.mrf.mxu0
  %v2036 = vadd.f32 0.0, %v2035
  %v2037 = vpop.f32.mrf.mxu0
  %2038 = vmatprep.mubr.bf16.mxu0 %v1108
  %2039 = vmatmul.mubr.bf16.gmra.mxu0 %v1107
  %v2040 = vpop.f32.mrf.mxu0
  %v2041 = vadd.f32 0.0, %v2040
  %v2042 = vpop.f32.mrf.mxu0
  %v2043 = vpop.f32.mrf.mxu0
  %v2044 = vadd.f32 0.0, %v2043
  %v2045 = vpop.f32.mrf.mxu0
  %2046 = vmatprep.mubr.bf16.mxu0 %v1111
  %2047 = vmatmul.mubr.bf16.gmra.mxu0 %v1110
  %v2048 = vpop.f32.mrf.mxu0
  %v2049 = vadd.f32 0.0, %v2048
  %v2050 = vpop.f32.mrf.mxu0
  %v2051 = vpop.f32.mrf.mxu0
  %v2052 = vadd.f32 0.0, %v2051
  %v2053 = vpop.f32.mrf.mxu0
  %2054 = vmatprep.mubr.bf16.mxu0 %v1114
  %2055 = vmatmul.mubr.bf16.gmra.mxu0 %v1113
  %v2056 = vpop.f32.mrf.mxu0
  %v2057 = vadd.f32 0.0, %v2056
  %v2058 = vpop.f32.mrf.mxu0
  %v2059 = vpop.f32.mrf.mxu0
  %v2060 = vadd.f32 0.0, %v2059
  %v2061 = vpop.f32.mrf.mxu0
  %2062 = vmatprep.mubr.bf16.mxu0 %v1117
  %2063 = vmatmul.mubr.bf16.gmra.mxu0 %v1116
  %v2064 = vpop.f32.mrf.mxu0
  %v2065 = vadd.f32 0.0, %v2064
  %v2066 = vpop.f32.mrf.mxu0
  %v2067 = vpop.f32.mrf.mxu0
  %v2068 = vadd.f32 0.0, %v2067
  %v2069 = vpop.f32.mrf.mxu0
  %2070 = vmatprep.mubr.bf16.mxu0 %v1120
  %2071 = vmatmul.mubr.bf16.gmra.mxu0 %v1119
  %v2072 = vpop.f32.mrf.mxu0
  %v2073 = vadd.f32 0.0, %v2072
  %v2074 = vpop.f32.mrf.mxu0
  %v2075 = vpop.f32.mrf.mxu0
  %v2076 = vadd.f32 0.0, %v2075
  %v2077 = vpop.f32.mrf.mxu0
  %2078 = vmatprep.mubr.bf16.mxu0 %v1123
  %2079 = vmatmul.mubr.bf16.gmra.mxu0 %v1122
  %v2080 = vpop.f32.mrf.mxu0
  %v2081 = vadd.f32 0.0, %v2080
  %v2082 = vpop.f32.mrf.mxu0
  %v2083 = vpop.f32.mrf.mxu0
  %v2084 = vadd.f32 0.0, %v2083
  %v2085 = vpop.f32.mrf.mxu0
  %2086 = vmatprep.mubr.bf16.mxu0 %v1126
  %2087 = vmatmul.mubr.bf16.gmra.mxu0 %v1125
  %v2088 = vpop.f32.mrf.mxu0
  %v2089 = vadd.f32 0.0, %v2088
  %v2090 = vpop.f32.mrf.mxu0
  %v2091 = vpop.f32.mrf.mxu0
  %v2092 = vadd.f32 0.0, %v2091
  %v2093 = vpop.f32.mrf.mxu0
  %2094 = vmatprep.mubr.bf16.mxu0 %v1129
  %2095 = vmatmul.mubr.bf16.gmra.mxu0 %v1128
  %v2096 = vpop.f32.mrf.mxu0
  %v2097 = vadd.f32 0.0, %v2096
  %v2098 = vpop.f32.mrf.mxu0
  %v2099 = vpop.f32.mrf.mxu0
  %v2100 = vadd.f32 0.0, %v2099
  %v2101 = vpop.f32.mrf.mxu0
  %2102 = vmatprep.mubr.bf16.mxu0 %v1132
  %2103 = vmatmul.mubr.bf16.gmra.mxu0 %v1131
  %v2104 = vpop.f32.mrf.mxu0
  %v2105 = vadd.f32 0.0, %v2104
  %v2106 = vpop.f32.mrf.mxu0
  %v2107 = vpop.f32.mrf.mxu0
  %v2108 = vadd.f32 0.0, %v2107
  %v2109 = vpop.f32.mrf.mxu0
  %2110 = vmatprep.mubr.bf16.mxu0 %v1135
  %2111 = vmatmul.mubr.bf16.gmra.mxu0 %v1134
  %v2112 = vpop.f32.mrf.mxu0
  %v2113 = vadd.f32 0.0, %v2112
  %v2114 = vpop.f32.mrf.mxu0
  %v2115 = vpop.f32.mrf.mxu0
  %v2116 = vadd.f32 0.0, %v2115
  %v2117 = vpop.f32.mrf.mxu0
  %2118 = vmatprep.mubr.bf16.mxu0 %v1138
  %2119 = vmatmul.mubr.bf16.gmra.mxu0 %v1137
  %v2120 = vpop.f32.mrf.mxu0
  %v2121 = vadd.f32 0.0, %v2120
  %v2122 = vpop.f32.mrf.mxu0
  %v2123 = vpop.f32.mrf.mxu0
  %v2124 = vadd.f32 0.0, %v2123
  %v2125 = vpop.f32.mrf.mxu0
  %2126 = vmatprep.mubr.bf16.mxu0 %v1141
  %2127 = vmatmul.mubr.bf16.gmra.mxu0 %v1140
  %v2128 = vpop.f32.mrf.mxu0
  %v2129 = vadd.f32 0.0, %v2128
  %v2130 = vpop.f32.mrf.mxu0
  %v2131 = vpop.f32.mrf.mxu0
  %v2132 = vadd.f32 0.0, %v2131
  %v2133 = vpop.f32.mrf.mxu0
  %2134 = vmatprep.mubr.bf16.mxu0 %v1144
  %2135 = vmatmul.mubr.bf16.gmra.mxu0 %v1143
  %v2136 = vpop.f32.mrf.mxu0
  %v2137 = vadd.f32 0.0, %v2136
  %v2138 = vpop.f32.mrf.mxu0
  %v2139 = vpop.f32.mrf.mxu0
  %v2140 = vadd.f32 0.0, %v2139
  %v2141 = vpop.f32.mrf.mxu0
  %2142 = vmatprep.mubr.bf16.mxu0 %v1147
  %2143 = vmatmul.mubr.bf16.gmra.mxu0 %v1146
  %v2144 = vpop.f32.mrf.mxu0
  %v2145 = vadd.f32 0.0, %v2144
  %v2146 = vpop.f32.mrf.mxu0
  %v2147 = vpop.f32.mrf.mxu0
  %v2148 = vadd.f32 0.0, %v2147
  %v2149 = vpop.f32.mrf.mxu0
  %2150 = vdwg.mxu0
  %2151 = vmatprep.subr.bf16.mxu0 0
  %2152 = vmatpush1.bf16.msra.mxu0 0
  %2153 = vmatprep.subr.bf16.mxu0 0
  %2154 = vmatpush1.bf16.msra.mxu0 0
  %2155 = vmatprep.subr.bf16.mxu0 0
  %2156 = vmatpush1.bf16.msra.mxu0 %v1604
  %2157 = vmatprep.subr.bf16.mxu0 0
  %2158 = vmatpush1.bf16.msra.mxu0 %v1383
  %2159 = vmatprep.subr.bf16.mxu0 0
  %2160 = vmatpush1.bf16.msra.mxu0 %v1382
  %2161 = vmatprep.subr.bf16.mxu0 0
  %2162 = vmatpush1.bf16.msra.mxu0 %v1381
  %2163 = vmatprep.subr.bf16.mxu0 0
  %2164 = vmatpush1.bf16.msra.mxu0 %v1380
  %2165 = vmatprep.subr.bf16.mxu0 0
  %2166 = vmatpush1.bf16.msra.mxu0 %v1379
  %2167 = vmatprep.subr.bf16.mxu0 0
  %2168 = vmatpush2.bf16.msra.mxu0 0
  %2169 = vmatprep.subr.bf16.mxu0 0
  %2170 = vmatpush2.bf16.msra.mxu0 0
  %2171 = vmatprep.subr.bf16.mxu0 0
  %2172 = vmatpush2.bf16.msra.mxu0 0
  %2173 = vmatprep.subr.bf16.mxu0 0
  %2174 = vmatpush2.bf16.msra.mxu0 0
  %2175 = vmatprep.subr.bf16.mxu0 0
  %2176 = vmatpush2.bf16.msra.mxu0 0
  %2177 = vmatprep.subr.bf16.mxu0 0
  %2178 = vmatpush2.bf16.msra.mxu0 0
  %2179 = vmatprep.subr.bf16.mxu0 0
  %2180 = vmatpush2.bf16.msra.mxu0 0
  %2181 = vmatprep.subr.bf16.mxu0 0
  %2182 = vmatpush2.bf16.msra.mxu0 0
  %2183 = vmatprep.mubr.bf16.mxu0 0
  %2184 = vmatmul.mubr.bf16.gmra.mxu0 %v1408
  %v2185 = vpop.f32.mrf.mxu0
  %v2186 = vadd.f32 %v1641, %v2185
  %v2187 = vpop.f32.mrf.mxu0
  %v2188 = vpop.f32.mrf.mxu0
  %v2189 = vadd.f32 %v1644, %v2188
  %v2190 = vpop.f32.mrf.mxu0
  %2191 = vmatprep.mubr.bf16.mxu0 0
  %2192 = vmatmul.mubr.bf16.gmra.mxu0 %v1411
  %v2193 = vpop.f32.mrf.mxu0
  %v2194 = vadd.f32 %v1649, %v2193
  %v2195 = vpop.f32.mrf.mxu0
  %v2196 = vpop.f32.mrf.mxu0
  %v2197 = vadd.f32 %v1652, %v2196
  %v2198 = vpop.f32.mrf.mxu0
  %2199 = vmatprep.mubr.bf16.mxu0 0
  %2200 = vmatmul.mubr.bf16.gmra.mxu0 %v1414
  %v2201 = vpop.f32.mrf.mxu0
  %v2202 = vadd.f32 %v1657, %v2201
  %v2203 = vpop.f32.mrf.mxu0
  %v2204 = vpop.f32.mrf.mxu0
  %v2205 = vadd.f32 %v1660, %v2204
  %v2206 = vpop.f32.mrf.mxu0
  %2207 = vmatprep.mubr.bf16.mxu0 0
  %2208 = vmatmul.mubr.bf16.gmra.mxu0 %v1417
  %v2209 = vpop.f32.mrf.mxu0
  %v2210 = vadd.f32 %v1665, %v2209
  %v2211 = vpop.f32.mrf.mxu0
  %v2212 = vpop.f32.mrf.mxu0
  %v2213 = vadd.f32 %v1668, %v2212
  %v2214 = vpop.f32.mrf.mxu0
  %2215 = vmatprep.mubr.bf16.mxu0 0
  %2216 = vmatmul.mubr.bf16.gmra.mxu0 %v1420
  %v2217 = vpop.f32.mrf.mxu0
  %v2218 = vadd.f32 %v1673, %v2217
  %v2219 = vpop.f32.mrf.mxu0
  %v2220 = vpop.f32.mrf.mxu0
  %v2221 = vadd.f32 %v1676, %v2220
  %v2222 = vpop.f32.mrf.mxu0
  %2223 = vmatprep.mubr.bf16.mxu0 0
  %2224 = vmatmul.mubr.bf16.gmra.mxu0 %v1423
  %v2225 = vpop.f32.mrf.mxu0
  %v2226 = vadd.f32 %v1681, %v2225
  %v2227 = vpop.f32.mrf.mxu0
  %v2228 = vpop.f32.mrf.mxu0
  %v2229 = vadd.f32 %v1684, %v2228
  %v2230 = vpop.f32.mrf.mxu0
  %2231 = vmatprep.mubr.bf16.mxu0 0
  %2232 = vmatmul.mubr.bf16.gmra.mxu0 %v1426
  %v2233 = vpop.f32.mrf.mxu0
  %v2234 = vadd.f32 %v1689, %v2233
  %v2235 = vpop.f32.mrf.mxu0
  %v2236 = vpop.f32.mrf.mxu0
  %v2237 = vadd.f32 %v1692, %v2236
  %v2238 = vpop.f32.mrf.mxu0
  %2239 = vmatprep.mubr.bf16.mxu0 0
  %2240 = vmatmul.mubr.bf16.gmra.mxu0 %v1429
  %v2241 = vpop.f32.mrf.mxu0
  %v2242 = vadd.f32 %v1697, %v2241
  %v2243 = vpop.f32.mrf.mxu0
  %v2244 = vpop.f32.mrf.mxu0
  %v2245 = vadd.f32 %v1700, %v2244
  %v2246 = vpop.f32.mrf.mxu0
  %2247 = vmatprep.mubr.bf16.mxu0 0
  %2248 = vmatmul.mubr.bf16.gmra.mxu0 %v1432
  %v2249 = vpop.f32.mrf.mxu0
  %v2250 = vadd.f32 %v1705, %v2249
  %v2251 = vpop.f32.mrf.mxu0
  %v2252 = vpop.f32.mrf.mxu0
  %v2253 = vadd.f32 %v1708, %v2252
  %v2254 = vpop.f32.mrf.mxu0
  %2255 = vmatprep.mubr.bf16.mxu0 0
  %2256 = vmatmul.mubr.bf16.gmra.mxu0 %v1435
  %v2257 = vpop.f32.mrf.mxu0
  %v2258 = vadd.f32 %v1713, %v2257
  %v2259 = vpop.f32.mrf.mxu0
  %v2260 = vpop.f32.mrf.mxu0
  %v2261 = vadd.f32 %v1716, %v2260
  %v2262 = vpop.f32.mrf.mxu0
  %2263 = vmatprep.mubr.bf16.mxu0 0
  %2264 = vmatmul.mubr.bf16.gmra.mxu0 %v1438
  %v2265 = vpop.f32.mrf.mxu0
  %v2266 = vadd.f32 %v1721, %v2265
  %v2267 = vpop.f32.mrf.mxu0
  %v2268 = vpop.f32.mrf.mxu0
  %v2269 = vadd.f32 %v1724, %v2268
  %v2270 = vpop.f32.mrf.mxu0
  %2271 = vmatprep.mubr.bf16.mxu0 0
  %2272 = vmatmul.mubr.bf16.gmra.mxu0 %v1441
  %v2273 = vpop.f32.mrf.mxu0
  %v2274 = vadd.f32 %v1729, %v2273
  %v2275 = vpop.f32.mrf.mxu0
  %v2276 = vpop.f32.mrf.mxu0
  %v2277 = vadd.f32 %v1732, %v2276
  %v2278 = vpop.f32.mrf.mxu0
  %2279 = vmatprep.mubr.bf16.mxu0 0
  %2280 = vmatmul.mubr.bf16.gmra.mxu0 %v1444
  %v2281 = vpop.f32.mrf.mxu0
  %v2282 = vadd.f32 %v1737, %v2281
  %v2283 = vpop.f32.mrf.mxu0
  %v2284 = vpop.f32.mrf.mxu0
  %v2285 = vadd.f32 %v1740, %v2284
  %v2286 = vpop.f32.mrf.mxu0
  %2287 = vmatprep.mubr.bf16.mxu0 0
  %2288 = vmatmul.mubr.bf16.gmra.mxu0 %v1447
  %v2289 = vpop.f32.mrf.mxu0
  %v2290 = vadd.f32 %v1745, %v2289
  %v2291 = vpop.f32.mrf.mxu0
  %v2292 = vpop.f32.mrf.mxu0
  %v2293 = vadd.f32 %v1748, %v2292
  %v2294 = vpop.f32.mrf.mxu0
  %2295 = vmatprep.mubr.bf16.mxu0 0
  %2296 = vmatmul.mubr.bf16.gmra.mxu0 %v1450
  %v2297 = vpop.f32.mrf.mxu0
  %v2298 = vadd.f32 %v1753, %v2297
  %v2299 = vpop.f32.mrf.mxu0
  %v2300 = vpop.f32.mrf.mxu0
  %v2301 = vadd.f32 %v1756, %v2300
  %v2302 = vpop.f32.mrf.mxu0
  %2303 = vmatprep.mubr.bf16.mxu0 0
  %2304 = vmatmul.mubr.bf16.gmra.mxu0 %v1453
  %v2305 = vpop.f32.mrf.mxu0
  %v2306 = vadd.f32 %v1761, %v2305
  %v2307 = vpop.f32.mrf.mxu0
  %v2308 = vpop.f32.mrf.mxu0
  %v2309 = vadd.f32 %v1764, %v2308
  %v2310 = vpop.f32.mrf.mxu0
  %2311 = vmatprep.mubr.bf16.mxu0 0
  %2312 = vmatmul.mubr.bf16.gmra.mxu0 %v1456
  %v2313 = vpop.f32.mrf.mxu0
  %v2314 = vadd.f32 %v1769, %v2313
  %v2315 = vpop.f32.mrf.mxu0
  %v2316 = vpop.f32.mrf.mxu0
  %v2317 = vadd.f32 %v1772, %v2316
  %v2318 = vpop.f32.mrf.mxu0
  %2319 = vmatprep.mubr.bf16.mxu0 0
  %2320 = vmatmul.mubr.bf16.gmra.mxu0 %v1459
  %v2321 = vpop.f32.mrf.mxu0
  %v2322 = vadd.f32 %v1777, %v2321
  %v2323 = vpop.f32.mrf.mxu0
  %v2324 = vpop.f32.mrf.mxu0
  %v2325 = vadd.f32 %v1780, %v2324
  %v2326 = vpop.f32.mrf.mxu0
  %2327 = vmatprep.mubr.bf16.mxu0 0
  %2328 = vmatmul.mubr.bf16.gmra.mxu0 %v1462
  %v2329 = vpop.f32.mrf.mxu0
  %v2330 = vadd.f32 %v1785, %v2329
  %v2331 = vpop.f32.mrf.mxu0
  %v2332 = vpop.f32.mrf.mxu0
  %v2333 = vadd.f32 %v1788, %v2332
  %v2334 = vpop.f32.mrf.mxu0
  %2335 = vmatprep.mubr.bf16.mxu0 0
  %2336 = vmatmul.mubr.bf16.gmra.mxu0 %v1465
  %v2337 = vpop.f32.mrf.mxu0
  %v2338 = vadd.f32 %v1793, %v2337
  %v2339 = vpop.f32.mrf.mxu0
  %v2340 = vpop.f32.mrf.mxu0
  %v2341 = vadd.f32 %v1796, %v2340
  %v2342 = vpop.f32.mrf.mxu0
  %2343 = vmatprep.mubr.bf16.mxu0 0
  %2344 = vmatmul.mubr.bf16.gmra.mxu0 %v1468
  %v2345 = vpop.f32.mrf.mxu0
  %v2346 = vadd.f32 %v1801, %v2345
  %v2347 = vpop.f32.mrf.mxu0
  %v2348 = vpop.f32.mrf.mxu0
  %v2349 = vadd.f32 %v1804, %v2348
  %v2350 = vpop.f32.mrf.mxu0
  %2351 = vmatprep.mubr.bf16.mxu0 0
  %2352 = vmatmul.mubr.bf16.gmra.mxu0 %v1471
  %v2353 = vpop.f32.mrf.mxu0
  %v2354 = vadd.f32 %v1809, %v2353
  %v2355 = vpop.f32.mrf.mxu0
  %v2356 = vpop.f32.mrf.mxu0
  %v2357 = vadd.f32 %v1812, %v2356
  %v2358 = vpop.f32.mrf.mxu0
  %2359 = vmatprep.mubr.bf16.mxu0 0
  %2360 = vmatmul.mubr.bf16.gmra.mxu0 %v1474
  %v2361 = vpop.f32.mrf.mxu0
  %v2362 = vadd.f32 %v1817, %v2361
  %v2363 = vpop.f32.mrf.mxu0
  %v2364 = vpop.f32.mrf.mxu0
  %v2365 = vadd.f32 %v1820, %v2364
  %v2366 = vpop.f32.mrf.mxu0
  %2367 = vmatprep.mubr.bf16.mxu0 0
  %2368 = vmatmul.mubr.bf16.gmra.mxu0 %v1477
  %v2369 = vpop.f32.mrf.mxu0
  %v2370 = vadd.f32 %v1825, %v2369
  %v2371 = vpop.f32.mrf.mxu0
  %v2372 = vpop.f32.mrf.mxu0
  %v2373 = vadd.f32 %v1828, %v2372
  %v2374 = vpop.f32.mrf.mxu0
  %2375 = vmatprep.mubr.bf16.mxu0 0
  %2376 = vmatmul.mubr.bf16.gmra.mxu0 %v1480
  %v2377 = vpop.f32.mrf.mxu0
  %v2378 = vadd.f32 %v1833, %v2377
  %v2379 = vpop.f32.mrf.mxu0
  %v2380 = vpop.f32.mrf.mxu0
  %v2381 = vadd.f32 %v1836, %v2380
  %v2382 = vpop.f32.mrf.mxu0
  %2383 = vmatprep.mubr.bf16.mxu0 0
  %2384 = vmatmul.mubr.bf16.gmra.mxu0 %v1483
  %v2385 = vpop.f32.mrf.mxu0
  %v2386 = vadd.f32 %v1841, %v2385
  %v2387 = vpop.f32.mrf.mxu0
  %v2388 = vpop.f32.mrf.mxu0
  %v2389 = vadd.f32 %v1844, %v2388
  %v2390 = vpop.f32.mrf.mxu0
  %2391 = vmatprep.mubr.bf16.mxu0 0
  %2392 = vmatmul.mubr.bf16.gmra.mxu0 %v1486
  %v2393 = vpop.f32.mrf.mxu0
  %v2394 = vadd.f32 %v1849, %v2393
  %v2395 = vpop.f32.mrf.mxu0
  %v2396 = vpop.f32.mrf.mxu0
  %v2397 = vadd.f32 %v1852, %v2396
  %v2398 = vpop.f32.mrf.mxu0
  %2399 = vmatprep.mubr.bf16.mxu0 0
  %2400 = vmatmul.mubr.bf16.gmra.mxu0 %v1489
  %v2401 = vpop.f32.mrf.mxu0
  %v2402 = vadd.f32 %v1857, %v2401
  %v2403 = vpop.f32.mrf.mxu0
  %v2404 = vpop.f32.mrf.mxu0
  %v2405 = vadd.f32 %v1860, %v2404
  %v2406 = vpop.f32.mrf.mxu0
  %2407 = vmatprep.mubr.bf16.mxu0 0
  %2408 = vmatmul.mubr.bf16.gmra.mxu0 %v1492
  %v2409 = vpop.f32.mrf.mxu0
  %v2410 = vadd.f32 %v1865, %v2409
  %v2411 = vpop.f32.mrf.mxu0
  %v2412 = vpop.f32.mrf.mxu0
  %v2413 = vadd.f32 %v1868, %v2412
  %v2414 = vpop.f32.mrf.mxu0
  %2415 = vmatprep.mubr.bf16.mxu0 0
  %2416 = vmatmul.mubr.bf16.gmra.mxu0 %v1495
  %v2417 = vpop.f32.mrf.mxu0
  %v2418 = vadd.f32 %v1873, %v2417
  %v2419 = vpop.f32.mrf.mxu0
  %v2420 = vpop.f32.mrf.mxu0
  %v2421 = vadd.f32 %v1876, %v2420
  %v2422 = vpop.f32.mrf.mxu0
  %2423 = vmatprep.mubr.bf16.mxu0 0
  %2424 = vmatmul.mubr.bf16.gmra.mxu0 %v1498
  %v2425 = vpop.f32.mrf.mxu0
  %v2426 = vadd.f32 %v1881, %v2425
  %v2427 = vpop.f32.mrf.mxu0
  %v2428 = vpop.f32.mrf.mxu0
  %v2429 = vadd.f32 %v1884, %v2428
  %v2430 = vpop.f32.mrf.mxu0
  %2431 = vmatprep.mubr.bf16.mxu0 0
  %2432 = vmatmul.mubr.bf16.gmra.mxu0 %v1501
  %v2433 = vpop.f32.mrf.mxu0
  %v2434 = vadd.f32 %v1889, %v2433
  %v2435 = vpop.f32.mrf.mxu0
  %v2436 = vpop.f32.mrf.mxu0
  %v2437 = vadd.f32 %v1892, %v2436
  %v2438 = vpop.f32.mrf.mxu0
  %2439 = vmatprep.mubr.bf16.mxu0 0
  %2440 = vmatmul.mubr.bf16.gmra.mxu0 %v1504
  %v2441 = vpop.f32.mrf.mxu0
  %v2442 = vadd.f32 %v1897, %v2441
  %v2443 = vpop.f32.mrf.mxu0
  %v2444 = vpop.f32.mrf.mxu0
  %v2445 = vadd.f32 %v1900, %v2444
  %v2446 = vpop.f32.mrf.mxu0
  %2447 = vmatprep.mubr.bf16.mxu0 0
  %2448 = vmatmul.mubr.bf16.gmra.mxu0 %v1507
  %v2449 = vpop.f32.mrf.mxu0
  %v2450 = vadd.f32 %v1905, %v2449
  %v2451 = vpop.f32.mrf.mxu0
  %v2452 = vpop.f32.mrf.mxu0
  %v2453 = vadd.f32 %v1908, %v2452
  %v2454 = vpop.f32.mrf.mxu0
  %2455 = vmatprep.mubr.bf16.mxu0 0
  %2456 = vmatmul.mubr.bf16.gmra.mxu0 %v1510
  %v2457 = vpop.f32.mrf.mxu0
  %v2458 = vadd.f32 %v1913, %v2457
  %v2459 = vpop.f32.mrf.mxu0
  %v2460 = vpop.f32.mrf.mxu0
  %v2461 = vadd.f32 %v1916, %v2460
  %v2462 = vpop.f32.mrf.mxu0
  %2463 = vmatprep.mubr.bf16.mxu0 0
  %2464 = vmatmul.mubr.bf16.gmra.mxu0 %v1513
  %v2465 = vpop.f32.mrf.mxu0
  %v2466 = vadd.f32 %v1921, %v2465
  %v2467 = vpop.f32.mrf.mxu0
  %v2468 = vpop.f32.mrf.mxu0
  %v2469 = vadd.f32 %v1924, %v2468
  %v2470 = vpop.f32.mrf.mxu0
  %2471 = vmatprep.mubr.bf16.mxu0 0
  %2472 = vmatmul.mubr.bf16.gmra.mxu0 %v1516
  %v2473 = vpop.f32.mrf.mxu0
  %v2474 = vadd.f32 %v1929, %v2473
  %v2475 = vpop.f32.mrf.mxu0
  %v2476 = vpop.f32.mrf.mxu0
  %v2477 = vadd.f32 %v1932, %v2476
  %v2478 = vpop.f32.mrf.mxu0
  %2479 = vmatprep.mubr.bf16.mxu0 0
  %2480 = vmatmul.mubr.bf16.gmra.mxu0 %v1519
  %v2481 = vpop.f32.mrf.mxu0
  %v2482 = vadd.f32 %v1937, %v2481
  %v2483 = vpop.f32.mrf.mxu0
  %v2484 = vpop.f32.mrf.mxu0
  %v2485 = vadd.f32 %v1940, %v2484
  %v2486 = vpop.f32.mrf.mxu0
  %2487 = vmatprep.mubr.bf16.mxu0 0
  %2488 = vmatmul.mubr.bf16.gmra.mxu0 %v1522
  %v2489 = vpop.f32.mrf.mxu0
  %v2490 = vadd.f32 %v1945, %v2489
  %v2491 = vpop.f32.mrf.mxu0
  %v2492 = vpop.f32.mrf.mxu0
  %v2493 = vadd.f32 %v1948, %v2492
  %v2494 = vpop.f32.mrf.mxu0
  %2495 = vmatprep.mubr.bf16.mxu0 0
  %2496 = vmatmul.mubr.bf16.gmra.mxu0 %v1525
  %v2497 = vpop.f32.mrf.mxu0
  %v2498 = vadd.f32 %v1953, %v2497
  %v2499 = vpop.f32.mrf.mxu0
  %v2500 = vpop.f32.mrf.mxu0
  %v2501 = vadd.f32 %v1956, %v2500
  %v2502 = vpop.f32.mrf.mxu0
  %2503 = vmatprep.mubr.bf16.mxu0 0
  %2504 = vmatmul.mubr.bf16.gmra.mxu0 %v1528
  %v2505 = vpop.f32.mrf.mxu0
  %v2506 = vadd.f32 %v1961, %v2505
  %v2507 = vpop.f32.mrf.mxu0
  %v2508 = vpop.f32.mrf.mxu0
  %v2509 = vadd.f32 %v1964, %v2508
  %v2510 = vpop.f32.mrf.mxu0
  %2511 = vmatprep.mubr.bf16.mxu0 0
  %2512 = vmatmul.mubr.bf16.gmra.mxu0 %v1531
  %v2513 = vpop.f32.mrf.mxu0
  %v2514 = vadd.f32 %v1969, %v2513
  %v2515 = vpop.f32.mrf.mxu0
  %v2516 = vpop.f32.mrf.mxu0
  %v2517 = vadd.f32 %v1972, %v2516
  %v2518 = vpop.f32.mrf.mxu0
  %2519 = vmatprep.mubr.bf16.mxu0 0
  %2520 = vmatmul.mubr.bf16.gmra.mxu0 %v1534
  %v2521 = vpop.f32.mrf.mxu0
  %v2522 = vadd.f32 %v1977, %v2521
  %v2523 = vpop.f32.mrf.mxu0
  %v2524 = vpop.f32.mrf.mxu0
  %v2525 = vadd.f32 %v1980, %v2524
  %v2526 = vpop.f32.mrf.mxu0
  %2527 = vmatprep.mubr.bf16.mxu0 0
  %2528 = vmatmul.mubr.bf16.gmra.mxu0 %v1537
  %v2529 = vpop.f32.mrf.mxu0
  %v2530 = vadd.f32 %v1985, %v2529
  %v2531 = vpop.f32.mrf.mxu0
  %v2532 = vpop.f32.mrf.mxu0
  %v2533 = vadd.f32 %v1988, %v2532
  %v2534 = vpop.f32.mrf.mxu0
  %2535 = vmatprep.mubr.bf16.mxu0 0
  %2536 = vmatmul.mubr.bf16.gmra.mxu0 %v1540
  %v2537 = vpop.f32.mrf.mxu0
  %v2538 = vadd.f32 %v1993, %v2537
  %v2539 = vpop.f32.mrf.mxu0
  %v2540 = vpop.f32.mrf.mxu0
  %v2541 = vadd.f32 %v1996, %v2540
  %v2542 = vpop.f32.mrf.mxu0
  %2543 = vmatprep.mubr.bf16.mxu0 0
  %2544 = vmatmul.mubr.bf16.gmra.mxu0 %v1543
  %v2545 = vpop.f32.mrf.mxu0
  %v2546 = vadd.f32 %v2001, %v2545
  %v2547 = vpop.f32.mrf.mxu0
  %v2548 = vpop.f32.mrf.mxu0
  %v2549 = vadd.f32 %v2004, %v2548
  %v2550 = vpop.f32.mrf.mxu0
  %2551 = vmatprep.mubr.bf16.mxu0 0
  %2552 = vmatmul.mubr.bf16.gmra.mxu0 %v1546
  %v2553 = vpop.f32.mrf.mxu0
  %v2554 = vadd.f32 %v2009, %v2553
  %v2555 = vpop.f32.mrf.mxu0
  %v2556 = vpop.f32.mrf.mxu0
  %v2557 = vadd.f32 %v2012, %v2556
  %v2558 = vpop.f32.mrf.mxu0
  %2559 = vmatprep.mubr.bf16.mxu0 0
  %2560 = vmatmul.mubr.bf16.gmra.mxu0 %v1549
  %v2561 = vpop.f32.mrf.mxu0
  %v2562 = vadd.f32 %v2017, %v2561
  %v2563 = vpop.f32.mrf.mxu0
  %v2564 = vpop.f32.mrf.mxu0
  %v2565 = vadd.f32 %v2020, %v2564
  %v2566 = vpop.f32.mrf.mxu0
  %2567 = vmatprep.mubr.bf16.mxu0 0
  %2568 = vmatmul.mubr.bf16.gmra.mxu0 %v1552
  %v2569 = vpop.f32.mrf.mxu0
  %v2570 = vadd.f32 %v2025, %v2569
  %v2571 = vpop.f32.mrf.mxu0
  %v2572 = vpop.f32.mrf.mxu0
  %v2573 = vadd.f32 %v2028, %v2572
  %v2574 = vpop.f32.mrf.mxu0
  %2575 = vmatprep.mubr.bf16.mxu0 0
  %2576 = vmatmul.mubr.bf16.gmra.mxu0 %v1555
  %v2577 = vpop.f32.mrf.mxu0
  %v2578 = vadd.f32 %v2033, %v2577
  %v2579 = vpop.f32.mrf.mxu0
  %v2580 = vpop.f32.mrf.mxu0
  %v2581 = vadd.f32 %v2036, %v2580
  %v2582 = vpop.f32.mrf.mxu0
  %2583 = vmatprep.mubr.bf16.mxu0 0
  %2584 = vmatmul.mubr.bf16.gmra.mxu0 %v1558
  %v2585 = vpop.f32.mrf.mxu0
  %v2586 = vadd.f32 %v2041, %v2585
  %v2587 = vpop.f32.mrf.mxu0
  %v2588 = vpop.f32.mrf.mxu0
  %v2589 = vadd.f32 %v2044, %v2588
  %v2590 = vpop.f32.mrf.mxu0
  %2591 = vmatprep.mubr.bf16.mxu0 0
  %2592 = vmatmul.mubr.bf16.gmra.mxu0 %v1561
  %v2593 = vpop.f32.mrf.mxu0
  %v2594 = vadd.f32 %v2049, %v2593
  %v2595 = vpop.f32.mrf.mxu0
  %v2596 = vpop.f32.mrf.mxu0
  %v2597 = vadd.f32 %v2052, %v2596
  %v2598 = vpop.f32.mrf.mxu0
  %2599 = vmatprep.mubr.bf16.mxu0 0
  %2600 = vmatmul.mubr.bf16.gmra.mxu0 %v1564
  %v2601 = vpop.f32.mrf.mxu0
  %v2602 = vadd.f32 %v2057, %v2601
  %v2603 = vpop.f32.mrf.mxu0
  %v2604 = vpop.f32.mrf.mxu0
  %v2605 = vadd.f32 %v2060, %v2604
  %v2606 = vpop.f32.mrf.mxu0
  %2607 = vmatprep.mubr.bf16.mxu0 0
  %2608 = vmatmul.mubr.bf16.gmra.mxu0 %v1567
  %v2609 = vpop.f32.mrf.mxu0
  %v2610 = vadd.f32 %v2065, %v2609
  %v2611 = vpop.f32.mrf.mxu0
  %v2612 = vpop.f32.mrf.mxu0
  %v2613 = vadd.f32 %v2068, %v2612
  %v2614 = vpop.f32.mrf.mxu0
  %2615 = vmatprep.mubr.bf16.mxu0 0
  %2616 = vmatmul.mubr.bf16.gmra.mxu0 %v1570
  %v2617 = vpop.f32.mrf.mxu0
  %v2618 = vadd.f32 %v2073, %v2617
  %v2619 = vpop.f32.mrf.mxu0
  %v2620 = vpop.f32.mrf.mxu0
  %v2621 = vadd.f32 %v2076, %v2620
  %v2622 = vpop.f32.mrf.mxu0
  %2623 = vmatprep.mubr.bf16.mxu0 0
  %2624 = vmatmul.mubr.bf16.gmra.mxu0 %v1573
  %v2625 = vpop.f32.mrf.mxu0
  %v2626 = vadd.f32 %v2081, %v2625
  %v2627 = vpop.f32.mrf.mxu0
  %v2628 = vpop.f32.mrf.mxu0
  %v2629 = vadd.f32 %v2084, %v2628
  %v2630 = vpop.f32.mrf.mxu0
  %2631 = vmatprep.mubr.bf16.mxu0 0
  %2632 = vmatmul.mubr.bf16.gmra.mxu0 %v1576
  %v2633 = vpop.f32.mrf.mxu0
  %v2634 = vadd.f32 %v2089, %v2633
  %v2635 = vpop.f32.mrf.mxu0
  %v2636 = vpop.f32.mrf.mxu0
  %v2637 = vadd.f32 %v2092, %v2636
  %v2638 = vpop.f32.mrf.mxu0
  %2639 = vmatprep.mubr.bf16.mxu0 0
  %2640 = vmatmul.mubr.bf16.gmra.mxu0 %v1579
  %v2641 = vpop.f32.mrf.mxu0
  %v2642 = vadd.f32 %v2097, %v2641
  %v2643 = vpop.f32.mrf.mxu0
  %v2644 = vpop.f32.mrf.mxu0
  %v2645 = vadd.f32 %v2100, %v2644
  %v2646 = vpop.f32.mrf.mxu0
  %2647 = vmatprep.mubr.bf16.mxu0 0
  %2648 = vmatmul.mubr.bf16.gmra.mxu0 %v1582
  %v2649 = vpop.f32.mrf.mxu0
  %v2650 = vadd.f32 %v2105, %v2649
  %v2651 = vpop.f32.mrf.mxu0
  %v2652 = vpop.f32.mrf.mxu0
  %v2653 = vadd.f32 %v2108, %v2652
  %v2654 = vpop.f32.mrf.mxu0
  %2655 = vmatprep.mubr.bf16.mxu0 0
  %2656 = vmatmul.mubr.bf16.gmra.mxu0 %v1585
  %v2657 = vpop.f32.mrf.mxu0
  %v2658 = vadd.f32 %v2113, %v2657
  %v2659 = vpop.f32.mrf.mxu0
  %v2660 = vpop.f32.mrf.mxu0
  %v2661 = vadd.f32 %v2116, %v2660
  %v2662 = vpop.f32.mrf.mxu0
  %2663 = vmatprep.mubr.bf16.mxu0 0
  %2664 = vmatmul.mubr.bf16.gmra.mxu0 %v1588
  %v2665 = vpop.f32.mrf.mxu0
  %v2666 = vadd.f32 %v2121, %v2665
  %v2667 = vpop.f32.mrf.mxu0
  %v2668 = vpop.f32.mrf.mxu0
  %v2669 = vadd.f32 %v2124, %v2668
  %v2670 = vpop.f32.mrf.mxu0
  %2671 = vmatprep.mubr.bf16.mxu0 0
  %2672 = vmatmul.mubr.bf16.gmra.mxu0 %v1591
  %v2673 = vpop.f32.mrf.mxu0
  %v2674 = vadd.f32 %v2129, %v2673
  %v2675 = vpop.f32.mrf.mxu0
  %v2676 = vpop.f32.mrf.mxu0
  %v2677 = vadd.f32 %v2132, %v2676
  %v2678 = vpop.f32.mrf.mxu0
  %2679 = vmatprep.mubr.bf16.mxu0 0
  %2680 = vmatmul.mubr.bf16.gmra.mxu0 %v1594
  %v2681 = vpop.f32.mrf.mxu0
  %v2682 = vadd.f32 %v2137, %v2681
  %v2683 = vpop.f32.mrf.mxu0
  %v2684 = vpop.f32.mrf.mxu0
  %v2685 = vadd.f32 %v2140, %v2684
  %v2686 = vpop.f32.mrf.mxu0
  %2687 = vmatprep.mubr.bf16.mxu0 0
  %2688 = vmatmul.mubr.bf16.gmra.mxu0 %v1597
  %v2689 = vpop.f32.mrf.mxu0
  %v2690 = vadd.f32 %v2145, %v2689
  %v2691 = vpop.f32.mrf.mxu0
  %v2692 = vpop.f32.mrf.mxu0
  %v2693 = vadd.f32 %v2148, %v2692
  %v2694 = vpop.f32.mrf.mxu0
  %2695 = vdwg.mxu0
  %v2696 = vld [vmem:[%s2] sm:$0x1]
  %v2698 = vlaneseq
  %v2699 = vshrl.u32 %v2698, 7
  %v2700 = vsub.s32 0, %v2699
  %v2701 = vrot.slane %v2696, %v2700
  %v2703 = vmul.f32 %v2186, %v2701
  %v2704 = vmul.f32 %v2189, %v2701
  %v2705 = vmul.f32 %v2194, %v2701
  %v2706 = vmul.f32 %v2197, %v2701
  %v2707 = vmul.f32 %v2202, %v2701
  %v2708 = vmul.f32 %v2205, %v2701
  %v2709 = vmul.f32 %v2210, %v2701
  %v2710 = vmul.f32 %v2213, %v2701
  %v2711 = vmul.f32 %v2218, %v2701
  %v2712 = vmul.f32 %v2221, %v2701
  %v2713 = vmul.f32 %v2226, %v2701
  %v2714 = vmul.f32 %v2229, %v2701
  %v2715 = vmul.f32 %v2234, %v2701
  %v2716 = vmul.f32 %v2237, %v2701
  %v2717 = vmul.f32 %v2242, %v2701
  %v2718 = vmul.f32 %v2245, %v2701
  %v2719 = vmul.f32 %v2250, %v2701
  %v2720 = vmul.f32 %v2253, %v2701
  %v2721 = vmul.f32 %v2258, %v2701
  %v2722 = vmul.f32 %v2261, %v2701
  %v2723 = vmul.f32 %v2266, %v2701
  %v2724 = vmul.f32 %v2269, %v2701
  %v2725 = vmul.f32 %v2274, %v2701
  %v2726 = vmul.f32 %v2277, %v2701
  %v2727 = vmul.f32 %v2282, %v2701
  %v2728 = vmul.f32 %v2285, %v2701
  %v2729 = vmul.f32 %v2290, %v2701
  %v2730 = vmul.f32 %v2293, %v2701
  %v2731 = vmul.f32 %v2298, %v2701
  %v2732 = vmul.f32 %v2301, %v2701
  %v2733 = vmul.f32 %v2306, %v2701
  %v2734 = vmul.f32 %v2309, %v2701
  %v2735 = vmul.f32 %v2314, %v2701
  %v2736 = vmul.f32 %v2317, %v2701
  %v2737 = vmul.f32 %v2322, %v2701
  %v2738 = vmul.f32 %v2325, %v2701
  %v2739 = vmul.f32 %v2330, %v2701
  %v2740 = vmul.f32 %v2333, %v2701
  %v2741 = vmul.f32 %v2338, %v2701
  %v2742 = vmul.f32 %v2341, %v2701
  %v2743 = vmul.f32 %v2346, %v2701
  %v2744 = vmul.f32 %v2349, %v2701
  %v2745 = vmul.f32 %v2354, %v2701
  %v2746 = vmul.f32 %v2357, %v2701
  %v2747 = vmul.f32 %v2362, %v2701
  %v2748 = vmul.f32 %v2365, %v2701
  %v2749 = vmul.f32 %v2370, %v2701
  %v2750 = vmul.f32 %v2373, %v2701
  %v2751 = vmul.f32 %v2378, %v2701
  %v2752 = vmul.f32 %v2381, %v2701
  %v2753 = vmul.f32 %v2386, %v2701
  %v2754 = vmul.f32 %v2389, %v2701
  %v2755 = vmul.f32 %v2394, %v2701
  %v2756 = vmul.f32 %v2397, %v2701
  %v2757 = vmul.f32 %v2402, %v2701
  %v2758 = vmul.f32 %v2405, %v2701
  %v2759 = vmul.f32 %v2410, %v2701
  %v2760 = vmul.f32 %v2413, %v2701
  %v2761 = vmul.f32 %v2418, %v2701
  %v2762 = vmul.f32 %v2421, %v2701
  %v2763 = vmul.f32 %v2426, %v2701
  %v2764 = vmul.f32 %v2429, %v2701
  %v2765 = vmul.f32 %v2434, %v2701
  %v2766 = vmul.f32 %v2437, %v2701
  %v2767 = vmul.f32 %v2442, %v2701
  %v2768 = vmul.f32 %v2445, %v2701
  %v2769 = vmul.f32 %v2450, %v2701
  %v2770 = vmul.f32 %v2453, %v2701
  %v2771 = vmul.f32 %v2458, %v2701
  %v2772 = vmul.f32 %v2461, %v2701
  %v2773 = vmul.f32 %v2466, %v2701
  %v2774 = vmul.f32 %v2469, %v2701
  %v2775 = vmul.f32 %v2474, %v2701
  %v2776 = vmul.f32 %v2477, %v2701
  %v2777 = vmul.f32 %v2482, %v2701
  %v2778 = vmul.f32 %v2485, %v2701
  %v2779 = vmul.f32 %v2490, %v2701
  %v2780 = vmul.f32 %v2493, %v2701
  %v2781 = vmul.f32 %v2498, %v2701
  %v2782 = vmul.f32 %v2501, %v2701
  %v2783 = vmul.f32 %v2506, %v2701
  %v2784 = vmul.f32 %v2509, %v2701
  %v2785 = vmul.f32 %v2514, %v2701
  %v2786 = vmul.f32 %v2517, %v2701
  %v2787 = vmul.f32 %v2522, %v2701
  %v2788 = vmul.f32 %v2525, %v2701
  %v2789 = vmul.f32 %v2530, %v2701
  %v2790 = vmul.f32 %v2533, %v2701
  %v2791 = vmul.f32 %v2538, %v2701
  %v2792 = vmul.f32 %v2541, %v2701
  %v2793 = vmul.f32 %v2546, %v2701
  %v2794 = vmul.f32 %v2549, %v2701
  %v2795 = vmul.f32 %v2554, %v2701
  %v2796 = vmul.f32 %v2557, %v2701
  %v2797 = vmul.f32 %v2562, %v2701
  %v2798 = vmul.f32 %v2565, %v2701
  %v2799 = vmul.f32 %v2570, %v2701
  %v2800 = vmul.f32 %v2573, %v2701
  %v2801 = vmul.f32 %v2578, %v2701
  %v2802 = vmul.f32 %v2581, %v2701
  %v2803 = vmul.f32 %v2586, %v2701
  %v2804 = vmul.f32 %v2589, %v2701
  %v2805 = vmul.f32 %v2594, %v2701
  %v2806 = vmul.f32 %v2597, %v2701
  %v2807 = vmul.f32 %v2602, %v2701
  %v2808 = vmul.f32 %v2605, %v2701
  %v2809 = vmul.f32 %v2610, %v2701
  %v2810 = vmul.f32 %v2613, %v2701
  %v2811 = vmul.f32 %v2618, %v2701
  %v2812 = vmul.f32 %v2621, %v2701
  %v2813 = vmul.f32 %v2626, %v2701
  %v2814 = vmul.f32 %v2629, %v2701
  %v2815 = vmul.f32 %v2634, %v2701
  %v2816 = vmul.f32 %v2637, %v2701
  %v2817 = vmul.f32 %v2642, %v2701
  %v2818 = vmul.f32 %v2645, %v2701
  %v2819 = vmul.f32 %v2650, %v2701
  %v2820 = vmul.f32 %v2653, %v2701
  %v2821 = vmul.f32 %v2658, %v2701
  %v2822 = vmul.f32 %v2661, %v2701
  %v2823 = vmul.f32 %v2666, %v2701
  %v2824 = vmul.f32 %v2669, %v2701
  %v2825 = vmul.f32 %v2674, %v2701
  %v2826 = vmul.f32 %v2677, %v2701
  %v2827 = vmul.f32 %v2682, %v2701
  %v2828 = vmul.f32 %v2685, %v2701
  %v2829 = vmul.f32 %v2690, %v2701
  %v2830 = vmul.f32 %v2693, %v2701
  %v2831 = vld [vmem:[%s3] sm:$0x1]
  %v2833 = vlaneseq
  %v2834 = vshrl.u32 %v2833, 7
  %v2835 = vsub.s32 0, %v2834
  %v2836 = vrot.slane %v2831, %v2835
  %v2838 = vadd.f32 %v2703, %v2836
  %v2839 = vadd.f32 %v2704, %v2836
  %v2840 = vadd.f32 %v2705, %v2836
  %v2841 = vadd.f32 %v2706, %v2836
  %v2842 = vadd.f32 %v2707, %v2836
  %v2843 = vadd.f32 %v2708, %v2836
  %v2844 = vadd.f32 %v2709, %v2836
  %v2845 = vadd.f32 %v2710, %v2836
  %v2846 = vadd.f32 %v2711, %v2836
  %v2847 = vadd.f32 %v2712, %v2836
  %v2848 = vadd.f32 %v2713, %v2836
  %v2849 = vadd.f32 %v2714, %v2836
  %v2850 = vadd.f32 %v2715, %v2836
  %v2851 = vadd.f32 %v2716, %v2836
  %v2852 = vadd.f32 %v2717, %v2836
  %v2853 = vadd.f32 %v2718, %v2836
  %v2854 = vadd.f32 %v2719, %v2836
  %v2855 = vadd.f32 %v2720, %v2836
  %v2856 = vadd.f32 %v2721, %v2836
  %v2857 = vadd.f32 %v2722, %v2836
  %v2858 = vadd.f32 %v2723, %v2836
  %v2859 = vadd.f32 %v2724, %v2836
  %v2860 = vadd.f32 %v2725, %v2836
  %v2861 = vadd.f32 %v2726, %v2836
  %v2862 = vadd.f32 %v2727, %v2836
  %v2863 = vadd.f32 %v2728, %v2836
  %v2864 = vadd.f32 %v2729, %v2836
  %v2865 = vadd.f32 %v2730, %v2836
  %v2866 = vadd.f32 %v2731, %v2836
  %v2867 = vadd.f32 %v2732, %v2836
  %v2868 = vadd.f32 %v2733, %v2836
  %v2869 = vadd.f32 %v2734, %v2836
  %v2870 = vadd.f32 %v2735, %v2836
  %v2871 = vadd.f32 %v2736, %v2836
  %v2872 = vadd.f32 %v2737, %v2836
  %v2873 = vadd.f32 %v2738, %v2836
  %v2874 = vadd.f32 %v2739, %v2836
  %v2875 = vadd.f32 %v2740, %v2836
  %v2876 = vadd.f32 %v2741, %v2836
  %v2877 = vadd.f32 %v2742, %v2836
  %v2878 = vadd.f32 %v2743, %v2836
  %v2879 = vadd.f32 %v2744, %v2836
  %v2880 = vadd.f32 %v2745, %v2836
  %v2881 = vadd.f32 %v2746, %v2836
  %v2882 = vadd.f32 %v2747, %v2836
  %v2883 = vadd.f32 %v2748, %v2836
  %v2884 = vadd.f32 %v2749, %v2836
  %v2885 = vadd.f32 %v2750, %v2836
  %v2886 = vadd.f32 %v2751, %v2836
  %v2887 = vadd.f32 %v2752, %v2836
  %v2888 = vadd.f32 %v2753, %v2836
  %v2889 = vadd.f32 %v2754, %v2836
  %v2890 = vadd.f32 %v2755, %v2836
  %v2891 = vadd.f32 %v2756, %v2836
  %v2892 = vadd.f32 %v2757, %v2836
  %v2893 = vadd.f32 %v2758, %v2836
  %v2894 = vadd.f32 %v2759, %v2836
  %v2895 = vadd.f32 %v2760, %v2836
  %v2896 = vadd.f32 %v2761, %v2836
  %v2897 = vadd.f32 %v2762, %v2836
  %v2898 = vadd.f32 %v2763, %v2836
  %v2899 = vadd.f32 %v2764, %v2836
  %v2900 = vadd.f32 %v2765, %v2836
  %v2901 = vadd.f32 %v2766, %v2836
  %v2902 = vadd.f32 %v2767, %v2836
  %v2903 = vadd.f32 %v2768, %v2836
  %v2904 = vadd.f32 %v2769, %v2836
  %v2905 = vadd.f32 %v2770, %v2836
  %v2906 = vadd.f32 %v2771, %v2836
  %v2907 = vadd.f32 %v2772, %v2836
  %v2908 = vadd.f32 %v2773, %v2836
  %v2909 = vadd.f32 %v2774, %v2836
  %v2910 = vadd.f32 %v2775, %v2836
  %v2911 = vadd.f32 %v2776, %v2836
  %v2912 = vadd.f32 %v2777, %v2836
  %v2913 = vadd.f32 %v2778, %v2836
  %v2914 = vadd.f32 %v2779, %v2836
  %v2915 = vadd.f32 %v2780, %v2836
  %v2916 = vadd.f32 %v2781, %v2836
  %v2917 = vadd.f32 %v2782, %v2836
  %v2918 = vadd.f32 %v2783, %v2836
  %v2919 = vadd.f32 %v2784, %v2836
  %v2920 = vadd.f32 %v2785, %v2836
  %v2921 = vadd.f32 %v2786, %v2836
  %v2922 = vadd.f32 %v2787, %v2836
  %v2923 = vadd.f32 %v2788, %v2836
  %v2924 = vadd.f32 %v2789, %v2836
  %v2925 = vadd.f32 %v2790, %v2836
  %v2926 = vadd.f32 %v2791, %v2836
  %v2927 = vadd.f32 %v2792, %v2836
  %v2928 = vadd.f32 %v2793, %v2836
  %v2929 = vadd.f32 %v2794, %v2836
  %v2930 = vadd.f32 %v2795, %v2836
  %v2931 = vadd.f32 %v2796, %v2836
  %v2932 = vadd.f32 %v2797, %v2836
  %v2933 = vadd.f32 %v2798, %v2836
  %v2934 = vadd.f32 %v2799, %v2836
  %v2935 = vadd.f32 %v2800, %v2836
  %v2936 = vadd.f32 %v2801, %v2836
  %v2937 = vadd.f32 %v2802, %v2836
  %v2938 = vadd.f32 %v2803, %v2836
  %v2939 = vadd.f32 %v2804, %v2836
  %v2940 = vadd.f32 %v2805, %v2836
  %v2941 = vadd.f32 %v2806, %v2836
  %v2942 = vadd.f32 %v2807, %v2836
  %v2943 = vadd.f32 %v2808, %v2836
  %v2944 = vadd.f32 %v2809, %v2836
  %v2945 = vadd.f32 %v2810, %v2836
  %v2946 = vadd.f32 %v2811, %v2836
  %v2947 = vadd.f32 %v2812, %v2836
  %v2948 = vadd.f32 %v2813, %v2836
  %v2949 = vadd.f32 %v2814, %v2836
  %v2950 = vadd.f32 %v2815, %v2836
  %v2951 = vadd.f32 %v2816, %v2836
  %v2952 = vadd.f32 %v2817, %v2836
  %v2953 = vadd.f32 %v2818, %v2836
  %v2954 = vadd.f32 %v2819, %v2836
  %v2955 = vadd.f32 %v2820, %v2836
  %v2956 = vadd.f32 %v2821, %v2836
  %v2957 = vadd.f32 %v2822, %v2836
  %v2958 = vadd.f32 %v2823, %v2836
  %v2959 = vadd.f32 %v2824, %v2836
  %v2960 = vadd.f32 %v2825, %v2836
  %v2961 = vadd.f32 %v2826, %v2836
  %v2962 = vadd.f32 %v2827, %v2836
  %v2963 = vadd.f32 %v2828, %v2836
  %v2964 = vadd.f32 %v2829, %v2836
  %v2965 = vadd.f32 %v2830, %v2836
  %v2966 = vmax.f32 %v2838, 0.0
  %v2967 = vmax.f32 %v2839, 0.0
  %v2968 = vmax.f32 %v2840, 0.0
  %v2969 = vmax.f32 %v2841, 0.0
  %v2970 = vmax.f32 %v2842, 0.0
  %v2971 = vmax.f32 %v2843, 0.0
  %v2972 = vmax.f32 %v2844, 0.0
  %v2973 = vmax.f32 %v2845, 0.0
  %v2974 = vmax.f32 %v2846, 0.0
  %v2975 = vmax.f32 %v2847, 0.0
  %v2976 = vmax.f32 %v2848, 0.0
  %v2977 = vmax.f32 %v2849, 0.0
  %v2978 = vmax.f32 %v2850, 0.0
  %v2979 = vmax.f32 %v2851, 0.0
  %v2980 = vmax.f32 %v2852, 0.0
  %v2981 = vmax.f32 %v2853, 0.0
  %v2982 = vmax.f32 %v2854, 0.0
  %v2983 = vmax.f32 %v2855, 0.0
  %v2984 = vmax.f32 %v2856, 0.0
  %v2985 = vmax.f32 %v2857, 0.0
  %v2986 = vmax.f32 %v2858, 0.0
  %v2987 = vmax.f32 %v2859, 0.0
  %v2988 = vmax.f32 %v2860, 0.0
  %v2989 = vmax.f32 %v2861, 0.0
  %v2990 = vmax.f32 %v2862, 0.0
  %v2991 = vmax.f32 %v2863, 0.0
  %v2992 = vmax.f32 %v2864, 0.0
  %v2993 = vmax.f32 %v2865, 0.0
  %v2994 = vmax.f32 %v2866, 0.0
  %v2995 = vmax.f32 %v2867, 0.0
  %v2996 = vmax.f32 %v2868, 0.0
  %v2997 = vmax.f32 %v2869, 0.0
  %v2998 = vmax.f32 %v2870, 0.0
  %v2999 = vmax.f32 %v2871, 0.0
  %v3000 = vmax.f32 %v2872, 0.0
  %v3001 = vmax.f32 %v2873, 0.0
  %v3002 = vmax.f32 %v2874, 0.0
  %v3003 = vmax.f32 %v2875, 0.0
  %v3004 = vmax.f32 %v2876, 0.0
  %v3005 = vmax.f32 %v2877, 0.0
  %v3006 = vmax.f32 %v2878, 0.0
  %v3007 = vmax.f32 %v2879, 0.0
  %v3008 = vmax.f32 %v2880, 0.0
  %v3009 = vmax.f32 %v2881, 0.0
  %v3010 = vmax.f32 %v2882, 0.0
  %v3011 = vmax.f32 %v2883, 0.0
  %v3012 = vmax.f32 %v2884, 0.0
  %v3013 = vmax.f32 %v2885, 0.0
  %v3014 = vmax.f32 %v2886, 0.0
  %v3015 = vmax.f32 %v2887, 0.0
  %v3016 = vmax.f32 %v2888, 0.0
  %v3017 = vmax.f32 %v2889, 0.0
  %v3018 = vmax.f32 %v2890, 0.0
  %v3019 = vmax.f32 %v2891, 0.0
  %v3020 = vmax.f32 %v2892, 0.0
  %v3021 = vmax.f32 %v2893, 0.0
  %v3022 = vmax.f32 %v2894, 0.0
  %v3023 = vmax.f32 %v2895, 0.0
  %v3024 = vmax.f32 %v2896, 0.0
  %v3025 = vmax.f32 %v2897, 0.0
  %v3026 = vmax.f32 %v2898, 0.0
  %v3027 = vmax.f32 %v2899, 0.0
  %v3028 = vmax.f32 %v2900, 0.0
  %v3029 = vmax.f32 %v2901, 0.0
  %v3030 = vmax.f32 %v2902, 0.0
  %v3031 = vmax.f32 %v2903, 0.0
  %v3032 = vmax.f32 %v2904, 0.0
  %v3033 = vmax.f32 %v2905, 0.0
  %v3034 = vmax.f32 %v2906, 0.0
  %v3035 = vmax.f32 %v2907, 0.0
  %v3036 = vmax.f32 %v2908, 0.0
  %v3037 = vmax.f32 %v2909, 0.0
  %v3038 = vmax.f32 %v2910, 0.0
  %v3039 = vmax.f32 %v2911, 0.0
  %v3040 = vmax.f32 %v2912, 0.0
  %v3041 = vmax.f32 %v2913, 0.0
  %v3042 = vmax.f32 %v2914, 0.0
  %v3043 = vmax.f32 %v2915, 0.0
  %v3044 = vmax.f32 %v2916, 0.0
  %v3045 = vmax.f32 %v2917, 0.0
  %v3046 = vmax.f32 %v2918, 0.0
  %v3047 = vmax.f32 %v2919, 0.0
  %v3048 = vmax.f32 %v2920, 0.0
  %v3049 = vmax.f32 %v2921, 0.0
  %v3050 = vmax.f32 %v2922, 0.0
  %v3051 = vmax.f32 %v2923, 0.0
  %v3052 = vmax.f32 %v2924, 0.0
  %v3053 = vmax.f32 %v2925, 0.0
  %v3054 = vmax.f32 %v2926, 0.0
  %v3055 = vmax.f32 %v2927, 0.0
  %v3056 = vmax.f32 %v2928, 0.0
  %v3057 = vmax.f32 %v2929, 0.0
  %v3058 = vmax.f32 %v2930, 0.0
  %v3059 = vmax.f32 %v2931, 0.0
  %v3060 = vmax.f32 %v2932, 0.0
  %v3061 = vmax.f32 %v2933, 0.0
  %v3062 = vmax.f32 %v2934, 0.0
  %v3063 = vmax.f32 %v2935, 0.0
  %v3064 = vmax.f32 %v2936, 0.0
  %v3065 = vmax.f32 %v2937, 0.0
  %v3066 = vmax.f32 %v2938, 0.0
  %v3067 = vmax.f32 %v2939, 0.0
  %v3068 = vmax.f32 %v2940, 0.0
  %v3069 = vmax.f32 %v2941, 0.0
  %v3070 = vmax.f32 %v2942, 0.0
  %v3071 = vmax.f32 %v2943, 0.0
  %v3072 = vmax.f32 %v2944, 0.0
  %v3073 = vmax.f32 %v2945, 0.0
  %v3074 = vmax.f32 %v2946, 0.0
  %v3075 = vmax.f32 %v2947, 0.0
  %v3076 = vmax.f32 %v2948, 0.0
  %v3077 = vmax.f32 %v2949, 0.0
  %v3078 = vmax.f32 %v2950, 0.0
  %v3079 = vmax.f32 %v2951, 0.0
  %v3080 = vmax.f32 %v2952, 0.0
  %v3081 = vmax.f32 %v2953, 0.0
  %v3082 = vmax.f32 %v2954, 0.0
  %v3083 = vmax.f32 %v2955, 0.0
  %v3084 = vmax.f32 %v2956, 0.0
  %v3085 = vmax.f32 %v2957, 0.0
  %v3086 = vmax.f32 %v2958, 0.0
  %v3087 = vmax.f32 %v2959, 0.0
  %v3088 = vmax.f32 %v2960, 0.0
  %v3089 = vmax.f32 %v2961, 0.0
  %v3090 = vmax.f32 %v2962, 0.0
  %v3091 = vmax.f32 %v2963, 0.0
  %v3092 = vmax.f32 %v2964, 0.0
  %v3093 = vmax.f32 %v2965, 0.0
  %v3094 = vpack.c.bf16 %v2967, %v2966
  %v3095 = vpack.c.bf16 %v2969, %v2968
  %v3096 = vpack.c.bf16 %v2971, %v2970
  %v3097 = vpack.c.bf16 %v2973, %v2972
  %v3098 = vpack.c.bf16 %v2975, %v2974
  %v3099 = vpack.c.bf16 %v2977, %v2976
  %v3100 = vpack.c.bf16 %v2979, %v2978
  %v3101 = vpack.c.bf16 %v2981, %v2980
  %v3102 = vpack.c.bf16 %v2983, %v2982
  %v3103 = vpack.c.bf16 %v2985, %v2984
  %v3104 = vpack.c.bf16 %v2987, %v2986
  %v3105 = vpack.c.bf16 %v2989, %v2988
  %v3106 = vpack.c.bf16 %v2991, %v2990
  %v3107 = vpack.c.bf16 %v2993, %v2992
  %v3108 = vpack.c.bf16 %v2995, %v2994
  %v3109 = vpack.c.bf16 %v2997, %v2996
  %v3110 = vpack.c.bf16 %v2999, %v2998
  %v3111 = vpack.c.bf16 %v3001, %v3000
  %v3112 = vpack.c.bf16 %v3003, %v3002
  %v3113 = vpack.c.bf16 %v3005, %v3004
  %v3114 = vpack.c.bf16 %v3007, %v3006
  %v3115 = vpack.c.bf16 %v3009, %v3008
  %v3116 = vpack.c.bf16 %v3011, %v3010
  %v3117 = vpack.c.bf16 %v3013, %v3012
  %v3118 = vpack.c.bf16 %v3015, %v3014
  %v3119 = vpack.c.bf16 %v3017, %v3016
  %v3120 = vpack.c.bf16 %v3019, %v3018
  %v3121 = vpack.c.bf16 %v3021, %v3020
  %v3122 = vpack.c.bf16 %v3023, %v3022
  %v3123 = vpack.c.bf16 %v3025, %v3024
  %v3124 = vpack.c.bf16 %v3027, %v3026
  %v3125 = vpack.c.bf16 %v3029, %v3028
  %v3126 = vpack.c.bf16 %v3031, %v3030
  %v3127 = vpack.c.bf16 %v3033, %v3032
  %v3128 = vpack.c.bf16 %v3035, %v3034
  %v3129 = vpack.c.bf16 %v3037, %v3036
  %v3130 = vpack.c.bf16 %v3039, %v3038
  %v3131 = vpack.c.bf16 %v3041, %v3040
  %v3132 = vpack.c.bf16 %v3043, %v3042
  %v3133 = vpack.c.bf16 %v3045, %v3044
  %v3134 = vpack.c.bf16 %v3047, %v3046
  %v3135 = vpack.c.bf16 %v3049, %v3048
  %v3136 = vpack.c.bf16 %v3051, %v3050
  %v3137 = vpack.c.bf16 %v3053, %v3052
  %v3138 = vpack.c.bf16 %v3055, %v3054
  %v3139 = vpack.c.bf16 %v3057, %v3056
  %v3140 = vpack.c.bf16 %v3059, %v3058
  %v3141 = vpack.c.bf16 %v3061, %v3060
  %v3142 = vpack.c.bf16 %v3063, %v3062
  %v3143 = vpack.c.bf16 %v3065, %v3064
  %v3144 = vpack.c.bf16 %v3067, %v3066
  %v3145 = vpack.c.bf16 %v3069, %v3068
  %v3146 = vpack.c.bf16 %v3071, %v3070
  %v3147 = vpack.c.bf16 %v3073, %v3072
  %v3148 = vpack.c.bf16 %v3075, %v3074
  %v3149 = vpack.c.bf16 %v3077, %v3076
  %v3150 = vpack.c.bf16 %v3079, %v3078
  %v3151 = vpack.c.bf16 %v3081, %v3080
  %v3152 = vpack.c.bf16 %v3083, %v3082
  %v3153 = vpack.c.bf16 %v3085, %v3084
  %v3154 = vpack.c.bf16 %v3087, %v3086
  %v3155 = vpack.c.bf16 %v3089, %v3088
  %v3156 = vpack.c.bf16 %v3091, %v3090
  %v3157 = vpack.c.bf16 %v3093, %v3092
  %v3222 = vunpack.c.l.b16 %v3094
  %v3223 = vunpack.c.h.b16 %v3094
  %v3224 = vunpack.c.l.b16 %v3095
  %v3225 = vunpack.c.h.b16 %v3095
  %v3226 = vunpack.c.l.b16 %v3096
  %v3227 = vunpack.c.h.b16 %v3096
  %v3228 = vunpack.c.l.b16 %v3097
  %v3229 = vunpack.c.h.b16 %v3097
  %v3230 = vunpack.c.l.b16 %v3098
  %v3231 = vunpack.c.h.b16 %v3098
  %v3232 = vunpack.c.l.b16 %v3099
  %v3233 = vunpack.c.h.b16 %v3099
  %v3234 = vunpack.c.l.b16 %v3100
  %v3235 = vunpack.c.h.b16 %v3100
  %v3236 = vunpack.c.l.b16 %v3101
  %v3237 = vunpack.c.h.b16 %v3101
  %v3238 = vunpack.c.l.b16 %v3102
  %v3239 = vunpack.c.h.b16 %v3102
  %v3240 = vunpack.c.l.b16 %v3103
  %v3241 = vunpack.c.h.b16 %v3103
  %v3242 = vunpack.c.l.b16 %v3104
  %v3243 = vunpack.c.h.b16 %v3104
  %v3244 = vunpack.c.l.b16 %v3105
  %v3245 = vunpack.c.h.b16 %v3105
  %v3246 = vunpack.c.l.b16 %v3106
  %v3247 = vunpack.c.h.b16 %v3106
  %v3248 = vunpack.c.l.b16 %v3107
  %v3249 = vunpack.c.h.b16 %v3107
  %v3250 = vunpack.c.l.b16 %v3108
  %v3251 = vunpack.c.h.b16 %v3108
  %v3252 = vunpack.c.l.b16 %v3109
  %v3253 = vunpack.c.h.b16 %v3109
  %v3254 = vunpack.c.l.b16 %v3110
  %v3255 = vunpack.c.h.b16 %v3110
  %v3256 = vunpack.c.l.b16 %v3111
  %v3257 = vunpack.c.h.b16 %v3111
  %v3258 = vunpack.c.l.b16 %v3112
  %v3259 = vunpack.c.h.b16 %v3112
  %v3260 = vunpack.c.l.b16 %v3113
  %v3261 = vunpack.c.h.b16 %v3113
  %v3262 = vunpack.c.l.b16 %v3114
  %v3263 = vunpack.c.h.b16 %v3114
  %v3264 = vunpack.c.l.b16 %v3115
  %v3265 = vunpack.c.h.b16 %v3115
  %v3266 = vunpack.c.l.b16 %v3116
  %v3267 = vunpack.c.h.b16 %v3116
  %v3268 = vunpack.c.l.b16 %v3117
  %v3269 = vunpack.c.h.b16 %v3117
  %v3270 = vunpack.c.l.b16 %v3118
  %v3271 = vunpack.c.h.b16 %v3118
  %v3272 = vunpack.c.l.b16 %v3119
  %v3273 = vunpack.c.h.b16 %v3119
  %v3274 = vunpack.c.l.b16 %v3120
  %v3275 = vunpack.c.h.b16 %v3120
  %v3276 = vunpack.c.l.b16 %v3121
  %v3277 = vunpack.c.h.b16 %v3121
  %v3278 = vunpack.c.l.b16 %v3122
  %v3279 = vunpack.c.h.b16 %v3122
  %v3280 = vunpack.c.l.b16 %v3123
  %v3281 = vunpack.c.h.b16 %v3123
  %v3282 = vunpack.c.l.b16 %v3124
  %v3283 = vunpack.c.h.b16 %v3124
  %v3284 = vunpack.c.l.b16 %v3125
  %v3285 = vunpack.c.h.b16 %v3125
  %v3286 = vunpack.c.l.b16 %v3126
  %v3287 = vunpack.c.h.b16 %v3126
  %v3288 = vunpack.c.l.b16 %v3127
  %v3289 = vunpack.c.h.b16 %v3127
  %v3290 = vunpack.c.l.b16 %v3128
  %v3291 = vunpack.c.h.b16 %v3128
  %v3292 = vunpack.c.l.b16 %v3129
  %v3293 = vunpack.c.h.b16 %v3129
  %v3294 = vunpack.c.l.b16 %v3130
  %v3295 = vunpack.c.h.b16 %v3130
  %v3296 = vunpack.c.l.b16 %v3131
  %v3297 = vunpack.c.h.b16 %v3131
  %v3298 = vunpack.c.l.b16 %v3132
  %v3299 = vunpack.c.h.b16 %v3132
  %v3300 = vunpack.c.l.b16 %v3133
  %v3301 = vunpack.c.h.b16 %v3133
  %v3302 = vunpack.c.l.b16 %v3134
  %v3303 = vunpack.c.h.b16 %v3134
  %v3304 = vunpack.c.l.b16 %v3135
  %v3305 = vunpack.c.h.b16 %v3135
  %v3306 = vunpack.c.l.b16 %v3136
  %v3307 = vunpack.c.h.b16 %v3136
  %v3308 = vunpack.c.l.b16 %v3137
  %v3309 = vunpack.c.h.b16 %v3137
  %v3310 = vunpack.c.l.b16 %v3138
  %v3311 = vunpack.c.h.b16 %v3138
  %v3312 = vunpack.c.l.b16 %v3139
  %v3313 = vunpack.c.h.b16 %v3139
  %v3314 = vunpack.c.l.b16 %v3140
  %v3315 = vunpack.c.h.b16 %v3140
  %v3316 = vunpack.c.l.b16 %v3141
  %v3317 = vunpack.c.h.b16 %v3141
  %v3318 = vunpack.c.l.b16 %v3142
  %v3319 = vunpack.c.h.b16 %v3142
  %v3320 = vunpack.c.l.b16 %v3143
  %v3321 = vunpack.c.h.b16 %v3143
  %v3322 = vunpack.c.l.b16 %v3144
  %v3323 = vunpack.c.h.b16 %v3144
  %v3324 = vunpack.c.l.b16 %v3145
  %v3325 = vunpack.c.h.b16 %v3145
  %v3326 = vunpack.c.l.b16 %v3146
  %v3327 = vunpack.c.h.b16 %v3146
  %v3328 = vunpack.c.l.b16 %v3147
  %v3329 = vunpack.c.h.b16 %v3147
  %v3330 = vunpack.c.l.b16 %v3148
  %v3331 = vunpack.c.h.b16 %v3148
  %v3332 = vunpack.c.l.b16 %v3149
  %v3333 = vunpack.c.h.b16 %v3149
  %v3334 = vunpack.c.l.b16 %v3150
  %v3335 = vunpack.c.h.b16 %v3150
  %v3336 = vunpack.c.l.b16 %v3151
  %v3337 = vunpack.c.h.b16 %v3151
  %v3338 = vunpack.c.l.b16 %v3152
  %v3339 = vunpack.c.h.b16 %v3152
  %v3340 = vunpack.c.l.b16 %v3153
  %v3341 = vunpack.c.h.b16 %v3153
  %v3342 = vunpack.c.l.b16 %v3154
  %v3343 = vunpack.c.h.b16 %v3154
  %v3344 = vunpack.c.l.b16 %v3155
  %v3345 = vunpack.c.h.b16 %v3155
  %v3346 = vunpack.c.l.b16 %v3156
  %v3347 = vunpack.c.h.b16 %v3156
  %v3348 = vunpack.c.l.b16 %v3157
  %v3349 = vunpack.c.h.b16 %v3157
  %v3350 = vpack.c.b16 %v3222, %v3222
  %v3351 = vpack.c.b16 %v3223, %v3223
  %v3352 = vpack.c.b16 %v3224, %v3224
  %v3353 = vpack.c.b16 %v3225, %v3225
  %v3354 = vpack.c.b16 %v3226, %v3226
  %v3355 = vpack.c.b16 %v3227, %v3227
  %v3356 = vpack.c.b16 %v3228, %v3228
  %v3357 = vpack.c.b16 %v3229, %v3229
  %v3358 = vpack.c.b16 %v3230, %v3230
  %v3359 = vpack.c.b16 %v3231, %v3231
  %v3360 = vpack.c.b16 %v3232, %v3232
  %v3361 = vpack.c.b16 %v3233, %v3233
  %v3362 = vpack.c.b16 %v3234, %v3234
  %v3363 = vpack.c.b16 %v3235, %v3235
  %v3364 = vpack.c.b16 %v3236, %v3236
  %v3365 = vpack.c.b16 %v3237, %v3237
  %v3366 = vpack.c.b16 %v3238, %v3238
  %v3367 = vpack.c.b16 %v3239, %v3239
  %v3368 = vpack.c.b16 %v3240, %v3240
  %v3369 = vpack.c.b16 %v3241, %v3241
  %v3370 = vpack.c.b16 %v3242, %v3242
  %v3371 = vpack.c.b16 %v3243, %v3243
  %v3372 = vpack.c.b16 %v3244, %v3244
  %v3373 = vpack.c.b16 %v3245, %v3245
  %v3374 = vpack.c.b16 %v3246, %v3246
  %v3375 = vpack.c.b16 %v3247, %v3247
  %v3376 = vpack.c.b16 %v3248, %v3248
  %v3377 = vpack.c.b16 %v3249, %v3249
  %v3378 = vpack.c.b16 %v3250, %v3250
  %v3379 = vpack.c.b16 %v3251, %v3251
  %v3380 = vpack.c.b16 %v3252, %v3252
  %v3381 = vpack.c.b16 %v3253, %v3253
  %v3382 = vpack.c.b16 %v3254, %v3254
  %v3383 = vpack.c.b16 %v3255, %v3255
  %v3384 = vpack.c.b16 %v3256, %v3256
  %v3385 = vpack.c.b16 %v3257, %v3257
  %v3386 = vpack.c.b16 %v3258, %v3258
  %v3387 = vpack.c.b16 %v3259, %v3259
  %v3388 = vpack.c.b16 %v3260, %v3260
  %v3389 = vpack.c.b16 %v3261, %v3261
  %v3390 = vpack.c.b16 %v3262, %v3262
  %v3391 = vpack.c.b16 %v3263, %v3263
  %v3392 = vpack.c.b16 %v3264, %v3264
  %v3393 = vpack.c.b16 %v3265, %v3265
  %v3394 = vpack.c.b16 %v3266, %v3266
  %v3395 = vpack.c.b16 %v3267, %v3267
  %v3396 = vpack.c.b16 %v3268, %v3268
  %v3397 = vpack.c.b16 %v3269, %v3269
  %v3398 = vpack.c.b16 %v3270, %v3270
  %v3399 = vpack.c.b16 %v3271, %v3271
  %v3400 = vpack.c.b16 %v3272, %v3272
  %v3401 = vpack.c.b16 %v3273, %v3273
  %v3402 = vpack.c.b16 %v3274, %v3274
  %v3403 = vpack.c.b16 %v3275, %v3275
  %v3404 = vpack.c.b16 %v3276, %v3276
  %v3405 = vpack.c.b16 %v3277, %v3277
  %v3406 = vpack.c.b16 %v3278, %v3278
  %v3407 = vpack.c.b16 %v3279, %v3279
  %v3408 = vpack.c.b16 %v3280, %v3280
  %v3409 = vpack.c.b16 %v3281, %v3281
  %v3410 = vpack.c.b16 %v3282, %v3282
  %v3411 = vpack.c.b16 %v3283, %v3283
  %v3412 = vpack.c.b16 %v3284, %v3284
  %v3413 = vpack.c.b16 %v3285, %v3285
  %v3414 = vpack.c.b16 %v3286, %v3286
  %v3415 = vpack.c.b16 %v3287, %v3287
  %v3416 = vpack.c.b16 %v3288, %v3288
  %v3417 = vpack.c.b16 %v3289, %v3289
  %v3418 = vpack.c.b16 %v3290, %v3290
  %v3419 = vpack.c.b16 %v3291, %v3291
  %v3420 = vpack.c.b16 %v3292, %v3292
  %v3421 = vpack.c.b16 %v3293, %v3293
  %v3422 = vpack.c.b16 %v3294, %v3294
  %v3423 = vpack.c.b16 %v3295, %v3295
  %v3424 = vpack.c.b16 %v3296, %v3296
  %v3425 = vpack.c.b16 %v3297, %v3297
  %v3426 = vpack.c.b16 %v3298, %v3298
  %v3427 = vpack.c.b16 %v3299, %v3299
  %v3428 = vpack.c.b16 %v3300, %v3300
  %v3429 = vpack.c.b16 %v3301, %v3301
  %v3430 = vpack.c.b16 %v3302, %v3302
  %v3431 = vpack.c.b16 %v3303, %v3303
  %v3432 = vpack.c.b16 %v3304, %v3304
  %v3433 = vpack.c.b16 %v3305, %v3305
  %v3434 = vpack.c.b16 %v3306, %v3306
  %v3435 = vpack.c.b16 %v3307, %v3307
  %v3436 = vpack.c.b16 %v3308, %v3308
  %v3437 = vpack.c.b16 %v3309, %v3309
  %v3438 = vpack.c.b16 %v3310, %v3310
  %v3439 = vpack.c.b16 %v3311, %v3311
  %v3440 = vpack.c.b16 %v3312, %v3312
  %v3441 = vpack.c.b16 %v3313, %v3313
  %v3442 = vpack.c.b16 %v3314, %v3314
  %v3443 = vpack.c.b16 %v3315, %v3315
  %v3444 = vpack.c.b16 %v3316, %v3316
  %v3445 = vpack.c.b16 %v3317, %v3317
  %v3446 = vpack.c.b16 %v3318, %v3318
  %v3447 = vpack.c.b16 %v3319, %v3319
  %v3448 = vpack.c.b16 %v3320, %v3320
  %v3449 = vpack.c.b16 %v3321, %v3321
  %v3450 = vpack.c.b16 %v3322, %v3322
  %v3451 = vpack.c.b16 %v3323, %v3323
  %v3452 = vpack.c.b16 %v3324, %v3324
  %v3453 = vpack.c.b16 %v3325, %v3325
  %v3454 = vpack.c.b16 %v3326, %v3326
  %v3455 = vpack.c.b16 %v3327, %v3327
  %v3456 = vpack.c.b16 %v3328, %v3328
  %v3457 = vpack.c.b16 %v3329, %v3329
  %v3458 = vpack.c.b16 %v3330, %v3330
  %v3459 = vpack.c.b16 %v3331, %v3331
  %v3460 = vpack.c.b16 %v3332, %v3332
  %v3461 = vpack.c.b16 %v3333, %v3333
  %v3462 = vpack.c.b16 %v3334, %v3334
  %v3463 = vpack.c.b16 %v3335, %v3335
  %v3464 = vpack.c.b16 %v3336, %v3336
  %v3465 = vpack.c.b16 %v3337, %v3337
  %v3466 = vpack.c.b16 %v3338, %v3338
  %v3467 = vpack.c.b16 %v3339, %v3339
  %v3468 = vpack.c.b16 %v3340, %v3340
  %v3469 = vpack.c.b16 %v3341, %v3341
  %v3470 = vpack.c.b16 %v3342, %v3342
  %v3471 = vpack.c.b16 %v3343, %v3343
  %v3472 = vpack.c.b16 %v3344, %v3344
  %v3473 = vpack.c.b16 %v3345, %v3345
  %v3474 = vpack.c.b16 %v3346, %v3346
  %v3475 = vpack.c.b16 %v3347, %v3347
  %v3476 = vpack.c.b16 %v3348, %v3348
  %v3477 = vpack.c.b16 %v3349, %v3349
  %vm3606 = vcmask 519168
  %3607 = vst.msk [vmem:[%s4] sm:$0xf] %vm3606, %v3350
  %3608 = vst.msk [vmem:[%s4 + $0x4] sm:$0xf] %vm3606, %v3351
  %3609 = vst.msk [vmem:[%s4 + $0x8] sm:$0xf] %vm3606, %v3352
  %3610 = vst.msk [vmem:[%s4 + $0xc] sm:$0xf] %vm3606, %v3353
  %3611 = vst.msk [vmem:[%s4 + $0x10] sm:$0xf] %vm3606, %v3354
  %3612 = vst.msk [vmem:[%s4 + $0x14] sm:$0xf] %vm3606, %v3355
  %3613 = vst.msk [vmem:[%s4 + $0x18] sm:$0xf] %vm3606, %v3356
  %3614 = vst.msk [vmem:[%s4 + $0x1c] sm:$0xf] %vm3606, %v3357
  %3615 = vst.msk [vmem:[%s4 + $0x20] sm:$0xf] %vm3606, %v3358
  %3616 = vst.msk [vmem:[%s4 + $0x24] sm:$0xf] %vm3606, %v3359
  %3617 = vst.msk [vmem:[%s4 + $0x28] sm:$0xf] %vm3606, %v3360
  %3618 = vst.msk [vmem:[%s4 + $0x2c] sm:$0xf] %vm3606, %v3361
  %3619 = vst.msk [vmem:[%s4 + $0x30] sm:$0xf] %vm3606, %v3362
  %3620 = vst.msk [vmem:[%s4 + $0x34] sm:$0xf] %vm3606, %v3363
  %3621 = vst.msk [vmem:[%s4 + $0x38] sm:$0xf] %vm3606, %v3364
  %3622 = vst.msk [vmem:[%s4 + $0x3c] sm:$0xf] %vm3606, %v3365
  %3623 = vst.msk [vmem:[%s4 + $0x40] sm:$0xf] %vm3606, %v3366
  %3624 = vst.msk [vmem:[%s4 + $0x44] sm:$0xf] %vm3606, %v3367
  %3625 = vst.msk [vmem:[%s4 + $0x48] sm:$0xf] %vm3606, %v3368
  %3626 = vst.msk [vmem:[%s4 + $0x4c] sm:$0xf] %vm3606, %v3369
  %3627 = vst.msk [vmem:[%s4 + $0x50] sm:$0xf] %vm3606, %v3370
  %3628 = vst.msk [vmem:[%s4 + $0x54] sm:$0xf] %vm3606, %v3371
  %3629 = vst.msk [vmem:[%s4 + $0x58] sm:$0xf] %vm3606, %v3372
  %3630 = vst.msk [vmem:[%s4 + $0x5c] sm:$0xf] %vm3606, %v3373
  %3631 = vst.msk [vmem:[%s4 + $0x60] sm:$0xf] %vm3606, %v3374
  %3632 = vst.msk [vmem:[%s4 + $0x64] sm:$0xf] %vm3606, %v3375
  %3633 = vst.msk [vmem:[%s4 + $0x68] sm:$0xf] %vm3606, %v3376
  %3634 = vst.msk [vmem:[%s4 + $0x6c] sm:$0xf] %vm3606, %v3377
  %3635 = vst.msk [vmem:[%s4 + $0x70] sm:$0xf] %vm3606, %v3378
  %3636 = vst.msk [vmem:[%s4 + $0x74] sm:$0xf] %vm3606, %v3379
  %3637 = vst.msk [vmem:[%s4 + $0x78] sm:$0xf] %vm3606, %v3380
  %3638 = vst.msk [vmem:[%s4 + $0x7c] sm:$0xf] %vm3606, %v3381
  %3639 = vst.msk [vmem:[%s4 + $0x80] sm:$0xf] %vm3606, %v3382
  %3640 = vst.msk [vmem:[%s4 + $0x84] sm:$0xf] %vm3606, %v3383
  %3641 = vst.msk [vmem:[%s4 + $0x88] sm:$0xf] %vm3606, %v3384
  %3642 = vst.msk [vmem:[%s4 + $0x8c] sm:$0xf] %vm3606, %v3385
  %3643 = vst.msk [vmem:[%s4 + $0x90] sm:$0xf] %vm3606, %v3386
  %3644 = vst.msk [vmem:[%s4 + $0x94] sm:$0xf] %vm3606, %v3387
  %3645 = vst.msk [vmem:[%s4 + $0x98] sm:$0xf] %vm3606, %v3388
  %3646 = vst.msk [vmem:[%s4 + $0x9c] sm:$0xf] %vm3606, %v3389
  %3647 = vst.msk [vmem:[%s4 + $0xa0] sm:$0xf] %vm3606, %v3390
  %3648 = vst.msk [vmem:[%s4 + $0xa4] sm:$0xf] %vm3606, %v3391
  %3649 = vst.msk [vmem:[%s4 + $0xa8] sm:$0xf] %vm3606, %v3392
  %3650 = vst.msk [vmem:[%s4 + $0xac] sm:$0xf] %vm3606, %v3393
  %3651 = vst.msk [vmem:[%s4 + $0xb0] sm:$0xf] %vm3606, %v3394
  %3652 = vst.msk [vmem:[%s4 + $0xb4] sm:$0xf] %vm3606, %v3395
  %3653 = vst.msk [vmem:[%s4 + $0xb8] sm:$0xf] %vm3606, %v3396
  %3654 = vst.msk [vmem:[%s4 + $0xbc] sm:$0xf] %vm3606, %v3397
  %3655 = vst.msk [vmem:[%s4 + $0xc0] sm:$0xf] %vm3606, %v3398
  %3656 = vst.msk [vmem:[%s4 + $0xc4] sm:$0xf] %vm3606, %v3399
  %3657 = vst.msk [vmem:[%s4 + $0xc8] sm:$0xf] %vm3606, %v3400
  %3658 = vst.msk [vmem:[%s4 + $0xcc] sm:$0xf] %vm3606, %v3401
  %3659 = vst.msk [vmem:[%s4 + $0xd0] sm:$0xf] %vm3606, %v3402
  %3660 = vst.msk [vmem:[%s4 + $0xd4] sm:$0xf] %vm3606, %v3403
  %3661 = vst.msk [vmem:[%s4 + $0xd8] sm:$0xf] %vm3606, %v3404
  %3662 = vst.msk [vmem:[%s4 + $0xdc] sm:$0xf] %vm3606, %v3405
  %3663 = vst.msk [vmem:[%s4 + $0xe0] sm:$0xf] %vm3606, %v3406
  %3664 = vst.msk [vmem:[%s4 + $0xe4] sm:$0xf] %vm3606, %v3407
  %3665 = vst.msk [vmem:[%s4 + $0xe8] sm:$0xf] %vm3606, %v3408
  %3666 = vst.msk [vmem:[%s4 + $0xec] sm:$0xf] %vm3606, %v3409
  %3667 = vst.msk [vmem:[%s4 + $0xf0] sm:$0xf] %vm3606, %v3410
  %3668 = vst.msk [vmem:[%s4 + $0xf4] sm:$0xf] %vm3606, %v3411
  %3669 = vst.msk [vmem:[%s4 + $0xf8] sm:$0xf] %vm3606, %v3412
  %3670 = vst.msk [vmem:[%s4 + $0xfc] sm:$0xf] %vm3606, %v3413
  %3671 = vst.msk [vmem:[%s4 + $0x100] sm:$0xf] %vm3606, %v3414
  %3672 = vst.msk [vmem:[%s4 + $0x104] sm:$0xf] %vm3606, %v3415
  %3673 = vst.msk [vmem:[%s4 + $0x108] sm:$0xf] %vm3606, %v3416
  %3674 = vst.msk [vmem:[%s4 + $0x10c] sm:$0xf] %vm3606, %v3417
  %3675 = vst.msk [vmem:[%s4 + $0x110] sm:$0xf] %vm3606, %v3418
  %3676 = vst.msk [vmem:[%s4 + $0x114] sm:$0xf] %vm3606, %v3419
  %3677 = vst.msk [vmem:[%s4 + $0x118] sm:$0xf] %vm3606, %v3420
  %3678 = vst.msk [vmem:[%s4 + $0x11c] sm:$0xf] %vm3606, %v3421
  %3679 = vst.msk [vmem:[%s4 + $0x120] sm:$0xf] %vm3606, %v3422
  %3680 = vst.msk [vmem:[%s4 + $0x124] sm:$0xf] %vm3606, %v3423
  %3681 = vst.msk [vmem:[%s4 + $0x128] sm:$0xf] %vm3606, %v3424
  %3682 = vst.msk [vmem:[%s4 + $0x12c] sm:$0xf] %vm3606, %v3425
  %3683 = vst.msk [vmem:[%s4 + $0x130] sm:$0xf] %vm3606, %v3426
  %3684 = vst.msk [vmem:[%s4 + $0x134] sm:$0xf] %vm3606, %v3427
  %3685 = vst.msk [vmem:[%s4 + $0x138] sm:$0xf] %vm3606, %v3428
  %3686 = vst.msk [vmem:[%s4 + $0x13c] sm:$0xf] %vm3606, %v3429
  %3687 = vst.msk [vmem:[%s4 + $0x140] sm:$0xf] %vm3606, %v3430
  %3688 = vst.msk [vmem:[%s4 + $0x144] sm:$0xf] %vm3606, %v3431
  %3689 = vst.msk [vmem:[%s4 + $0x148] sm:$0xf] %vm3606, %v3432
  %3690 = vst.msk [vmem:[%s4 + $0x14c] sm:$0xf] %vm3606, %v3433
  %3691 = vst.msk [vmem:[%s4 + $0x150] sm:$0xf] %vm3606, %v3434
  %3692 = vst.msk [vmem:[%s4 + $0x154] sm:$0xf] %vm3606, %v3435
  %3693 = vst.msk [vmem:[%s4 + $0x158] sm:$0xf] %vm3606, %v3436
  %3694 = vst.msk [vmem:[%s4 + $0x15c] sm:$0xf] %vm3606, %v3437
  %3695 = vst.msk [vmem:[%s4 + $0x160] sm:$0xf] %vm3606, %v3438
  %3696 = vst.msk [vmem:[%s4 + $0x164] sm:$0xf] %vm3606, %v3439
  %3697 = vst.msk [vmem:[%s4 + $0x168] sm:$0xf] %vm3606, %v3440
  %3698 = vst.msk [vmem:[%s4 + $0x16c] sm:$0xf] %vm3606, %v3441
  %3699 = vst.msk [vmem:[%s4 + $0x170] sm:$0xf] %vm3606, %v3442
  %3700 = vst.msk [vmem:[%s4 + $0x174] sm:$0xf] %vm3606, %v3443
  %3701 = vst.msk [vmem:[%s4 + $0x178] sm:$0xf] %vm3606, %v3444
  %3702 = vst.msk [vmem:[%s4 + $0x17c] sm:$0xf] %vm3606, %v3445
  %3703 = vst.msk [vmem:[%s4 + $0x180] sm:$0xf] %vm3606, %v3446
  %3704 = vst.msk [vmem:[%s4 + $0x184] sm:$0xf] %vm3606, %v3447
  %3705 = vst.msk [vmem:[%s4 + $0x188] sm:$0xf] %vm3606, %v3448
  %3706 = vst.msk [vmem:[%s4 + $0x18c] sm:$0xf] %vm3606, %v3449
  %3707 = vst.msk [vmem:[%s4 + $0x190] sm:$0xf] %vm3606, %v3450
  %3708 = vst.msk [vmem:[%s4 + $0x194] sm:$0xf] %vm3606, %v3451
  %3709 = vst.msk [vmem:[%s4 + $0x198] sm:$0xf] %vm3606, %v3452
  %3710 = vst.msk [vmem:[%s4 + $0x19c] sm:$0xf] %vm3606, %v3453
  %3711 = vst.msk [vmem:[%s4 + $0x1a0] sm:$0xf] %vm3606, %v3454
  %3712 = vst.msk [vmem:[%s4 + $0x1a4] sm:$0xf] %vm3606, %v3455
  %3713 = vst.msk [vmem:[%s4 + $0x1a8] sm:$0xf] %vm3606, %v3456
  %3714 = vst.msk [vmem:[%s4 + $0x1ac] sm:$0xf] %vm3606, %v3457
  %3715 = vst.msk [vmem:[%s4 + $0x1b0] sm:$0xf] %vm3606, %v3458
  %3716 = vst.msk [vmem:[%s4 + $0x1b4] sm:$0xf] %vm3606, %v3459
  %3717 = vst.msk [vmem:[%s4 + $0x1b8] sm:$0xf] %vm3606, %v3460
  %3718 = vst.msk [vmem:[%s4 + $0x1bc] sm:$0xf] %vm3606, %v3461
  %3719 = vst.msk [vmem:[%s4 + $0x1c0] sm:$0xf] %vm3606, %v3462
  %3720 = vst.msk [vmem:[%s4 + $0x1c4] sm:$0xf] %vm3606, %v3463
  %3721 = vst.msk [vmem:[%s4 + $0x1c8] sm:$0xf] %vm3606, %v3464
  %3722 = vst.msk [vmem:[%s4 + $0x1cc] sm:$0xf] %vm3606, %v3465
  %3723 = vst.msk [vmem:[%s4 + $0x1d0] sm:$0xf] %vm3606, %v3466
  %3724 = vst.msk [vmem:[%s4 + $0x1d4] sm:$0xf] %vm3606, %v3467
  %3725 = vst.msk [vmem:[%s4 + $0x1d8] sm:$0xf] %vm3606, %v3468
  %3726 = vst.msk [vmem:[%s4 + $0x1dc] sm:$0xf] %vm3606, %v3469
  %3727 = vst.msk [vmem:[%s4 + $0x1e0] sm:$0xf] %vm3606, %v3470
  %3728 = vst.msk [vmem:[%s4 + $0x1e4] sm:$0xf] %vm3606, %v3471
  %3729 = vst.msk [vmem:[%s4 + $0x1e8] sm:$0xf] %vm3606, %v3472
  %3730 = vst.msk [vmem:[%s4 + $0x1ec] sm:$0xf] %vm3606, %v3473
  %3731 = vst.msk [vmem:[%s4 + $0x1f0] sm:$0xf] %vm3606, %v3474
  %3732 = vst.msk [vmem:[%s4 + $0x1f4] sm:$0xf] %vm3606, %v3475
  %3733 = vst.msk [vmem:[%s4 + $0x1f8] sm:$0xf] %vm3606, %v3476
  %3734 = vst.msk [vmem:[%s4 + $0x1fc] sm:$0xf] %vm3606, %v3477
  // Predicated region
  $region18: #{matmul_bn.1} parent=0 // pred_check
    _
  $region19: #{matmul_bn.1} parent=0 // pred_check_branch
    %3736 = sbr.rel (0) target = $region21
  $region20: #{matmul_bn.1} parent=0 // pred_region
    _
  $region21: #{matmul_bn.1} parent=0 // pred_fallthru
    _
  // Predicated region
  $region22: #{matmul_bn.1} parent=0 // pred_check
    _
  $region23: #{matmul_bn.1} parent=0 // pred_check_branch
    %3738 = sbr.rel (0) target = $region25
  $region24: #{matmul_bn.1} parent=0 // pred_region
    _
  $region25: #{matmul_bn.1} parent=0 // pred_fallthru
    _

</llo_original>
